<compile_context>
chip_gen: v5e
topology: v5e:2x2
jax: 0.10.0
libtpu: 0.0.40
codegen_flags: <defaults>
</compile_context>

<pallas_src>
import functools
import math

import jax
import jax.numpy as jnp
from jax import lax
from jax.experimental import pallas as pl
from jax.experimental.pallas import tpu as pltpu


# ----------------------------------------------------------------------------
# Pallas kernel: 3 stacked LSTM layers (recurrence over T) + final Linear layer
# ----------------------------------------------------------------------------
def _lstm3_fc_kernel(x_ref,              # (T*Bp, D_in)  bf16, time-major flattened
                     wi0_ref,            # (D_in, 4Hp)   bf16  layer-0 input->gate
                     wh0_ref,            # (Hp, 4Hp)     bf16  layer-0 hidden->gate
                     b0_ref,             # (1, 4Hp)      f32   b_ih0 + b_hh0 (gate-slot padded)
                     w1_ref,             # (2Hp, 4Hp)    bf16  stacked [Wi1.T ; Wh1.T]
                     b1_ref,             # (1, 4Hp)      f32
                     w2_ref,             # (2Hp, 4Hp)    bf16  stacked [Wi2.T ; Wh2.T]
                     b2_ref,             # (1, 4Hp)      f32
                     fcw_ref,            # (Hp, O_pad)   bf16
                     fcb_ref,            # (1, O_pad)    f32
                     out_ref,            # (T*Bp, O_pad) f32
                     xp_scratch,         # VMEM (T*Bp, 4Hp) f32 : x@Wi0 + b0 (hoisted)
                     h2_scratch,         # VMEM (T*Bp, Hp)  f32 : per-step layer-2 hidden
                     *, T, Bp, Hp):
    # ---- Hoist 1: layer-0 input projection for ALL timesteps in one MXU pass.
    xp_scratch[...] = (
        jnp.dot(x_ref[...], wi0_ref[...], preferred_element_type=jnp.float32)
        + b0_ref[...])

    # ---- Hoist 2: loop-invariant weight loads and bias broadcasts.
    wh0 = wh0_ref[...]
    w1 = w1_ref[...]
    w2 = w2_ref[...]
    b1 = jnp.broadcast_to(b1_ref[...], (Bp, 4 * Hp))
    b2 = jnp.broadcast_to(b2_ref[...], (Bp, 4 * Hp))

    def gates_to_hc(gates, c):
        # PyTorch gate ordering i, f, g, o.  Hp is a lane multiple, so every
        # slice below is a whole aligned vreg tile: no lane rotates, and each
        # EUP pass is fully utilized.
        i_g = jax.nn.sigmoid(gates[:, 0 * Hp:1 * Hp])
        f_g = jax.nn.sigmoid(gates[:, 1 * Hp:2 * Hp])
        g_g = jnp.tanh(gates[:, 2 * Hp:3 * Hp])
        o_g = jax.nn.sigmoid(gates[:, 3 * Hp:4 * Hp])
        c_new = f_g * c + i_g * g_g
        h_new = o_g * jnp.tanh(c_new)
        return h_new, c_new

    def body(t, carry):
        h0, c0, h1, c1, h2, c2 = carry
        row = t * Bp
        if not isinstance(row, int):
            row = pl.multiple_of(row, Bp)

        # Layer 0: input projection precomputed; only h @ Wh0 on the serial path.
        g0 = xp_scratch[pl.ds(row, Bp), :] + jnp.dot(
            h0.astype(jnp.bfloat16), wh0, preferred_element_type=jnp.float32)
        h0, c0 = gates_to_hc(g0, c0)

        # Layers 1 & 2: one fused matmul over the vreg-aligned [h_below, h]
        # concat (both halves are full 128-lane tiles -> free placement).
        in1 = jnp.concatenate([h0, h1], axis=1).astype(jnp.bfloat16)
        g1 = jnp.dot(in1, w1, preferred_element_type=jnp.float32) + b1
        h1, c1 = gates_to_hc(g1, c1)

        in2 = jnp.concatenate([h1, h2], axis=1).astype(jnp.bfloat16)
        g2 = jnp.dot(in2, w2, preferred_element_type=jnp.float32) + b2
        h2, c2 = gates_to_hc(g2, c2)

        # Stash layer-2 hidden for the hoisted FC head (tile-aligned f32 store).
        h2_scratch[pl.ds(row, Bp), :] = h2
        return (h0, c0, h1, c1, h2, c2)

    zeros = jnp.zeros((Bp, Hp), jnp.float32)      # self.init = None -> zero state
    unroll = T if T <= 16 else 8                   # bounded unroll for long T
    lax.fori_loop(0, T, body, (zeros,) * 6, unroll=unroll)

    # ---- Hoist 3: FC head as one big matmul + a single lane-dense store.
    out_ref[...] = (
        jnp.dot(h2_scratch[...].astype(jnp.bfloat16), fcw_ref[...],
                preferred_element_type=jnp.float32)
        + fcb_ref[...]).astype(out_ref.dtype)


# ----------------------------------------------------------------------------
# Wrapper (glue: padding, transposes, weight pre-transposition/stacking)
# ----------------------------------------------------------------------------
def audio_to_joints_three_forward(inputs, params, options):
    """inputs: (B, T, input_dim), batch-first like the PyTorch module."""
    B, T, D_in = inputs.shape
    H = options['hidden_dim']
    O = options['output_dim']
    seq_len = options['seq_len']
    # PyTorch's final reshape(-1, seq_len, O) only round-trips cleanly when
    # B*T is divisible by seq_len (true for the module's intended use T==seq_len).
    assert (B * T) % seq_len == 0

    Bp = -(-B // 8) * 8            # batch padded to sublane multiple
    Hp = -(-H // 128) * 128        # hidden padded to a full lane tile
    Op = -(-O // 128) * 128        # FC output padded to a lane multiple

    # Batch-first -> time-major, flattened rows, bf16 MXU operand for x.
    x = inputs.astype(jnp.float32)
    if Bp != B:
        x = jnp.pad(x, ((0, Bp - B), (0, 0), (0, 0)))
    x_tm = jnp.transpose(x, (1, 0, 2)).reshape(T * Bp, D_in).astype(jnp.bfloat16)

    # --- weight prep: gate-slot padding (each H-wide gate goes to an Hp slot),
    #     row padding to Hp, transposition, stacking, bf16 cast.
    def pad_gate_cols(w_t):        # (K, 4H) -> (K, 4Hp)
        K = w_t.shape[0]
        out = jnp.zeros((K, 4 * Hp), jnp.float32)
        for g in range(4):
            out = out.at[:, g * Hp:g * Hp + H].set(w_t[:, g * H:(g + 1) * H])
        return out

    def pad_rows(w, rows):          # (K, N) -> (rows, N), zero-filled
        return jnp.zeros((rows, w.shape[1]), w.dtype).at[:w.shape[0], :].set(w)

    def gate_bias(b):               # (4H,) -> (1, 4Hp), padded lanes exactly 0
        out = jnp.zeros((1, 4 * Hp), jnp.float32)
        for g in range(4):
            out = out.at[0, g * Hp:g * Hp + H].set(b[g * H:(g + 1) * H])
        return out

    def stack_layer(wi, wh):        # -> (2Hp, 4Hp) = [Wi.T ; Wh.T] padded
        wi_p = pad_rows(pad_gate_cols(wi.T.astype(jnp.float32)), Hp)
        wh_p = pad_rows(pad_gate_cols(wh.T.astype(jnp.float32)), Hp)
        return jnp.concatenate([wi_p, wh_p], axis=0)

    wi0 = pad_gate_cols(params['w_ih0'].T.astype(jnp.float32))                 # (D_in, 4Hp)
    wh0 = pad_rows(pad_gate_cols(params['w_hh0'].T.astype(jnp.float32)), Hp)   # (Hp, 4Hp)
    b0 = gate_bias(params['b_ih0'] + params['b_hh0'])
    w1 = stack_layer(params['w_ih1'], params['w_hh1'])
    b1 = gate_bias(params['b_ih1'] + params['b_hh1'])
    w2 = stack_layer(params['w_ih2'], params['w_hh2'])
    b2 = gate_bias(params['b_ih2'] + params['b_hh2'])
    fcw = jnp.zeros((Hp, Op), jnp.float32).at[:H, :O].set(params['fc_w'].T)
    fcb = jnp.zeros((1, Op), jnp.float32).at[:, :O].set(params['fc_b'].reshape(1, O))

    args = (
        x_tm,
        wi0.astype(jnp.bfloat16), wh0.astype(jnp.bfloat16), b0,
        w1.astype(jnp.bfloat16), b1,
        w2.astype(jnp.bfloat16), b2,
        fcw.astype(jnp.bfloat16), fcb,
    )

    # --- cost estimate + explicit VMEM budget (fails loudly as T grows).
    out_bytes = (T * Bp) * Op * 4
    in_bytes = sum(int(a.size) * a.dtype.itemsize for a in args)
    scratch_bytes = (T * Bp) * 4 * Hp * 4 + (T * Bp) * Hp * 4
    flops = 2 * T * Bp * 4 * Hp * (D_in + 5 * Hp) + 2 * T * Bp * Hp * Op
    transcendentals = 15 * T * Bp * Hp
    vmem_limit_bytes = int(min(max(2 * (in_bytes + out_bytes + scratch_bytes),
                                   4 << 20), 64 << 20))

    vmem = pl.BlockSpec(memory_space=pltpu.MemorySpace.VMEM)
    out_flat = pl.pallas_call(
        functools.partial(_lstm3_fc_kernel, T=T, Bp=Bp, Hp=Hp),
        out_shape=jax.ShapeDtypeStruct((T * Bp, Op), jnp.float32),
        in_specs=[vmem] * len(args),
        out_specs=vmem,
        scratch_shapes=[
            pltpu.VMEM((T * Bp, 4 * Hp), jnp.float32),   # hoisted input projection
            pltpu.VMEM((T * Bp, Hp), jnp.float32),       # per-step h2 for FC head
        ],
        compiler_params=pltpu.CompilerParams(vmem_limit_bytes=vmem_limit_bytes),
        cost_estimate=pl.CostEstimate(flops=flops,
                                      transcendentals=transcendentals,
                                      bytes_accessed=in_bytes + out_bytes),
    )(*args)

    # (T*Bp, Op) -> (T, Bp, Op) -> strip padding -> (B, T, O)
    out = out_flat.reshape(T, Bp, Op)[:, :B, :O]
    out = jnp.transpose(out, (1, 0, 2))
    # PyTorch: reshape(-1, H) -> fc -> reshape(-1, seq_len, O); flattening the
    # batch-first (B, T, O) and regrouping by seq_len matches that exactly.
    return out.reshape(-1, seq_len, O)


# ----------------------------------------------------------------------------
# Deterministic parameter initialization (mirrors AudioToJointsThree.initialize)
# ----------------------------------------------------------------------------
def _xavier_normal(key, shape):
    fan_out, fan_in = shape
    std = math.sqrt(2.0 / (fan_in + fan_out))
    return std * jax.random.normal(key, shape, dtype=jnp.float32)


def init_params(key, options):
    D_in, H, O = options['input_dim'], options['hidden_dim'], options['output_dim']
    keys = jax.random.split(key, 16)
    params = {}
    layer_in = [D_in, H, H]
    k = 0
    for l in range(3):
        params[f'w_ih{l}'] = _xavier_normal(keys[k], (4 * H, layer_in[l])); k += 1
        params[f'w_hh{l}'] = _xavier_normal(keys[k], (4 * H, H)); k += 1
        params[f'b_ih{l}'] = jax.random.uniform(keys[k], (4 * H,), jnp.float32, 0.25, 0.5); k += 1
        params[f'b_hh{l}'] = jax.random.uniform(keys[k], (4 * H,), jnp.float32, 0.25, 0.5); k += 1
    params['fc_w'] = _xavier_normal(keys[k], (O, H)); k += 1
    params['fc_b'] = jnp.zeros((O,), jnp.float32)
    return params


# ----------------------------------------------------------------------------
# Pure-JAX reference (for correctness check); matmul_dtype lets us mirror the
# kernel's bf16-MXU-operand / f32-accumulate semantics for a tight comparison.
# ----------------------------------------------------------------------------
def reference_forward(inputs, params, options, matmul_dtype=jnp.float32):
    x = inputs.astype(jnp.float32)
    H, O, seq_len = options['hidden_dim'], options['output_dim'], options['seq_len']

    def mm(a, b):
        return jnp.dot(a.astype(matmul_dtype), b.astype(matmul_dtype),
                       preferred_element_type=jnp.float32)

    def run_layer(x, wi, wh, bi, bh):
        B = x.shape[0]

        def step(carry, x_t):
            h, c = carry
            gates = mm(x_t, wi.T) + bi + mm(h, wh.T) + bh
            i, f, g, o = jnp.split(gates, 4, axis=-1)
            i = jax.nn.sigmoid(i); f = jax.nn.sigmoid(f)
            g = jnp.tanh(g); o = jax.nn.sigmoid(o)
            c = f * c + i * g
            h = o * jnp.tanh(c)
            return (h, c), h

        init = (jnp.zeros((B, H), jnp.float32), jnp.zeros((B, H), jnp.float32))
        _, ys = lax.scan(step, init, jnp.transpose(x, (1, 0, 2)))
        return jnp.transpose(ys, (1, 0, 2))

    y = run_layer(x, params['w_ih0'], params['w_hh0'], params['b_ih0'], params['b_hh0'])
    y = run_layer(y, params['w_ih1'], params['w_hh1'], params['b_ih1'], params['b_hh1'])
    y = run_layer(y, params['w_ih2'], params['w_hh2'], params['b_ih2'], params['b_hh2'])
    out = mm(y.reshape(-1, H), params['fc_w'].T) + params['fc_b']
    return out.reshape(-1, seq_len, O)


if __name__ == "__main__":
    options = {'input_dim': 26, 'hidden_dim': 32, 'output_dim': 20, 'seq_len': 8}
    batch = 2

    key = jax.random.PRNGKey(0)
    k_params, k_inputs = jax.random.split(key)
    params = init_params(k_params, options)
    inputs = jax.random.normal(
        k_inputs, (batch, options['seq_len'], options['input_dim']), dtype=jnp.float32)

    out = audio_to_joints_three_forward(inputs, params, options)
    out = jax.block_until_ready(out)

    assert out.shape == (batch, options['seq_len'], options['output_dim'])

    # Tight, apples-to-apples check vs a reference with the same bf16-MXU-input,
    # f32-accumulate semantics as the kernel.
    ref_bf = reference_forward(inputs, params, options, matmul_dtype=jnp.bfloat16)
    assert jnp.allclose(out, ref_bf, atol=5e-3, rtol=5e-3), \
        "Pallas kernel mismatch vs bf16-matmul reference"

    # Sanity bound vs the pure-f32 reference (covers bf16 MXU drift; catches
    # any structural/gate-ordering bug, which would produce O(1) errors).
    ref_f32 = reference_forward(inputs, params, options, matmul_dtype=jnp.float32)
    assert float(jnp.max(jnp.abs(out - ref_f32))) < 0.1, \
        "Pallas kernel gross mismatch vs f32 reference"

    print("KERNEL_OK")
</pallas_src>

<mosaic_0001>
module attributes {stable_mosaic.version = 11 : i64} {
  func.func @_lstm3_fc_kernel(%arg0: memref<64x26xbf16, #tpu.memory_space<vmem>>, %arg1: memref<26x512xbf16, #tpu.memory_space<vmem>>, %arg2: memref<128x512xbf16, #tpu.memory_space<vmem>>, %arg3: memref<1x512xf32, #tpu.memory_space<vmem>>, %arg4: memref<256x512xbf16, #tpu.memory_space<vmem>>, %arg5: memref<1x512xf32, #tpu.memory_space<vmem>>, %arg6: memref<256x512xbf16, #tpu.memory_space<vmem>>, %arg7: memref<1x512xf32, #tpu.memory_space<vmem>>, %arg8: memref<128x128xbf16, #tpu.memory_space<vmem>>, %arg9: memref<1x128xf32, #tpu.memory_space<vmem>>, %arg10: memref<64x128xf32, #tpu.memory_space<vmem>>, %arg11: memref<64x512xf32, #tpu.memory_space<vmem>>, %arg12: memref<64x128xf32, #tpu.memory_space<vmem>>) attributes {dimension_semantics = [], scalar_prefetch = 0 : i64, scratch_operands = 2 : i64, tpu.core_type = #tpu.core_type<tc>} {
    %c0 = arith.constant 0 : index
    %c0_0 = arith.constant 0 : index
    %0 = vector.load %arg0[%c0, %c0_0] : memref<64x26xbf16, #tpu.memory_space<vmem>>, vector<64x26xbf16>
    %c0_1 = arith.constant 0 : index
    %c0_2 = arith.constant 0 : index
    %1 = vector.load %arg1[%c0_1, %c0_2] : memref<26x512xbf16, #tpu.memory_space<vmem>>, vector<26x512xbf16>
    %cst = arith.constant dense<0.000000e+00> : vector<64x512xf32>
    %2 = tpu.matmul %0, %1, %cst {dimension_numbers = #tpu.dot_dimension_numbers<[1], [0], [0], [1], [0, 0, 1, 1], [], []>} : vector<64x26xbf16>, vector<26x512xbf16>, vector<64x512xf32> -> vector<64x512xf32>
    %c0_3 = arith.constant 0 : index
    %c0_4 = arith.constant 0 : index
    %3 = vector.load %arg3[%c0_3, %c0_4] : memref<1x512xf32, #tpu.memory_space<vmem>>, vector<1x512xf32>
    %4 = vector.broadcast %3 : vector<1x512xf32> to vector<64x512xf32>
    %5 = arith.addf %2, %4 : vector<64x512xf32>
    %c0_5 = arith.constant 0 : index
    %c0_6 = arith.constant 0 : index
    %6 = vector.load %arg11[%c0_5, %c0_6] : memref<64x512xf32, #tpu.memory_space<vmem>>, vector<64x512xf32>
    tpu.vector_store %arg11[%c0_5, %c0_6], %5 {strides = array<i32>} : memref<64x512xf32, #tpu.memory_space<vmem>>, vector<64x512xf32>,
    %c0_7 = arith.constant 0 : index
    %c0_8 = arith.constant 0 : index
    %7 = vector.load %arg2[%c0_7, %c0_8] : memref<128x512xbf16, #tpu.memory_space<vmem>>, vector<128x512xbf16>
    %c0_9 = arith.constant 0 : index
    %c0_10 = arith.constant 0 : index
    %8 = vector.load %arg4[%c0_9, %c0_10] : memref<256x512xbf16, #tpu.memory_space<vmem>>, vector<256x512xbf16>
    %c0_11 = arith.constant 0 : index
    %c0_12 = arith.constant 0 : index
    %9 = vector.load %arg6[%c0_11, %c0_12] : memref<256x512xbf16, #tpu.memory_space<vmem>>, vector<256x512xbf16>
    %c0_13 = arith.constant 0 : index
    %c0_14 = arith.constant 0 : index
    %10 = vector.load %arg5[%c0_13, %c0_14] : memref<1x512xf32, #tpu.memory_space<vmem>>, vector<1x512xf32>
    %11 = vector.shape_cast %10 : vector<1x512xf32> to vector<1x512xf32>
    %12 = vector.broadcast %11 : vector<1x512xf32> to vector<8x512xf32>
    %c0_15 = arith.constant 0 : index
    %c0_16 = arith.constant 0 : index
    %13 = vector.load %arg7[%c0_15, %c0_16] : memref<1x512xf32, #tpu.memory_space<vmem>>, vector<1x512xf32>
    %14 = vector.shape_cast %13 : vector<1x512xf32> to vector<1x512xf32>
    %15 = vector.broadcast %14 : vector<1x512xf32> to vector<8x512xf32>
    %cst_17 = arith.constant 0.000000e+00 : f32
    %16 = vector.broadcast %cst_17 : f32 to vector<8x128xf32>
    %c0_i32 = arith.constant 0 : i32
    %c8_i32 = arith.constant 8 : i32
    %17 = arith.muli %c0_i32, %c8_i32 : i32
    %18 = tpu.assume_multiple %17, 8 : i32
    %19 = arith.index_cast %18 : i32 to index
    %c0_18 = arith.constant 0 : index
    %20 = vector.load %arg11[%19, %c0_18] : memref<64x512xf32, #tpu.memory_space<vmem>>, vector<8x512xf32>
    %21 = arith.truncf %16 : vector<8x128xf32> to vector<8x128xbf16>
    %cst_19 = arith.constant dense<0.000000e+00> : vector<8x512xf32>
    %22 = tpu.matmul %21, %7, %cst_19 {dimension_numbers = #tpu.dot_dimension_numbers<[1], [0], [0], [1], [0, 0, 1, 1], [], []>} : vector<8x128xbf16>, vector<128x512xbf16>, vector<8x512xf32> -> vector<8x512xf32>
    %23 = arith.addf %20, %22 : vector<8x512xf32>
    %24 = vector.extract_strided_slice %23 {offsets = [0, 0], sizes = [8, 128], strides = [1, 1]} : vector<8x512xf32> to vector<8x128xf32>
    %25 = arith.negf %24 : vector<8x128xf32>
    %26 = math.exp %25 : vector<8x128xf32>
    %cst_20 = arith.constant 1.000000e+00 : f32
    %27 = vector.broadcast %cst_20 : f32 to vector<8x128xf32>
    %28 = arith.addf %27, %26 : vector<8x128xf32>
    %29 = arith.divf %27, %28 : vector<8x128xf32>
    %30 = vector.extract_strided_slice %23 {offsets = [0, 128], sizes = [8, 128], strides = [1, 1]} : vector<8x512xf32> to vector<8x128xf32>
    %31 = arith.negf %30 : vector<8x128xf32>
    %32 = math.exp %31 : vector<8x128xf32>
    %cst_21 = arith.constant 1.000000e+00 : f32
    %33 = vector.broadcast %cst_21 : f32 to vector<8x128xf32>
    %34 = arith.addf %33, %32 : vector<8x128xf32>
    %35 = arith.divf %33, %34 : vector<8x128xf32>
    %36 = vector.extract_strided_slice %23 {offsets = [0, 256], sizes = [8, 128], strides = [1, 1]} : vector<8x512xf32> to vector<8x128xf32>
    %37 = math.tanh %36 : vector<8x128xf32>
    %38 = vector.extract_strided_slice %23 {offsets = [0, 384], sizes = [8, 128], strides = [1, 1]} : vector<8x512xf32> to vector<8x128xf32>
    %39 = arith.negf %38 : vector<8x128xf32>
    %40 = math.exp %39 : vector<8x128xf32>
    %cst_22 = arith.constant 1.000000e+00 : f32
    %41 = vector.broadcast %cst_22 : f32 to vector<8x128xf32>
    %42 = arith.addf %41, %40 : vector<8x128xf32>
    %43 = arith.divf %41, %42 : vector<8x128xf32>
    %44 = arith.mulf %35, %16 : vector<8x128xf32>
    %45 = arith.mulf %29, %37 : vector<8x128xf32>
    %46 = arith.addf %44, %45 : vector<8x128xf32>
    %47 = math.tanh %46 : vector<8x128xf32>
    %48 = arith.mulf %43, %47 : vector<8x128xf32>
    %49 = tpu.concatenate %48, %16 in 1 : vector<8x128xf32>, vector<8x128xf32> -> vector<8x256xf32>
    %50 = arith.truncf %49 : vector<8x256xf32> to vector<8x256xbf16>
    %cst_23 = arith.constant dense<0.000000e+00> : vector<8x512xf32>
    %51 = tpu.matmul %50, %8, %cst_23 {dimension_numbers = #tpu.dot_dimension_numbers<[1], [0], [0], [1], [0, 0, 1, 1], [], []>} : vector<8x256xbf16>, vector<256x512xbf16>, vector<8x512xf32> -> vector<8x512xf32>
    %52 = arith.addf %51, %12 : vector<8x512xf32>
    %53 = vector.extract_strided_slice %52 {offsets = [0, 0], sizes = [8, 128], strides = [1, 1]} : vector<8x512xf32> to vector<8x128xf32>
    %54 = arith.negf %53 : vector<8x128xf32>
    %55 = math.exp %54 : vector<8x128xf32>
    %cst_24 = arith.constant 1.000000e+00 : f32
    %56 = vector.broadcast %cst_24 : f32 to vector<8x128xf32>
    %57 = arith.addf %56, %55 : vector<8x128xf32>
    %58 = arith.divf %56, %57 : vector<8x128xf32>
    %59 = vector.extract_strided_slice %52 {offsets = [0, 128], sizes = [8, 128], strides = [1, 1]} : vector<8x512xf32> to vector<8x128xf32>
    %60 = arith.negf %59 : vector<8x128xf32>
    %61 = math.exp %60 : vector<8x128xf32>
    %cst_25 = arith.constant 1.000000e+00 : f32
    %62 = vector.broadcast %cst_25 : f32 to vector<8x128xf32>
    %63 = arith.addf %62, %61 : vector<8x128xf32>
    %64 = arith.divf %62, %63 : vector<8x128xf32>
    %65 = vector.extract_strided_slice %52 {offsets = [0, 256], sizes = [8, 128], strides = [1, 1]} : vector<8x512xf32> to vector<8x128xf32>
    %66 = math.tanh %65 : vector<8x128xf32>
    %67 = vector.extract_strided_slice %52 {offsets = [0, 384], sizes = [8, 128], strides = [1, 1]} : vector<8x512xf32> to vector<8x128xf32>
    %68 = arith.negf %67 : vector<8x128xf32>
    %69 = math.exp %68 : vector<8x128xf32>
    %cst_26 = arith.constant 1.000000e+00 : f32
    %70 = vector.broadcast %cst_26 : f32 to vector<8x128xf32>
    %71 = arith.addf %70, %69 : vector<8x128xf32>
    %72 = arith.divf %70, %71 : vector<8x128xf32>
    %73 = arith.mulf %64, %16 : vector<8x128xf32>
    %74 = arith.mulf %58, %66 : vector<8x128xf32>
    %75 = arith.addf %73, %74 : vector<8x128xf32>
    %76 = math.tanh %75 : vector<8x128xf32>
    %77 = arith.mulf %72, %76 : vector<8x128xf32>
    %78 = tpu.concatenate %77, %16 in 1 : vector<8x128xf32>, vector<8x128xf32> -> vector<8x256xf32>
    %79 = arith.truncf %78 : vector<8x256xf32> to vector<8x256xbf16>
    %cst_27 = arith.constant dense<0.000000e+00> : vector<8x512xf32>
    %80 = tpu.matmul %79, %9, %cst_27 {dimension_numbers = #tpu.dot_dimension_numbers<[1], [0], [0], [1], [0, 0, 1, 1], [], []>} : vector<8x256xbf16>, vector<256x512xbf16>, vector<8x512xf32> -> vector<8x512xf32>
    %81 = arith.addf %80, %15 : vector<8x512xf32>
    %82 = vector.extract_strided_slice %81 {offsets = [0, 0], sizes = [8, 128], strides = [1, 1]} : vector<8x512xf32> to vector<8x128xf32>
    %83 = arith.negf %82 : vector<8x128xf32>
    %84 = math.exp %83 : vector<8x128xf32>
    %cst_28 = arith.constant 1.000000e+00 : f32
    %85 = vector.broadcast %cst_28 : f32 to vector<8x128xf32>
    %86 = arith.addf %85, %84 : vector<8x128xf32>
    %87 = arith.divf %85, %86 : vector<8x128xf32>
    %88 = vector.extract_strided_slice %81 {offsets = [0, 128], sizes = [8, 128], strides = [1, 1]} : vector<8x512xf32> to vector<8x128xf32>
    %89 = arith.negf %88 : vector<8x128xf32>
    %90 = math.exp %89 : vector<8x128xf32>
    %cst_29 = arith.constant 1.000000e+00 : f32
    %91 = vector.broadcast %cst_29 : f32 to vector<8x128xf32>
    %92 = arith.addf %91, %90 : vector<8x128xf32>
    %93 = arith.divf %91, %92 : vector<8x128xf32>
    %94 = vector.extract_strided_slice %81 {offsets = [0, 256], sizes = [8, 128], strides = [1, 1]} : vector<8x512xf32> to vector<8x128xf32>
    %95 = math.tanh %94 : vector<8x128xf32>
    %96 = vector.extract_strided_slice %81 {offsets = [0, 384], sizes = [8, 128], strides = [1, 1]} : vector<8x512xf32> to vector<8x128xf32>
    %97 = arith.negf %96 : vector<8x128xf32>
    %98 = math.exp %97 : vector<8x128xf32>
    %cst_30 = arith.constant 1.000000e+00 : f32
    %99 = vector.broadcast %cst_30 : f32 to vector<8x128xf32>
    %100 = arith.addf %99, %98 : vector<8x128xf32>
    %101 = arith.divf %99, %100 : vector<8x128xf32>
    %102 = arith.mulf %93, %16 : vector<8x128xf32>
    %103 = arith.mulf %87, %95 : vector<8x128xf32>
    %104 = arith.addf %102, %103 : vector<8x128xf32>
    %105 = math.tanh %104 : vector<8x128xf32>
    %106 = arith.mulf %101, %105 : vector<8x128xf32>
    %107 = arith.index_cast %18 : i32 to index
    %c0_31 = arith.constant 0 : index
    %108 = vector.load %arg12[%107, %c0_31] : memref<64x128xf32, #tpu.memory_space<vmem>>, vector<8x128xf32>
    tpu.vector_store %arg12[%107, %c0_31], %106 {strides = array<i32>} : memref<64x128xf32, #tpu.memory_space<vmem>>, vector<8x128xf32>,
    %c1_i32 = arith.constant 1 : i32
    %c8_i32_32 = arith.constant 8 : i32
    %109 = arith.muli %c1_i32, %c8_i32_32 : i32
    %110 = tpu.assume_multiple %109, 8 : i32
    %111 = arith.index_cast %110 : i32 to index
    %c0_33 = arith.constant 0 : index
    %112 = vector.load %arg11[%111, %c0_33] : memref<64x512xf32, #tpu.memory_space<vmem>>, vector<8x512xf32>
    %113 = arith.truncf %48 : vector<8x128xf32> to vector<8x128xbf16>
    %cst_34 = arith.constant dense<0.000000e+00> : vector<8x512xf32>
    %114 = tpu.matmul %113, %7, %cst_34 {dimension_numbers = #tpu.dot_dimension_numbers<[1], [0], [0], [1], [0, 0, 1, 1], [], []>} : vector<8x128xbf16>, vector<128x512xbf16>, vector<8x512xf32> -> vector<8x512xf32>
    %115 = arith.addf %112, %114 : vector<8x512xf32>
    %116 = vector.extract_strided_slice %115 {offsets = [0, 0], sizes = [8, 128], strides = [1, 1]} : vector<8x512xf32> to vector<8x128xf32>
    %117 = arith.negf %116 : vector<8x128xf32>
    %118 = math.exp %117 : vector<8x128xf32>
    %cst_35 = arith.constant 1.000000e+00 : f32
    %119 = vector.broadcast %cst_35 : f32 to vector<8x128xf32>
    %120 = arith.addf %119, %118 : vector<8x128xf32>
    %121 = arith.divf %119, %120 : vector<8x128xf32>
    %122 = vector.extract_strided_slice %115 {offsets = [0, 128], sizes = [8, 128], strides = [1, 1]} : vector<8x512xf32> to vector<8x128xf32>
    %123 = arith.negf %122 : vector<8x128xf32>
    %124 = math.exp %123 : vector<8x128xf32>
    %cst_36 = arith.constant 1.000000e+00 : f32
    %125 = vector.broadcast %cst_36 : f32 to vector<8x128xf32>
    %126 = arith.addf %125, %124 : vector<8x128xf32>
    %127 = arith.divf %125, %126 : vector<8x128xf32>
    %128 = vector.extract_strided_slice %115 {offsets = [0, 256], sizes = [8, 128], strides = [1, 1]} : vector<8x512xf32> to vector<8x128xf32>
    %129 = math.tanh %128 : vector<8x128xf32>
    %130 = vector.extract_strided_slice %115 {offsets = [0, 384], sizes = [8, 128], strides = [1, 1]} : vector<8x512xf32> to vector<8x128xf32>
    %131 = arith.negf %130 : vector<8x128xf32>
    %132 = math.exp %131 : vector<8x128xf32>
    %cst_37 = arith.constant 1.000000e+00 : f32
    %133 = vector.broadcast %cst_37 : f32 to vector<8x128xf32>
    %134 = arith.addf %133, %132 : vector<8x128xf32>
    %135 = arith.divf %133, %134 : vector<8x128xf32>
    %136 = arith.mulf %127, %46 : vector<8x128xf32>
    %137 = arith.mulf %121, %129 : vector<8x128xf32>
    %138 = arith.addf %136, %137 : vector<8x128xf32>
    %139 = math.tanh %138 : vector<8x128xf32>
    %140 = arith.mulf %135, %139 : vector<8x128xf32>
    %141 = tpu.concatenate %140, %77 in 1 : vector<8x128xf32>, vector<8x128xf32> -> vector<8x256xf32>
    %142 = arith.truncf %141 : vector<8x256xf32> to vector<8x256xbf16>
    %cst_38 = arith.constant dense<0.000000e+00> : vector<8x512xf32>
    %143 = tpu.matmul %142, %8, %cst_38 {dimension_numbers = #tpu.dot_dimension_numbers<[1], [0], [0], [1], [0, 0, 1, 1], [], []>} : vector<8x256xbf16>, vector<256x512xbf16>, vector<8x512xf32> -> vector<8x512xf32>
    %144 = arith.addf %143, %12 : vector<8x512xf32>
    %145 = vector.extract_strided_slice %144 {offsets = [0, 0], sizes = [8, 128], strides = [1, 1]} : vector<8x512xf32> to vector<8x128xf32>
    %146 = arith.negf %145 : vector<8x128xf32>
    %147 = math.exp %146 : vector<8x128xf32>
    %cst_39 = arith.constant 1.000000e+00 : f32
    %148 = vector.broadcast %cst_39 : f32 to vector<8x128xf32>
    %149 = arith.addf %148, %147 : vector<8x128xf32>
    %150 = arith.divf %148, %149 : vector<8x128xf32>
    %151 = vector.extract_strided_slice %144 {offsets = [0, 128], sizes = [8, 128], strides = [1, 1]} : vector<8x512xf32> to vector<8x128xf32>
    %152 = arith.negf %151 : vector<8x128xf32>
    %153 = math.exp %152 : vector<8x128xf32>
    %cst_40 = arith.constant 1.000000e+00 : f32
    %154 = vector.broadcast %cst_40 : f32 to vector<8x128xf32>
    %155 = arith.addf %154, %153 : vector<8x128xf32>
    %156 = arith.divf %154, %155 : vector<8x128xf32>
    %157 = vector.extract_strided_slice %144 {offsets = [0, 256], sizes = [8, 128], strides = [1, 1]} : vector<8x512xf32> to vector<8x128xf32>
    %158 = math.tanh %157 : vector<8x128xf32>
    %159 = vector.extract_strided_slice %144 {offsets = [0, 384], sizes = [8, 128], strides = [1, 1]} : vector<8x512xf32> to vector<8x128xf32>
    %160 = arith.negf %159 : vector<8x128xf32>
    %161 = math.exp %160 : vector<8x128xf32>
    %cst_41 = arith.constant 1.000000e+00 : f32
    %162 = vector.broadcast %cst_41 : f32 to vector<8x128xf32>
    %163 = arith.addf %162, %161 : vector<8x128xf32>
    %164 = arith.divf %162, %163 : vector<8x128xf32>
    %165 = arith.mulf %156, %75 : vector<8x128xf32>
    %166 = arith.mulf %150, %158 : vector<8x128xf32>
    %167 = arith.addf %165, %166 : vector<8x128xf32>
    %168 = math.tanh %167 : vector<8x128xf32>
    %169 = arith.mulf %164, %168 : vector<8x128xf32>
    %170 = tpu.concatenate %169, %106 in 1 : vector<8x128xf32>, vector<8x128xf32> -> vector<8x256xf32>
    %171 = arith.truncf %170 : vector<8x256xf32> to vector<8x256xbf16>
    %cst_42 = arith.constant dense<0.000000e+00> : vector<8x512xf32>
    %172 = tpu.matmul %171, %9, %cst_42 {dimension_numbers = #tpu.dot_dimension_numbers<[1], [0], [0], [1], [0, 0, 1, 1], [], []>} : vector<8x256xbf16>, vector<256x512xbf16>, vector<8x512xf32> -> vector<8x512xf32>
    %173 = arith.addf %172, %15 : vector<8x512xf32>
    %174 = vector.extract_strided_slice %173 {offsets = [0, 0], sizes = [8, 128], strides = [1, 1]} : vector<8x512xf32> to vector<8x128xf32>
    %175 = arith.negf %174 : vector<8x128xf32>
    %176 = math.exp %175 : vector<8x128xf32>
    %cst_43 = arith.constant 1.000000e+00 : f32
    %177 = vector.broadcast %cst_43 : f32 to vector<8x128xf32>
    %178 = arith.addf %177, %176 : vector<8x128xf32>
    %179 = arith.divf %177, %178 : vector<8x128xf32>
    %180 = vector.extract_strided_slice %173 {offsets = [0, 128], sizes = [8, 128], strides = [1, 1]} : vector<8x512xf32> to vector<8x128xf32>
    %181 = arith.negf %180 : vector<8x128xf32>
    %182 = math.exp %181 : vector<8x128xf32>
    %cst_44 = arith.constant 1.000000e+00 : f32
    %183 = vector.broadcast %cst_44 : f32 to vector<8x128xf32>
    %184 = arith.addf %183, %182 : vector<8x128xf32>
    %185 = arith.divf %183, %184 : vector<8x128xf32>
    %186 = vector.extract_strided_slice %173 {offsets = [0, 256], sizes = [8, 128], strides = [1, 1]} : vector<8x512xf32> to vector<8x128xf32>
    %187 = math.tanh %186 : vector<8x128xf32>
    %188 = vector.extract_strided_slice %173 {offsets = [0, 384], sizes = [8, 128], strides = [1, 1]} : vector<8x512xf32> to vector<8x128xf32>
    %189 = arith.negf %188 : vector<8x128xf32>
    %190 = math.exp %189 : vector<8x128xf32>
    %cst_45 = arith.constant 1.000000e+00 : f32
    %191 = vector.broadcast %cst_45 : f32 to vector<8x128xf32>
    %192 = arith.addf %191, %190 : vector<8x128xf32>
    %193 = arith.divf %191, %192 : vector<8x128xf32>
    %194 = arith.mulf %185, %104 : vector<8x128xf32>
    %195 = arith.mulf %179, %187 : vector<8x128xf32>
    %196 = arith.addf %194, %195 : vector<8x128xf32>
    %197 = math.tanh %196 : vector<8x128xf32>
    %198 = arith.mulf %193, %197 : vector<8x128xf32>
    %199 = arith.index_cast %110 : i32 to index
    %c0_46 = arith.constant 0 : index
    %200 = vector.load %arg12[%199, %c0_46] : memref<64x128xf32, #tpu.memory_space<vmem>>, vector<8x128xf32>
    tpu.vector_store %arg12[%199, %c0_46], %198 {strides = array<i32>} : memref<64x128xf32, #tpu.memory_space<vmem>>, vector<8x128xf32>,
    %c2_i32 = arith.constant 2 : i32
    %c8_i32_47 = arith.constant 8 : i32
    %201 = arith.muli %c2_i32, %c8_i32_47 : i32
    %202 = tpu.assume_multiple %201, 8 : i32
    %203 = arith.index_cast %202 : i32 to index
    %c0_48 = arith.constant 0 : index
    %204 = vector.load %arg11[%203, %c0_48] : memref<64x512xf32, #tpu.memory_space<vmem>>, vector<8x512xf32>
    %205 = arith.truncf %140 : vector<8x128xf32> to vector<8x128xbf16>
    %cst_49 = arith.constant dense<0.000000e+00> : vector<8x512xf32>
    %206 = tpu.matmul %205, %7, %cst_49 {dimension_numbers = #tpu.dot_dimension_numbers<[1], [0], [0], [1], [0, 0, 1, 1], [], []>} : vector<8x128xbf16>, vector<128x512xbf16>, vector<8x512xf32> -> vector<8x512xf32>
    %207 = arith.addf %204, %206 : vector<8x512xf32>
    %208 = vector.extract_strided_slice %207 {offsets = [0, 0], sizes = [8, 128], strides = [1, 1]} : vector<8x512xf32> to vector<8x128xf32>
    %209 = arith.negf %208 : vector<8x128xf32>
    %210 = math.exp %209 : vector<8x128xf32>
    %cst_50 = arith.constant 1.000000e+00 : f32
    %211 = vector.broadcast %cst_50 : f32 to vector<8x128xf32>
    %212 = arith.addf %211, %210 : vector<8x128xf32>
    %213 = arith.divf %211, %212 : vector<8x128xf32>
    %214 = vector.extract_strided_slice %207 {offsets = [0, 128], sizes = [8, 128], strides = [1, 1]} : vector<8x512xf32> to vector<8x128xf32>
    %215 = arith.negf %214 : vector<8x128xf32>
    %216 = math.exp %215 : vector<8x128xf32>
    %cst_51 = arith.constant 1.000000e+00 : f32
    %217 = vector.broadcast %cst_51 : f32 to vector<8x128xf32>
    %218 = arith.addf %217, %216 : vector<8x128xf32>
    %219 = arith.divf %217, %218 : vector<8x128xf32>
    %220 = vector.extract_strided_slice %207 {offsets = [0, 256], sizes = [8, 128], strides = [1, 1]} : vector<8x512xf32> to vector<8x128xf32>
    %221 = math.tanh %220 : vector<8x128xf32>
    %222 = vector.extract_strided_slice %207 {offsets = [0, 384], sizes = [8, 128], strides = [1, 1]} : vector<8x512xf32> to vector<8x128xf32>
    %223 = arith.negf %222 : vector<8x128xf32>
    %224 = math.exp %223 : vector<8x128xf32>
    %cst_52 = arith.constant 1.000000e+00 : f32
    %225 = vector.broadcast %cst_52 : f32 to vector<8x128xf32>
    %226 = arith.addf %225, %224 : vector<8x128xf32>
    %227 = arith.divf %225, %226 : vector<8x128xf32>
    %228 = arith.mulf %219, %138 : vector<8x128xf32>
    %229 = arith.mulf %213, %221 : vector<8x128xf32>
    %230 = arith.addf %228, %229 : vector<8x128xf32>
    %231 = math.tanh %230 : vector<8x128xf32>
    %232 = arith.mulf %227, %231 : vector<8x128xf32>
    %233 = tpu.concatenate %232, %169 in 1 : vector<8x128xf32>, vector<8x128xf32> -> vector<8x256xf32>
    %234 = arith.truncf %233 : vector<8x256xf32> to vector<8x256xbf16>
    %cst_53 = arith.constant dense<0.000000e+00> : vector<8x512xf32>
    %235 = tpu.matmul %234, %8, %cst_53 {dimension_numbers = #tpu.dot_dimension_numbers<[1], [0], [0], [1], [0, 0, 1, 1], [], []>} : vector<8x256xbf16>, vector<256x512xbf16>, vector<8x512xf32> -> vector<8x512xf32>
    %236 = arith.addf %235, %12 : vector<8x512xf32>
    %237 = vector.extract_strided_slice %236 {offsets = [0, 0], sizes = [8, 128], strides = [1, 1]} : vector<8x512xf32> to vector<8x128xf32>
    %238 = arith.negf %237 : vector<8x128xf32>
    %239 = math.exp %238 : vector<8x128xf32>
    %cst_54 = arith.constant 1.000000e+00 : f32
    %240 = vector.broadcast %cst_54 : f32 to vector<8x128xf32>
    %241 = arith.addf %240, %239 : vector<8x128xf32>
    %242 = arith.divf %240, %241 : vector<8x128xf32>
    %243 = vector.extract_strided_slice %236 {offsets = [0, 128], sizes = [8, 128], strides = [1, 1]} : vector<8x512xf32> to vector<8x128xf32>
    %244 = arith.negf %243 : vector<8x128xf32>
    %245 = math.exp %244 : vector<8x128xf32>
    %cst_55 = arith.constant 1.000000e+00 : f32
    %246 = vector.broadcast %cst_55 : f32 to vector<8x128xf32>
    %247 = arith.addf %246, %245 : vector<8x128xf32>
    %248 = arith.divf %246, %247 : vector<8x128xf32>
    %249 = vector.extract_strided_slice %236 {offsets = [0, 256], sizes = [8, 128], strides = [1, 1]} : vector<8x512xf32> to vector<8x128xf32>
    %250 = math.tanh %249 : vector<8x128xf32>
    %251 = vector.extract_strided_slice %236 {offsets = [0, 384], sizes = [8, 128], strides = [1, 1]} : vector<8x512xf32> to vector<8x128xf32>
    %252 = arith.negf %251 : vector<8x128xf32>
    %253 = math.exp %252 : vector<8x128xf32>
    %cst_56 = arith.constant 1.000000e+00 : f32
    %254 = vector.broadcast %cst_56 : f32 to vector<8x128xf32>
    %255 = arith.addf %254, %253 : vector<8x128xf32>
    %256 = arith.divf %254, %255 : vector<8x128xf32>
    %257 = arith.mulf %248, %167 : vector<8x128xf32>
    %258 = arith.mulf %242, %250 : vector<8x128xf32>
    %259 = arith.addf %257, %258 : vector<8x128xf32>
    %260 = math.tanh %259 : vector<8x128xf32>
    %261 = arith.mulf %256, %260 : vector<8x128xf32>
    %262 = tpu.concatenate %261, %198 in 1 : vector<8x128xf32>, vector<8x128xf32> -> vector<8x256xf32>
    %263 = arith.truncf %262 : vector<8x256xf32> to vector<8x256xbf16>
    %cst_57 = arith.constant dense<0.000000e+00> : vector<8x512xf32>
    %264 = tpu.matmul %263, %9, %cst_57 {dimension_numbers = #tpu.dot_dimension_numbers<[1], [0], [0], [1], [0, 0, 1, 1], [], []>} : vector<8x256xbf16>, vector<256x512xbf16>, vector<8x512xf32> -> vector<8x512xf32>
    %265 = arith.addf %264, %15 : vector<8x512xf32>
    %266 = vector.extract_strided_slice %265 {offsets = [0, 0], sizes = [8, 128], strides = [1, 1]} : vector<8x512xf32> to vector<8x128xf32>
    %267 = arith.negf %266 : vector<8x128xf32>
    %268 = math.exp %267 : vector<8x128xf32>
    %cst_58 = arith.constant 1.000000e+00 : f32
    %269 = vector.broadcast %cst_58 : f32 to vector<8x128xf32>
    %270 = arith.addf %269, %268 : vector<8x128xf32>
    %271 = arith.divf %269, %270 : vector<8x128xf32>
    %272 = vector.extract_strided_slice %265 {offsets = [0, 128], sizes = [8, 128], strides = [1, 1]} : vector<8x512xf32> to vector<8x128xf32>
    %273 = arith.negf %272 : vector<8x128xf32>
    %274 = math.exp %273 : vector<8x128xf32>
    %cst_59 = arith.constant 1.000000e+00 : f32
    %275 = vector.broadcast %cst_59 : f32 to vector<8x128xf32>
    %276 = arith.addf %275, %274 : vector<8x128xf32>
    %277 = arith.divf %275, %276 : vector<8x128xf32>
    %278 = vector.extract_strided_slice %265 {offsets = [0, 256], sizes = [8, 128], strides = [1, 1]} : vector<8x512xf32> to vector<8x128xf32>
    %279 = math.tanh %278 : vector<8x128xf32>
    %280 = vector.extract_strided_slice %265 {offsets = [0, 384], sizes = [8, 128], strides = [1, 1]} : vector<8x512xf32> to vector<8x128xf32>
    %281 = arith.negf %280 : vector<8x128xf32>
    %282 = math.exp %281 : vector<8x128xf32>
    %cst_60 = arith.constant 1.000000e+00 : f32
    %283 = vector.broadcast %cst_60 : f32 to vector<8x128xf32>
    %284 = arith.addf %283, %282 : vector<8x128xf32>
    %285 = arith.divf %283, %284 : vector<8x128xf32>
    %286 = arith.mulf %277, %196 : vector<8x128xf32>
    %287 = arith.mulf %271, %279 : vector<8x128xf32>
    %288 = arith.addf %286, %287 : vector<8x128xf32>
    %289 = math.tanh %288 : vector<8x128xf32>
    %290 = arith.mulf %285, %289 : vector<8x128xf32>
    %291 = arith.index_cast %202 : i32 to index
    %c0_61 = arith.constant 0 : index
    %292 = vector.load %arg12[%291, %c0_61] : memref<64x128xf32, #tpu.memory_space<vmem>>, vector<8x128xf32>
    tpu.vector_store %arg12[%291, %c0_61], %290 {strides = array<i32>} : memref<64x128xf32, #tpu.memory_space<vmem>>, vector<8x128xf32>,
    %c3_i32 = arith.constant 3 : i32
    %c8_i32_62 = arith.constant 8 : i32
    %293 = arith.muli %c3_i32, %c8_i32_62 : i32
    %294 = tpu.assume_multiple %293, 8 : i32
    %295 = arith.index_cast %294 : i32 to index
    %c0_63 = arith.constant 0 : index
    %296 = vector.load %arg11[%295, %c0_63] : memref<64x512xf32, #tpu.memory_space<vmem>>, vector<8x512xf32>
    %297 = arith.truncf %232 : vector<8x128xf32> to vector<8x128xbf16>
    %cst_64 = arith.constant dense<0.000000e+00> : vector<8x512xf32>
    %298 = tpu.matmul %297, %7, %cst_64 {dimension_numbers = #tpu.dot_dimension_numbers<[1], [0], [0], [1], [0, 0, 1, 1], [], []>} : vector<8x128xbf16>, vector<128x512xbf16>, vector<8x512xf32> -> vector<8x512xf32>
    %299 = arith.addf %296, %298 : vector<8x512xf32>
    %300 = vector.extract_strided_slice %299 {offsets = [0, 0], sizes = [8, 128], strides = [1, 1]} : vector<8x512xf32> to vector<8x128xf32>
    %301 = arith.negf %300 : vector<8x128xf32>
    %302 = math.exp %301 : vector<8x128xf32>
    %cst_65 = arith.constant 1.000000e+00 : f32
    %303 = vector.broadcast %cst_65 : f32 to vector<8x128xf32>
    %304 = arith.addf %303, %302 : vector<8x128xf32>
    %305 = arith.divf %303, %304 : vector<8x128xf32>
    %306 = vector.extract_strided_slice %299 {offsets = [0, 128], sizes = [8, 128], strides = [1, 1]} : vector<8x512xf32> to vector<8x128xf32>
    %307 = arith.negf %306 : vector<8x128xf32>
    %308 = math.exp %307 : vector<8x128xf32>
    %cst_66 = arith.constant 1.000000e+00 : f32
    %309 = vector.broadcast %cst_66 : f32 to vector<8x128xf32>
    %310 = arith.addf %309, %308 : vector<8x128xf32>
    %311 = arith.divf %309, %310 : vector<8x128xf32>
    %312 = vector.extract_strided_slice %299 {offsets = [0, 256], sizes = [8, 128], strides = [1, 1]} : vector<8x512xf32> to vector<8x128xf32>
    %313 = math.tanh %312 : vector<8x128xf32>
    %314 = vector.extract_strided_slice %299 {offsets = [0, 384], sizes = [8, 128], strides = [1, 1]} : vector<8x512xf32> to vector<8x128xf32>
    %315 = arith.negf %314 : vector<8x128xf32>
    %316 = math.exp %315 : vector<8x128xf32>
    %cst_67 = arith.constant 1.000000e+00 : f32
    %317 = vector.broadcast %cst_67 : f32 to vector<8x128xf32>
    %318 = arith.addf %317, %316 : vector<8x128xf32>
    %319 = arith.divf %317, %318 : vector<8x128xf32>
    %320 = arith.mulf %311, %230 : vector<8x128xf32>
    %321 = arith.mulf %305, %313 : vector<8x128xf32>
    %322 = arith.addf %320, %321 : vector<8x128xf32>
    %323 = math.tanh %322 : vector<8x128xf32>
    %324 = arith.mulf %319, %323 : vector<8x128xf32>
    %325 = tpu.concatenate %324, %261 in 1 : vector<8x128xf32>, vector<8x128xf32> -> vector<8x256xf32>
    %326 = arith.truncf %325 : vector<8x256xf32> to vector<8x256xbf16>
    %cst_68 = arith.constant dense<0.000000e+00> : vector<8x512xf32>
    %327 = tpu.matmul %326, %8, %cst_68 {dimension_numbers = #tpu.dot_dimension_numbers<[1], [0], [0], [1], [0, 0, 1, 1], [], []>} : vector<8x256xbf16>, vector<256x512xbf16>, vector<8x512xf32> -> vector<8x512xf32>
    %328 = arith.addf %327, %12 : vector<8x512xf32>
    %329 = vector.extract_strided_slice %328 {offsets = [0, 0], sizes = [8, 128], strides = [1, 1]} : vector<8x512xf32> to vector<8x128xf32>
    %330 = arith.negf %329 : vector<8x128xf32>
    %331 = math.exp %330 : vector<8x128xf32>
    %cst_69 = arith.constant 1.000000e+00 : f32
    %332 = vector.broadcast %cst_69 : f32 to vector<8x128xf32>
    %333 = arith.addf %332, %331 : vector<8x128xf32>
    %334 = arith.divf %332, %333 : vector<8x128xf32>
    %335 = vector.extract_strided_slice %328 {offsets = [0, 128], sizes = [8, 128], strides = [1, 1]} : vector<8x512xf32> to vector<8x128xf32>
    %336 = arith.negf %335 : vector<8x128xf32>
    %337 = math.exp %336 : vector<8x128xf32>
    %cst_70 = arith.constant 1.000000e+00 : f32
    %338 = vector.broadcast %cst_70 : f32 to vector<8x128xf32>
    %339 = arith.addf %338, %337 : vector<8x128xf32>
    %340 = arith.divf %338, %339 : vector<8x128xf32>
    %341 = vector.extract_strided_slice %328 {offsets = [0, 256], sizes = [8, 128], strides = [1, 1]} : vector<8x512xf32> to vector<8x128xf32>
    %342 = math.tanh %341 : vector<8x128xf32>
    %343 = vector.extract_strided_slice %328 {offsets = [0, 384], sizes = [8, 128], strides = [1, 1]} : vector<8x512xf32> to vector<8x128xf32>
    %344 = arith.negf %343 : vector<8x128xf32>
    %345 = math.exp %344 : vector<8x128xf32>
    %cst_71 = arith.constant 1.000000e+00 : f32
    %346 = vector.broadcast %cst_71 : f32 to vector<8x128xf32>
    %347 = arith.addf %346, %345 : vector<8x128xf32>
    %348 = arith.divf %346, %347 : vector<8x128xf32>
    %349 = arith.mulf %340, %259 : vector<8x128xf32>
    %350 = arith.mulf %334, %342 : vector<8x128xf32>
    %351 = arith.addf %349, %350 : vector<8x128xf32>
    %352 = math.tanh %351 : vector<8x128xf32>
    %353 = arith.mulf %348, %352 : vector<8x128xf32>
    %354 = tpu.concatenate %353, %290 in 1 : vector<8x128xf32>, vector<8x128xf32> -> vector<8x256xf32>
    %355 = arith.truncf %354 : vector<8x256xf32> to vector<8x256xbf16>
    %cst_72 = arith.constant dense<0.000000e+00> : vector<8x512xf32>
    %356 = tpu.matmul %355, %9, %cst_72 {dimension_numbers = #tpu.dot_dimension_numbers<[1], [0], [0], [1], [0, 0, 1, 1], [], []>} : vector<8x256xbf16>, vector<256x512xbf16>, vector<8x512xf32> -> vector<8x512xf32>
    %357 = arith.addf %356, %15 : vector<8x512xf32>
    %358 = vector.extract_strided_slice %357 {offsets = [0, 0], sizes = [8, 128], strides = [1, 1]} : vector<8x512xf32> to vector<8x128xf32>
    %359 = arith.negf %358 : vector<8x128xf32>
    %360 = math.exp %359 : vector<8x128xf32>
    %cst_73 = arith.constant 1.000000e+00 : f32
    %361 = vector.broadcast %cst_73 : f32 to vector<8x128xf32>
    %362 = arith.addf %361, %360 : vector<8x128xf32>
    %363 = arith.divf %361, %362 : vector<8x128xf32>
    %364 = vector.extract_strided_slice %357 {offsets = [0, 128], sizes = [8, 128], strides = [1, 1]} : vector<8x512xf32> to vector<8x128xf32>
    %365 = arith.negf %364 : vector<8x128xf32>
    %366 = math.exp %365 : vector<8x128xf32>
    %cst_74 = arith.constant 1.000000e+00 : f32
    %367 = vector.broadcast %cst_74 : f32 to vector<8x128xf32>
    %368 = arith.addf %367, %366 : vector<8x128xf32>
    %369 = arith.divf %367, %368 : vector<8x128xf32>
    %370 = vector.extract_strided_slice %357 {offsets = [0, 256], sizes = [8, 128], strides = [1, 1]} : vector<8x512xf32> to vector<8x128xf32>
    %371 = math.tanh %370 : vector<8x128xf32>
    %372 = vector.extract_strided_slice %357 {offsets = [0, 384], sizes = [8, 128], strides = [1, 1]} : vector<8x512xf32> to vector<8x128xf32>
    %373 = arith.negf %372 : vector<8x128xf32>
    %374 = math.exp %373 : vector<8x128xf32>
    %cst_75 = arith.constant 1.000000e+00 : f32
    %375 = vector.broadcast %cst_75 : f32 to vector<8x128xf32>
    %376 = arith.addf %375, %374 : vector<8x128xf32>
    %377 = arith.divf %375, %376 : vector<8x128xf32>
    %378 = arith.mulf %369, %288 : vector<8x128xf32>
    %379 = arith.mulf %363, %371 : vector<8x128xf32>
    %380 = arith.addf %378, %379 : vector<8x128xf32>
    %381 = math.tanh %380 : vector<8x128xf32>
    %382 = arith.mulf %377, %381 : vector<8x128xf32>
    %383 = arith.index_cast %294 : i32 to index
    %c0_76 = arith.constant 0 : index
    %384 = vector.load %arg12[%383, %c0_76] : memref<64x128xf32, #tpu.memory_space<vmem>>, vector<8x128xf32>
    tpu.vector_store %arg12[%383, %c0_76], %382 {strides = array<i32>} : memref<64x128xf32, #tpu.memory_space<vmem>>, vector<8x128xf32>,
    %c4_i32 = arith.constant 4 : i32
    %c8_i32_77 = arith.constant 8 : i32
    %385 = arith.muli %c4_i32, %c8_i32_77 : i32
    %386 = tpu.assume_multiple %385, 8 : i32
    %387 = arith.index_cast %386 : i32 to index
    %c0_78 = arith.constant 0 : index
    %388 = vector.load %arg11[%387, %c0_78] : memref<64x512xf32, #tpu.memory_space<vmem>>, vector<8x512xf32>
    %389 = arith.truncf %324 : vector<8x128xf32> to vector<8x128xbf16>
    %cst_79 = arith.constant dense<0.000000e+00> : vector<8x512xf32>
    %390 = tpu.matmul %389, %7, %cst_79 {dimension_numbers = #tpu.dot_dimension_numbers<[1], [0], [0], [1], [0, 0, 1, 1], [], []>} : vector<8x128xbf16>, vector<128x512xbf16>, vector<8x512xf32> -> vector<8x512xf32>
    %391 = arith.addf %388, %390 : vector<8x512xf32>
    %392 = vector.extract_strided_slice %391 {offsets = [0, 0], sizes = [8, 128], strides = [1, 1]} : vector<8x512xf32> to vector<8x128xf32>
    %393 = arith.negf %392 : vector<8x128xf32>
    %394 = math.exp %393 : vector<8x128xf32>
    %cst_80 = arith.constant 1.000000e+00 : f32
    %395 = vector.broadcast %cst_80 : f32 to vector<8x128xf32>
    %396 = arith.addf %395, %394 : vector<8x128xf32>
    %397 = arith.divf %395, %396 : vector<8x128xf32>
    %398 = vector.extract_strided_slice %391 {offsets = [0, 128], sizes = [8, 128], strides = [1, 1]} : vector<8x512xf32> to vector<8x128xf32>
    %399 = arith.negf %398 : vector<8x128xf32>
    %400 = math.exp %399 : vector<8x128xf32>
    %cst_81 = arith.constant 1.000000e+00 : f32
    %401 = vector.broadcast %cst_81 : f32 to vector<8x128xf32>
    %402 = arith.addf %401, %400 : vector<8x128xf32>
    %403 = arith.divf %401, %402 : vector<8x128xf32>
    %404 = vector.extract_strided_slice %391 {offsets = [0, 256], sizes = [8, 128], strides = [1, 1]} : vector<8x512xf32> to vector<8x128xf32>
    %405 = math.tanh %404 : vector<8x128xf32>
    %406 = vector.extract_strided_slice %391 {offsets = [0, 384], sizes = [8, 128], strides = [1, 1]} : vector<8x512xf32> to vector<8x128xf32>
    %407 = arith.negf %406 : vector<8x128xf32>
    %408 = math.exp %407 : vector<8x128xf32>
    %cst_82 = arith.constant 1.000000e+00 : f32
    %409 = vector.broadcast %cst_82 : f32 to vector<8x128xf32>
    %410 = arith.addf %409, %408 : vector<8x128xf32>
    %411 = arith.divf %409, %410 : vector<8x128xf32>
    %412 = arith.mulf %403, %322 : vector<8x128xf32>
    %413 = arith.mulf %397, %405 : vector<8x128xf32>
    %414 = arith.addf %412, %413 : vector<8x128xf32>
    %415 = math.tanh %414 : vector<8x128xf32>
    %416 = arith.mulf %411, %415 : vector<8x128xf32>
    %417 = tpu.concatenate %416, %353 in 1 : vector<8x128xf32>, vector<8x128xf32> -> vector<8x256xf32>
    %418 = arith.truncf %417 : vector<8x256xf32> to vector<8x256xbf16>
    %cst_83 = arith.constant dense<0.000000e+00> : vector<8x512xf32>
    %419 = tpu.matmul %418, %8, %cst_83 {dimension_numbers = #tpu.dot_dimension_numbers<[1], [0], [0], [1], [0, 0, 1, 1], [], []>} : vector<8x256xbf16>, vector<256x512xbf16>, vector<8x512xf32> -> vector<8x512xf32>
    %420 = arith.addf %419, %12 : vector<8x512xf32>
    %421 = vector.extract_strided_slice %420 {offsets = [0, 0], sizes = [8, 128], strides = [1, 1]} : vector<8x512xf32> to vector<8x128xf32>
    %422 = arith.negf %421 : vector<8x128xf32>
    %423 = math.exp %422 : vector<8x128xf32>
    %cst_84 = arith.constant 1.000000e+00 : f32
    %424 = vector.broadcast %cst_84 : f32 to vector<8x128xf32>
    %425 = arith.addf %424, %423 : vector<8x128xf32>
    %426 = arith.divf %424, %425 : vector<8x128xf32>
    %427 = vector.extract_strided_slice %420 {offsets = [0, 128], sizes = [8, 128], strides = [1, 1]} : vector<8x512xf32> to vector<8x128xf32>
    %428 = arith.negf %427 : vector<8x128xf32>
    %429 = math.exp %428 : vector<8x128xf32>
    %cst_85 = arith.constant 1.000000e+00 : f32
    %430 = vector.broadcast %cst_85 : f32 to vector<8x128xf32>
    %431 = arith.addf %430, %429 : vector<8x128xf32>
    %432 = arith.divf %430, %431 : vector<8x128xf32>
    %433 = vector.extract_strided_slice %420 {offsets = [0, 256], sizes = [8, 128], strides = [1, 1]} : vector<8x512xf32> to vector<8x128xf32>
    %434 = math.tanh %433 : vector<8x128xf32>
    %435 = vector.extract_strided_slice %420 {offsets = [0, 384], sizes = [8, 128], strides = [1, 1]} : vector<8x512xf32> to vector<8x128xf32>
    %436 = arith.negf %435 : vector<8x128xf32>
    %437 = math.exp %436 : vector<8x128xf32>
    %cst_86 = arith.constant 1.000000e+00 : f32
    %438 = vector.broadcast %cst_86 : f32 to vector<8x128xf32>
    %439 = arith.addf %438, %437 : vector<8x128xf32>
    %440 = arith.divf %438, %439 : vector<8x128xf32>
    %441 = arith.mulf %432, %351 : vector<8x128xf32>
    %442 = arith.mulf %426, %434 : vector<8x128xf32>
    %443 = arith.addf %441, %442 : vector<8x128xf32>
    %444 = math.tanh %443 : vector<8x128xf32>
    %445 = arith.mulf %440, %444 : vector<8x128xf32>
    %446 = tpu.concatenate %445, %382 in 1 : vector<8x128xf32>, vector<8x128xf32> -> vector<8x256xf32>
    %447 = arith.truncf %446 : vector<8x256xf32> to vector<8x256xbf16>
    %cst_87 = arith.constant dense<0.000000e+00> : vector<8x512xf32>
    %448 = tpu.matmul %447, %9, %cst_87 {dimension_numbers = #tpu.dot_dimension_numbers<[1], [0], [0], [1], [0, 0, 1, 1], [], []>} : vector<8x256xbf16>, vector<256x512xbf16>, vector<8x512xf32> -> vector<8x512xf32>
    %449 = arith.addf %448, %15 : vector<8x512xf32>
    %450 = vector.extract_strided_slice %449 {offsets = [0, 0], sizes = [8, 128], strides = [1, 1]} : vector<8x512xf32> to vector<8x128xf32>
    %451 = arith.negf %450 : vector<8x128xf32>
    %452 = math.exp %451 : vector<8x128xf32>
    %cst_88 = arith.constant 1.000000e+00 : f32
    %453 = vector.broadcast %cst_88 : f32 to vector<8x128xf32>
    %454 = arith.addf %453, %452 : vector<8x128xf32>
    %455 = arith.divf %453, %454 : vector<8x128xf32>
    %456 = vector.extract_strided_slice %449 {offsets = [0, 128], sizes = [8, 128], strides = [1, 1]} : vector<8x512xf32> to vector<8x128xf32>
    %457 = arith.negf %456 : vector<8x128xf32>
    %458 = math.exp %457 : vector<8x128xf32>
    %cst_89 = arith.constant 1.000000e+00 : f32
    %459 = vector.broadcast %cst_89 : f32 to vector<8x128xf32>
    %460 = arith.addf %459, %458 : vector<8x128xf32>
    %461 = arith.divf %459, %460 : vector<8x128xf32>
    %462 = vector.extract_strided_slice %449 {offsets = [0, 256], sizes = [8, 128], strides = [1, 1]} : vector<8x512xf32> to vector<8x128xf32>
    %463 = math.tanh %462 : vector<8x128xf32>
    %464 = vector.extract_strided_slice %449 {offsets = [0, 384], sizes = [8, 128], strides = [1, 1]} : vector<8x512xf32> to vector<8x128xf32>
    %465 = arith.negf %464 : vector<8x128xf32>
    %466 = math.exp %465 : vector<8x128xf32>
    %cst_90 = arith.constant 1.000000e+00 : f32
    %467 = vector.broadcast %cst_90 : f32 to vector<8x128xf32>
    %468 = arith.addf %467, %466 : vector<8x128xf32>
    %469 = arith.divf %467, %468 : vector<8x128xf32>
    %470 = arith.mulf %461, %380 : vector<8x128xf32>
    %471 = arith.mulf %455, %463 : vector<8x128xf32>
    %472 = arith.addf %470, %471 : vector<8x128xf32>
    %473 = math.tanh %472 : vector<8x128xf32>
    %474 = arith.mulf %469, %473 : vector<8x128xf32>
    %475 = arith.index_cast %386 : i32 to index
    %c0_91 = arith.constant 0 : index
    %476 = vector.load %arg12[%475, %c0_91] : memref<64x128xf32, #tpu.memory_space<vmem>>, vector<8x128xf32>
    tpu.vector_store %arg12[%475, %c0_91], %474 {strides = array<i32>} : memref<64x128xf32, #tpu.memory_space<vmem>>, vector<8x128xf32>,
    %c5_i32 = arith.constant 5 : i32
    %c8_i32_92 = arith.constant 8 : i32
    %477 = arith.muli %c5_i32, %c8_i32_92 : i32
    %478 = tpu.assume_multiple %477, 8 : i32
    %479 = arith.index_cast %478 : i32 to index
    %c0_93 = arith.constant 0 : index
    %480 = vector.load %arg11[%479, %c0_93] : memref<64x512xf32, #tpu.memory_space<vmem>>, vector<8x512xf32>
    %481 = arith.truncf %416 : vector<8x128xf32> to vector<8x128xbf16>
    %cst_94 = arith.constant dense<0.000000e+00> : vector<8x512xf32>
    %482 = tpu.matmul %481, %7, %cst_94 {dimension_numbers = #tpu.dot_dimension_numbers<[1], [0], [0], [1], [0, 0, 1, 1], [], []>} : vector<8x128xbf16>, vector<128x512xbf16>, vector<8x512xf32> -> vector<8x512xf32>
    %483 = arith.addf %480, %482 : vector<8x512xf32>
    %484 = vector.extract_strided_slice %483 {offsets = [0, 0], sizes = [8, 128], strides = [1, 1]} : vector<8x512xf32> to vector<8x128xf32>
    %485 = arith.negf %484 : vector<8x128xf32>
    %486 = math.exp %485 : vector<8x128xf32>
    %cst_95 = arith.constant 1.000000e+00 : f32
    %487 = vector.broadcast %cst_95 : f32 to vector<8x128xf32>
    %488 = arith.addf %487, %486 : vector<8x128xf32>
    %489 = arith.divf %487, %488 : vector<8x128xf32>
    %490 = vector.extract_strided_slice %483 {offsets = [0, 128], sizes = [8, 128], strides = [1, 1]} : vector<8x512xf32> to vector<8x128xf32>
    %491 = arith.negf %490 : vector<8x128xf32>
    %492 = math.exp %491 : vector<8x128xf32>
    %cst_96 = arith.constant 1.000000e+00 : f32
    %493 = vector.broadcast %cst_96 : f32 to vector<8x128xf32>
    %494 = arith.addf %493, %492 : vector<8x128xf32>
    %495 = arith.divf %493, %494 : vector<8x128xf32>
    %496 = vector.extract_strided_slice %483 {offsets = [0, 256], sizes = [8, 128], strides = [1, 1]} : vector<8x512xf32> to vector<8x128xf32>
    %497 = math.tanh %496 : vector<8x128xf32>
    %498 = vector.extract_strided_slice %483 {offsets = [0, 384], sizes = [8, 128], strides = [1, 1]} : vector<8x512xf32> to vector<8x128xf32>
    %499 = arith.negf %498 : vector<8x128xf32>
    %500 = math.exp %499 : vector<8x128xf32>
    %cst_97 = arith.constant 1.000000e+00 : f32
    %501 = vector.broadcast %cst_97 : f32 to vector<8x128xf32>
    %502 = arith.addf %501, %500 : vector<8x128xf32>
    %503 = arith.divf %501, %502 : vector<8x128xf32>
    %504 = arith.mulf %495, %414 : vector<8x128xf32>
    %505 = arith.mulf %489, %497 : vector<8x128xf32>
    %506 = arith.addf %504, %505 : vector<8x128xf32>
    %507 = math.tanh %506 : vector<8x128xf32>
    %508 = arith.mulf %503, %507 : vector<8x128xf32>
    %509 = tpu.concatenate %508, %445 in 1 : vector<8x128xf32>, vector<8x128xf32> -> vector<8x256xf32>
    %510 = arith.truncf %509 : vector<8x256xf32> to vector<8x256xbf16>
    %cst_98 = arith.constant dense<0.000000e+00> : vector<8x512xf32>
    %511 = tpu.matmul %510, %8, %cst_98 {dimension_numbers = #tpu.dot_dimension_numbers<[1], [0], [0], [1], [0, 0, 1, 1], [], []>} : vector<8x256xbf16>, vector<256x512xbf16>, vector<8x512xf32> -> vector<8x512xf32>
    %512 = arith.addf %511, %12 : vector<8x512xf32>
    %513 = vector.extract_strided_slice %512 {offsets = [0, 0], sizes = [8, 128], strides = [1, 1]} : vector<8x512xf32> to vector<8x128xf32>
    %514 = arith.negf %513 : vector<8x128xf32>
    %515 = math.exp %514 : vector<8x128xf32>
    %cst_99 = arith.constant 1.000000e+00 : f32
    %516 = vector.broadcast %cst_99 : f32 to vector<8x128xf32>
    %517 = arith.addf %516, %515 : vector<8x128xf32>
    %518 = arith.divf %516, %517 : vector<8x128xf32>
    %519 = vector.extract_strided_slice %512 {offsets = [0, 128], sizes = [8, 128], strides = [1, 1]} : vector<8x512xf32> to vector<8x128xf32>
    %520 = arith.negf %519 : vector<8x128xf32>
    %521 = math.exp %520 : vector<8x128xf32>
    %cst_100 = arith.constant 1.000000e+00 : f32
    %522 = vector.broadcast %cst_100 : f32 to vector<8x128xf32>
    %523 = arith.addf %522, %521 : vector<8x128xf32>
    %524 = arith.divf %522, %523 : vector<8x128xf32>
    %525 = vector.extract_strided_slice %512 {offsets = [0, 256], sizes = [8, 128], strides = [1, 1]} : vector<8x512xf32> to vector<8x128xf32>
    %526 = math.tanh %525 : vector<8x128xf32>
    %527 = vector.extract_strided_slice %512 {offsets = [0, 384], sizes = [8, 128], strides = [1, 1]} : vector<8x512xf32> to vector<8x128xf32>
    %528 = arith.negf %527 : vector<8x128xf32>
    %529 = math.exp %528 : vector<8x128xf32>
    %cst_101 = arith.constant 1.000000e+00 : f32
    %530 = vector.broadcast %cst_101 : f32 to vector<8x128xf32>
    %531 = arith.addf %530, %529 : vector<8x128xf32>
    %532 = arith.divf %530, %531 : vector<8x128xf32>
    %533 = arith.mulf %524, %443 : vector<8x128xf32>
    %534 = arith.mulf %518, %526 : vector<8x128xf32>
    %535 = arith.addf %533, %534 : vector<8x128xf32>
    %536 = math.tanh %535 : vector<8x128xf32>
    %537 = arith.mulf %532, %536 : vector<8x128xf32>
    %538 = tpu.concatenate %537, %474 in 1 : vector<8x128xf32>, vector<8x128xf32> -> vector<8x256xf32>
    %539 = arith.truncf %538 : vector<8x256xf32> to vector<8x256xbf16>
    %cst_102 = arith.constant dense<0.000000e+00> : vector<8x512xf32>
    %540 = tpu.matmul %539, %9, %cst_102 {dimension_numbers = #tpu.dot_dimension_numbers<[1], [0], [0], [1], [0, 0, 1, 1], [], []>} : vector<8x256xbf16>, vector<256x512xbf16>, vector<8x512xf32> -> vector<8x512xf32>
    %541 = arith.addf %540, %15 : vector<8x512xf32>
    %542 = vector.extract_strided_slice %541 {offsets = [0, 0], sizes = [8, 128], strides = [1, 1]} : vector<8x512xf32> to vector<8x128xf32>
    %543 = arith.negf %542 : vector<8x128xf32>
    %544 = math.exp %543 : vector<8x128xf32>
    %cst_103 = arith.constant 1.000000e+00 : f32
    %545 = vector.broadcast %cst_103 : f32 to vector<8x128xf32>
    %546 = arith.addf %545, %544 : vector<8x128xf32>
    %547 = arith.divf %545, %546 : vector<8x128xf32>
    %548 = vector.extract_strided_slice %541 {offsets = [0, 128], sizes = [8, 128], strides = [1, 1]} : vector<8x512xf32> to vector<8x128xf32>
    %549 = arith.negf %548 : vector<8x128xf32>
    %550 = math.exp %549 : vector<8x128xf32>
    %cst_104 = arith.constant 1.000000e+00 : f32
    %551 = vector.broadcast %cst_104 : f32 to vector<8x128xf32>
    %552 = arith.addf %551, %550 : vector<8x128xf32>
    %553 = arith.divf %551, %552 : vector<8x128xf32>
    %554 = vector.extract_strided_slice %541 {offsets = [0, 256], sizes = [8, 128], strides = [1, 1]} : vector<8x512xf32> to vector<8x128xf32>
    %555 = math.tanh %554 : vector<8x128xf32>
    %556 = vector.extract_strided_slice %541 {offsets = [0, 384], sizes = [8, 128], strides = [1, 1]} : vector<8x512xf32> to vector<8x128xf32>
    %557 = arith.negf %556 : vector<8x128xf32>
    %558 = math.exp %557 : vector<8x128xf32>
    %cst_105 = arith.constant 1.000000e+00 : f32
    %559 = vector.broadcast %cst_105 : f32 to vector<8x128xf32>
    %560 = arith.addf %559, %558 : vector<8x128xf32>
    %561 = arith.divf %559, %560 : vector<8x128xf32>
    %562 = arith.mulf %553, %472 : vector<8x128xf32>
    %563 = arith.mulf %547, %555 : vector<8x128xf32>
    %564 = arith.addf %562, %563 : vector<8x128xf32>
    %565 = math.tanh %564 : vector<8x128xf32>
    %566 = arith.mulf %561, %565 : vector<8x128xf32>
    %567 = arith.index_cast %478 : i32 to index
    %c0_106 = arith.constant 0 : index
    %568 = vector.load %arg12[%567, %c0_106] : memref<64x128xf32, #tpu.memory_space<vmem>>, vector<8x128xf32>
    tpu.vector_store %arg12[%567, %c0_106], %566 {strides = array<i32>} : memref<64x128xf32, #tpu.memory_space<vmem>>, vector<8x128xf32>,
    %c6_i32 = arith.constant 6 : i32
    %c8_i32_107 = arith.constant 8 : i32
    %569 = arith.muli %c6_i32, %c8_i32_107 : i32
    %570 = tpu.assume_multiple %569, 8 : i32
    %571 = arith.index_cast %570 : i32 to index
    %c0_108 = arith.constant 0 : index
    %572 = vector.load %arg11[%571, %c0_108] : memref<64x512xf32, #tpu.memory_space<vmem>>, vector<8x512xf32>
    %573 = arith.truncf %508 : vector<8x128xf32> to vector<8x128xbf16>
    %cst_109 = arith.constant dense<0.000000e+00> : vector<8x512xf32>
    %574 = tpu.matmul %573, %7, %cst_109 {dimension_numbers = #tpu.dot_dimension_numbers<[1], [0], [0], [1], [0, 0, 1, 1], [], []>} : vector<8x128xbf16>, vector<128x512xbf16>, vector<8x512xf32> -> vector<8x512xf32>
    %575 = arith.addf %572, %574 : vector<8x512xf32>
    %576 = vector.extract_strided_slice %575 {offsets = [0, 0], sizes = [8, 128], strides = [1, 1]} : vector<8x512xf32> to vector<8x128xf32>
    %577 = arith.negf %576 : vector<8x128xf32>
    %578 = math.exp %577 : vector<8x128xf32>
    %cst_110 = arith.constant 1.000000e+00 : f32
    %579 = vector.broadcast %cst_110 : f32 to vector<8x128xf32>
    %580 = arith.addf %579, %578 : vector<8x128xf32>
    %581 = arith.divf %579, %580 : vector<8x128xf32>
    %582 = vector.extract_strided_slice %575 {offsets = [0, 128], sizes = [8, 128], strides = [1, 1]} : vector<8x512xf32> to vector<8x128xf32>
    %583 = arith.negf %582 : vector<8x128xf32>
    %584 = math.exp %583 : vector<8x128xf32>
    %cst_111 = arith.constant 1.000000e+00 : f32
    %585 = vector.broadcast %cst_111 : f32 to vector<8x128xf32>
    %586 = arith.addf %585, %584 : vector<8x128xf32>
    %587 = arith.divf %585, %586 : vector<8x128xf32>
    %588 = vector.extract_strided_slice %575 {offsets = [0, 256], sizes = [8, 128], strides = [1, 1]} : vector<8x512xf32> to vector<8x128xf32>
    %589 = math.tanh %588 : vector<8x128xf32>
    %590 = vector.extract_strided_slice %575 {offsets = [0, 384], sizes = [8, 128], strides = [1, 1]} : vector<8x512xf32> to vector<8x128xf32>
    %591 = arith.negf %590 : vector<8x128xf32>
    %592 = math.exp %591 : vector<8x128xf32>
    %cst_112 = arith.constant 1.000000e+00 : f32
    %593 = vector.broadcast %cst_112 : f32 to vector<8x128xf32>
    %594 = arith.addf %593, %592 : vector<8x128xf32>
    %595 = arith.divf %593, %594 : vector<8x128xf32>
    %596 = arith.mulf %587, %506 : vector<8x128xf32>
    %597 = arith.mulf %581, %589 : vector<8x128xf32>
    %598 = arith.addf %596, %597 : vector<8x128xf32>
    %599 = math.tanh %598 : vector<8x128xf32>
    %600 = arith.mulf %595, %599 : vector<8x128xf32>
    %601 = tpu.concatenate %600, %537 in 1 : vector<8x128xf32>, vector<8x128xf32> -> vector<8x256xf32>
    %602 = arith.truncf %601 : vector<8x256xf32> to vector<8x256xbf16>
    %cst_113 = arith.constant dense<0.000000e+00> : vector<8x512xf32>
    %603 = tpu.matmul %602, %8, %cst_113 {dimension_numbers = #tpu.dot_dimension_numbers<[1], [0], [0], [1], [0, 0, 1, 1], [], []>} : vector<8x256xbf16>, vector<256x512xbf16>, vector<8x512xf32> -> vector<8x512xf32>
    %604 = arith.addf %603, %12 : vector<8x512xf32>
    %605 = vector.extract_strided_slice %604 {offsets = [0, 0], sizes = [8, 128], strides = [1, 1]} : vector<8x512xf32> to vector<8x128xf32>
    %606 = arith.negf %605 : vector<8x128xf32>
    %607 = math.exp %606 : vector<8x128xf32>
    %cst_114 = arith.constant 1.000000e+00 : f32
    %608 = vector.broadcast %cst_114 : f32 to vector<8x128xf32>
    %609 = arith.addf %608, %607 : vector<8x128xf32>
    %610 = arith.divf %608, %609 : vector<8x128xf32>
    %611 = vector.extract_strided_slice %604 {offsets = [0, 128], sizes = [8, 128], strides = [1, 1]} : vector<8x512xf32> to vector<8x128xf32>
    %612 = arith.negf %611 : vector<8x128xf32>
    %613 = math.exp %612 : vector<8x128xf32>
    %cst_115 = arith.constant 1.000000e+00 : f32
    %614 = vector.broadcast %cst_115 : f32 to vector<8x128xf32>
    %615 = arith.addf %614, %613 : vector<8x128xf32>
    %616 = arith.divf %614, %615 : vector<8x128xf32>
    %617 = vector.extract_strided_slice %604 {offsets = [0, 256], sizes = [8, 128], strides = [1, 1]} : vector<8x512xf32> to vector<8x128xf32>
    %618 = math.tanh %617 : vector<8x128xf32>
    %619 = vector.extract_strided_slice %604 {offsets = [0, 384], sizes = [8, 128], strides = [1, 1]} : vector<8x512xf32> to vector<8x128xf32>
    %620 = arith.negf %619 : vector<8x128xf32>
    %621 = math.exp %620 : vector<8x128xf32>
    %cst_116 = arith.constant 1.000000e+00 : f32
    %622 = vector.broadcast %cst_116 : f32 to vector<8x128xf32>
    %623 = arith.addf %622, %621 : vector<8x128xf32>
    %624 = arith.divf %622, %623 : vector<8x128xf32>
    %625 = arith.mulf %616, %535 : vector<8x128xf32>
    %626 = arith.mulf %610, %618 : vector<8x128xf32>
    %627 = arith.addf %625, %626 : vector<8x128xf32>
    %628 = math.tanh %627 : vector<8x128xf32>
    %629 = arith.mulf %624, %628 : vector<8x128xf32>
    %630 = tpu.concatenate %629, %566 in 1 : vector<8x128xf32>, vector<8x128xf32> -> vector<8x256xf32>
    %631 = arith.truncf %630 : vector<8x256xf32> to vector<8x256xbf16>
    %cst_117 = arith.constant dense<0.000000e+00> : vector<8x512xf32>
    %632 = tpu.matmul %631, %9, %cst_117 {dimension_numbers = #tpu.dot_dimension_numbers<[1], [0], [0], [1], [0, 0, 1, 1], [], []>} : vector<8x256xbf16>, vector<256x512xbf16>, vector<8x512xf32> -> vector<8x512xf32>
    %633 = arith.addf %632, %15 : vector<8x512xf32>
    %634 = vector.extract_strided_slice %633 {offsets = [0, 0], sizes = [8, 128], strides = [1, 1]} : vector<8x512xf32> to vector<8x128xf32>
    %635 = arith.negf %634 : vector<8x128xf32>
    %636 = math.exp %635 : vector<8x128xf32>
    %cst_118 = arith.constant 1.000000e+00 : f32
    %637 = vector.broadcast %cst_118 : f32 to vector<8x128xf32>
    %638 = arith.addf %637, %636 : vector<8x128xf32>
    %639 = arith.divf %637, %638 : vector<8x128xf32>
    %640 = vector.extract_strided_slice %633 {offsets = [0, 128], sizes = [8, 128], strides = [1, 1]} : vector<8x512xf32> to vector<8x128xf32>
    %641 = arith.negf %640 : vector<8x128xf32>
    %642 = math.exp %641 : vector<8x128xf32>
    %cst_119 = arith.constant 1.000000e+00 : f32
    %643 = vector.broadcast %cst_119 : f32 to vector<8x128xf32>
    %644 = arith.addf %643, %642 : vector<8x128xf32>
    %645 = arith.divf %643, %644 : vector<8x128xf32>
    %646 = vector.extract_strided_slice %633 {offsets = [0, 256], sizes = [8, 128], strides = [1, 1]} : vector<8x512xf32> to vector<8x128xf32>
    %647 = math.tanh %646 : vector<8x128xf32>
    %648 = vector.extract_strided_slice %633 {offsets = [0, 384], sizes = [8, 128], strides = [1, 1]} : vector<8x512xf32> to vector<8x128xf32>
    %649 = arith.negf %648 : vector<8x128xf32>
    %650 = math.exp %649 : vector<8x128xf32>
    %cst_120 = arith.constant 1.000000e+00 : f32
    %651 = vector.broadcast %cst_120 : f32 to vector<8x128xf32>
    %652 = arith.addf %651, %650 : vector<8x128xf32>
    %653 = arith.divf %651, %652 : vector<8x128xf32>
    %654 = arith.mulf %645, %564 : vector<8x128xf32>
    %655 = arith.mulf %639, %647 : vector<8x128xf32>
    %656 = arith.addf %654, %655 : vector<8x128xf32>
    %657 = math.tanh %656 : vector<8x128xf32>
    %658 = arith.mulf %653, %657 : vector<8x128xf32>
    %659 = arith.index_cast %570 : i32 to index
    %c0_121 = arith.constant 0 : index
    %660 = vector.load %arg12[%659, %c0_121] : memref<64x128xf32, #tpu.memory_space<vmem>>, vector<8x128xf32>
    tpu.vector_store %arg12[%659, %c0_121], %658 {strides = array<i32>} : memref<64x128xf32, #tpu.memory_space<vmem>>, vector<8x128xf32>,
    %c7_i32 = arith.constant 7 : i32
    %c8_i32_122 = arith.constant 8 : i32
    %661 = arith.muli %c7_i32, %c8_i32_122 : i32
    %662 = tpu.assume_multiple %661, 8 : i32
    %663 = arith.index_cast %662 : i32 to index
    %c0_123 = arith.constant 0 : index
    %664 = vector.load %arg11[%663, %c0_123] : memref<64x512xf32, #tpu.memory_space<vmem>>, vector<8x512xf32>
    %665 = arith.truncf %600 : vector<8x128xf32> to vector<8x128xbf16>
    %cst_124 = arith.constant dense<0.000000e+00> : vector<8x512xf32>
    %666 = tpu.matmul %665, %7, %cst_124 {dimension_numbers = #tpu.dot_dimension_numbers<[1], [0], [0], [1], [0, 0, 1, 1], [], []>} : vector<8x128xbf16>, vector<128x512xbf16>, vector<8x512xf32> -> vector<8x512xf32>
    %667 = arith.addf %664, %666 : vector<8x512xf32>
    %668 = vector.extract_strided_slice %667 {offsets = [0, 0], sizes = [8, 128], strides = [1, 1]} : vector<8x512xf32> to vector<8x128xf32>
    %669 = arith.negf %668 : vector<8x128xf32>
    %670 = math.exp %669 : vector<8x128xf32>
    %cst_125 = arith.constant 1.000000e+00 : f32
    %671 = vector.broadcast %cst_125 : f32 to vector<8x128xf32>
    %672 = arith.addf %671, %670 : vector<8x128xf32>
    %673 = arith.divf %671, %672 : vector<8x128xf32>
    %674 = vector.extract_strided_slice %667 {offsets = [0, 128], sizes = [8, 128], strides = [1, 1]} : vector<8x512xf32> to vector<8x128xf32>
    %675 = arith.negf %674 : vector<8x128xf32>
    %676 = math.exp %675 : vector<8x128xf32>
    %cst_126 = arith.constant 1.000000e+00 : f32
    %677 = vector.broadcast %cst_126 : f32 to vector<8x128xf32>
    %678 = arith.addf %677, %676 : vector<8x128xf32>
    %679 = arith.divf %677, %678 : vector<8x128xf32>
    %680 = vector.extract_strided_slice %667 {offsets = [0, 256], sizes = [8, 128], strides = [1, 1]} : vector<8x512xf32> to vector<8x128xf32>
    %681 = math.tanh %680 : vector<8x128xf32>
    %682 = vector.extract_strided_slice %667 {offsets = [0, 384], sizes = [8, 128], strides = [1, 1]} : vector<8x512xf32> to vector<8x128xf32>
    %683 = arith.negf %682 : vector<8x128xf32>
    %684 = math.exp %683 : vector<8x128xf32>
    %cst_127 = arith.constant 1.000000e+00 : f32
    %685 = vector.broadcast %cst_127 : f32 to vector<8x128xf32>
    %686 = arith.addf %685, %684 : vector<8x128xf32>
    %687 = arith.divf %685, %686 : vector<8x128xf32>
    %688 = arith.mulf %679, %598 : vector<8x128xf32>
    %689 = arith.mulf %673, %681 : vector<8x128xf32>
    %690 = arith.addf %688, %689 : vector<8x128xf32>
    %691 = math.tanh %690 : vector<8x128xf32>
    %692 = arith.mulf %687, %691 : vector<8x128xf32>
    %693 = tpu.concatenate %692, %629 in 1 : vector<8x128xf32>, vector<8x128xf32> -> vector<8x256xf32>
    %694 = arith.truncf %693 : vector<8x256xf32> to vector<8x256xbf16>
    %cst_128 = arith.constant dense<0.000000e+00> : vector<8x512xf32>
    %695 = tpu.matmul %694, %8, %cst_128 {dimension_numbers = #tpu.dot_dimension_numbers<[1], [0], [0], [1], [0, 0, 1, 1], [], []>} : vector<8x256xbf16>, vector<256x512xbf16>, vector<8x512xf32> -> vector<8x512xf32>
    %696 = arith.addf %695, %12 : vector<8x512xf32>
    %697 = vector.extract_strided_slice %696 {offsets = [0, 0], sizes = [8, 128], strides = [1, 1]} : vector<8x512xf32> to vector<8x128xf32>
    %698 = arith.negf %697 : vector<8x128xf32>
    %699 = math.exp %698 : vector<8x128xf32>
    %cst_129 = arith.constant 1.000000e+00 : f32
    %700 = vector.broadcast %cst_129 : f32 to vector<8x128xf32>
    %701 = arith.addf %700, %699 : vector<8x128xf32>
    %702 = arith.divf %700, %701 : vector<8x128xf32>
    %703 = vector.extract_strided_slice %696 {offsets = [0, 128], sizes = [8, 128], strides = [1, 1]} : vector<8x512xf32> to vector<8x128xf32>
    %704 = arith.negf %703 : vector<8x128xf32>
    %705 = math.exp %704 : vector<8x128xf32>
    %cst_130 = arith.constant 1.000000e+00 : f32
    %706 = vector.broadcast %cst_130 : f32 to vector<8x128xf32>
    %707 = arith.addf %706, %705 : vector<8x128xf32>
    %708 = arith.divf %706, %707 : vector<8x128xf32>
    %709 = vector.extract_strided_slice %696 {offsets = [0, 256], sizes = [8, 128], strides = [1, 1]} : vector<8x512xf32> to vector<8x128xf32>
    %710 = math.tanh %709 : vector<8x128xf32>
    %711 = vector.extract_strided_slice %696 {offsets = [0, 384], sizes = [8, 128], strides = [1, 1]} : vector<8x512xf32> to vector<8x128xf32>
    %712 = arith.negf %711 : vector<8x128xf32>
    %713 = math.exp %712 : vector<8x128xf32>
    %cst_131 = arith.constant 1.000000e+00 : f32
    %714 = vector.broadcast %cst_131 : f32 to vector<8x128xf32>
    %715 = arith.addf %714, %713 : vector<8x128xf32>
    %716 = arith.divf %714, %715 : vector<8x128xf32>
    %717 = arith.mulf %708, %627 : vector<8x128xf32>
    %718 = arith.mulf %702, %710 : vector<8x128xf32>
    %719 = arith.addf %717, %718 : vector<8x128xf32>
    %720 = math.tanh %719 : vector<8x128xf32>
    %721 = arith.mulf %716, %720 : vector<8x128xf32>
    %722 = tpu.concatenate %721, %658 in 1 : vector<8x128xf32>, vector<8x128xf32> -> vector<8x256xf32>
    %723 = arith.truncf %722 : vector<8x256xf32> to vector<8x256xbf16>
    %cst_132 = arith.constant dense<0.000000e+00> : vector<8x512xf32>
    %724 = tpu.matmul %723, %9, %cst_132 {dimension_numbers = #tpu.dot_dimension_numbers<[1], [0], [0], [1], [0, 0, 1, 1], [], []>} : vector<8x256xbf16>, vector<256x512xbf16>, vector<8x512xf32> -> vector<8x512xf32>
    %725 = arith.addf %724, %15 : vector<8x512xf32>
    %726 = vector.extract_strided_slice %725 {offsets = [0, 0], sizes = [8, 128], strides = [1, 1]} : vector<8x512xf32> to vector<8x128xf32>
    %727 = arith.negf %726 : vector<8x128xf32>
    %728 = math.exp %727 : vector<8x128xf32>
    %cst_133 = arith.constant 1.000000e+00 : f32
    %729 = vector.broadcast %cst_133 : f32 to vector<8x128xf32>
    %730 = arith.addf %729, %728 : vector<8x128xf32>
    %731 = arith.divf %729, %730 : vector<8x128xf32>
    %732 = vector.extract_strided_slice %725 {offsets = [0, 128], sizes = [8, 128], strides = [1, 1]} : vector<8x512xf32> to vector<8x128xf32>
    %733 = arith.negf %732 : vector<8x128xf32>
    %734 = math.exp %733 : vector<8x128xf32>
    %cst_134 = arith.constant 1.000000e+00 : f32
    %735 = vector.broadcast %cst_134 : f32 to vector<8x128xf32>
    %736 = arith.addf %735, %734 : vector<8x128xf32>
    %737 = arith.divf %735, %736 : vector<8x128xf32>
    %738 = vector.extract_strided_slice %725 {offsets = [0, 256], sizes = [8, 128], strides = [1, 1]} : vector<8x512xf32> to vector<8x128xf32>
    %739 = math.tanh %738 : vector<8x128xf32>
    %740 = vector.extract_strided_slice %725 {offsets = [0, 384], sizes = [8, 128], strides = [1, 1]} : vector<8x512xf32> to vector<8x128xf32>
    %741 = arith.negf %740 : vector<8x128xf32>
    %742 = math.exp %741 : vector<8x128xf32>
    %cst_135 = arith.constant 1.000000e+00 : f32
    %743 = vector.broadcast %cst_135 : f32 to vector<8x128xf32>
    %744 = arith.addf %743, %742 : vector<8x128xf32>
    %745 = arith.divf %743, %744 : vector<8x128xf32>
    %746 = arith.mulf %737, %656 : vector<8x128xf32>
    %747 = arith.mulf %731, %739 : vector<8x128xf32>
    %748 = arith.addf %746, %747 : vector<8x128xf32>
    %749 = math.tanh %748 : vector<8x128xf32>
    %750 = arith.mulf %745, %749 : vector<8x128xf32>
    %751 = arith.index_cast %662 : i32 to index
    %c0_136 = arith.constant 0 : index
    %752 = vector.load %arg12[%751, %c0_136] : memref<64x128xf32, #tpu.memory_space<vmem>>, vector<8x128xf32>
    tpu.vector_store %arg12[%751, %c0_136], %750 {strides = array<i32>} : memref<64x128xf32, #tpu.memory_space<vmem>>, vector<8x128xf32>,
    %c8_i32_137 = arith.constant 8 : i32
    %c0_138 = arith.constant 0 : index
    %c0_139 = arith.constant 0 : index
    %753 = vector.load %arg12[%c0_138, %c0_139] : memref<64x128xf32, #tpu.memory_space<vmem>>, vector<64x128xf32>
    %754 = arith.truncf %753 : vector<64x128xf32> to vector<64x128xbf16>
    %c0_140 = arith.constant 0 : index
    %c0_141 = arith.constant 0 : index
    %755 = vector.load %arg8[%c0_140, %c0_141] : memref<128x128xbf16, #tpu.memory_space<vmem>>, vector<128x128xbf16>
    %cst_142 = arith.constant dense<0.000000e+00> : vector<64x128xf32>
    %756 = tpu.matmul %754, %755, %cst_142 {dimension_numbers = #tpu.dot_dimension_numbers<[1], [0], [0], [1], [0, 0, 1, 1], [], []>} : vector<64x128xbf16>, vector<128x128xbf16>, vector<64x128xf32> -> vector<64x128xf32>
    %c0_143 = arith.constant 0 : index
    %c0_144 = arith.constant 0 : index
    %757 = vector.load %arg9[%c0_143, %c0_144] : memref<1x128xf32, #tpu.memory_space<vmem>>, vector<1x128xf32>
    %758 = vector.broadcast %757 : vector<1x128xf32> to vector<64x128xf32>
    %759 = arith.addf %756, %758 : vector<64x128xf32>
    %c0_145 = arith.constant 0 : index
    %c0_146 = arith.constant 0 : index
    %760 = vector.load %arg10[%c0_145, %c0_146] : memref<64x128xf32, #tpu.memory_space<vmem>>, vector<64x128xf32>
    tpu.vector_store %arg10[%c0_145, %c0_146], %759 {strides = array<i32>} : memref<64x128xf32, #tpu.memory_space<vmem>>, vector<64x128xf32>,
    return
  }
}

</mosaic_0001>

<llo_original>
// kernel: tpu_custom_call.1
$region0: #{tpu_custom_call.1}
  #allocation0 [shape = 'u32[]', space=smem, size = 0x4, offset = 0x4, fixed_abs, tag = 'smem constant byte address 0x4 - core index']
  #allocation1 [shape = 'u32[72,128]{1,0:T(1,128)}', space=vmem, size = 0x9000, scoped, tag = 'internal scratch']
  #allocation2 [shape = 'f32[64,512]{1,0:T(8,128)}', space=vmem, size = 0x20000, scoped, tag = 'scratch operand']
  #allocation3 [shape = 'f32[64,128]{1,0:T(8,128)}', space=vmem, size = 0x8000, scoped, tag = 'scratch operand']
  %s0 = inlined_call_operand.vmem [shape: bf16[64,26], index: 0, kind: input, shape index: {}]
  %s1 = inlined_call_operand.hbm [shape: bf16[26,512], index: 1, kind: input, shape index: {}]
  %s2 = inlined_call_operand.hbm [shape: bf16[128,512], index: 2, kind: input, shape index: {}]
  %s3 = inlined_call_operand.vmem [shape: f32[1,512], index: 3, kind: input, shape index: {}]
  %s4 = inlined_call_operand.hbm [shape: bf16[256,512], index: 4, kind: input, shape index: {}]
  %s5 = inlined_call_operand.vmem [shape: f32[1,512], index: 5, kind: input, shape index: {}]
  %s6 = inlined_call_operand.hbm [shape: bf16[256,512], index: 6, kind: input, shape index: {}]
  %s7 = inlined_call_operand.vmem [shape: f32[1,512], index: 7, kind: input, shape index: {}]
  %s8 = inlined_call_operand.hbm [shape: bf16[128,128], index: 8, kind: input, shape index: {}]
  %s9 = inlined_call_operand.vmem [shape: f32[1,128], index: 9, kind: input, shape index: {}]
  %s10 = inlined_call_operand.hbm [shape: f32[64,128], index: 10, kind: output, shape index: {}]
  %s11 = sld [smem:[#allocation0]]
  $region70: #{tpu_custom_call.1} parent=0
    _
  %s13 = ssub.s32 1, %s11
  %s14 = scalar_select 0, %s13, %s11
  $region1: #{tpu_custom_call.1} parent=0
    #allocation4 [shape = 'u8[32768]{0}', space=vmem, size = 0x8000, scoped, tag = 'input window, operand 1, single buffered']
    #allocation5 [shape = 's32[1]{0}', space=sflag, size = 0x4, scoped, tag = 'scoped memory for tpu_custom_call.1']
    #allocation6 [shape = 's32[1]{0}', space=sflag, size = 0x4, scoped, tag = 'scoped memory for tpu_custom_call.1']
    #allocation7 [shape = 'u8[131072]{0}', space=vmem, size = 0x20000, scoped, tag = 'input window, operand 2, single buffered']
    #allocation8 [shape = 's32[1]{0}', space=sflag, size = 0x4, scoped, tag = 'scoped memory for tpu_custom_call.1']
    #allocation9 [shape = 'u8[262144]{0}', space=vmem, size = 0x40000, scoped, tag = 'input window, operand 4, single buffered']
    #allocation10 [shape = 'u8[262144]{0}', space=vmem, size = 0x40000, scoped, tag = 'input window, operand 6, single buffered']
    #allocation11 [shape = 's32[1]{0}', space=sflag, size = 0x4, scoped, tag = 'scoped memory for tpu_custom_call.1']
    #allocation12 [shape = 'u8[32768]{0}', space=vmem, size = 0x8000, scoped, tag = 'input window, operand 8, single buffered']
    #allocation13 [shape = 'u8[32768]{0}', space=vmem, size = 0x8000, scoped, tag = 'output window, operand 0, single buffered']
    %15 = vsyncpa [#allocation5], 0
    %16 = vsyncpa [#allocation8], 0
    %17 = vsyncpa [#allocation11], 0
    %18 = vsyncpa [#allocation6], 0
    // Predicated region
    $region2: #{tpu_custom_call.1} parent=1 // pred_check
      _
    $region3: #{tpu_custom_call.1} parent=1 // pred_check_branch
      %20 = sbr.rel (0) target = $region5
    $region4: #{tpu_custom_call.1} parent=1 // pred_region
      _
    $region5: #{tpu_custom_call.1} parent=1 // pred_fallthru
      _
    // Predicated region
    $region6: #{tpu_custom_call.1} parent=1 // pred_check
      _
    $region7: #{tpu_custom_call.1} parent=1 // pred_check_branch
      %22 = sbr.rel (0) target = $region9
    $region8: #{tpu_custom_call.1} parent=1 // pred_region
      %24 = vsyncadd [#allocation5], 0
      %s25 = sshll.u32 %s1, 4
      %s26 = int_to_ptr.hbm [resolvable:$true] %s25
      %s27 = sshll.u32 [#allocation4], 4
      %s28 = int_to_ptr.vmem [resolvable:$true] %s27
      %33 = dma.hbm_to_vmem [thread:$0]  %s26, 1024, %s28, [#allocation5], 256, 256, 16
    $region9: #{tpu_custom_call.1} parent=1 // pred_fallthru
      _
    // Predicated region
    $region10: #{tpu_custom_call.1} parent=1 // pred_check
      _
    $region11: #{tpu_custom_call.1} parent=1 // pred_check_branch
      %35 = sbr.rel (0) target = $region13
    $region12: #{tpu_custom_call.1} parent=1 // pred_region
      %37 = vsyncadd [#allocation8], 0
      %s38 = sshll.u32 %s2, 4
      %s39 = int_to_ptr.hbm [resolvable:$true] %s38
      %s40 = sshll.u32 [#allocation7], 4
      %s41 = int_to_ptr.vmem [resolvable:$true] %s40
      %46 = dma.hbm_to_vmem [thread:$0]  %s39, 4096, %s41, [#allocation8], 256, 256, 16
    $region13: #{tpu_custom_call.1} parent=1 // pred_fallthru
      _
    // Predicated region
    $region14: #{tpu_custom_call.1} parent=1 // pred_check
      _
    $region15: #{tpu_custom_call.1} parent=1 // pred_check_branch
      %48 = sbr.rel (0) target = $region17
    $region16: #{tpu_custom_call.1} parent=1 // pred_region
      _
    $region17: #{tpu_custom_call.1} parent=1 // pred_fallthru
      _
    // Predicated region
    $region18: #{tpu_custom_call.1} parent=1 // pred_check
      _
    $region19: #{tpu_custom_call.1} parent=1 // pred_check_branch
      %50 = sbr.rel (0) target = $region21
    $region20: #{tpu_custom_call.1} parent=1 // pred_region
      %52 = vsyncadd [#allocation8], 0
      %s53 = sshll.u32 %s4, 4
      %s54 = int_to_ptr.hbm [resolvable:$true] %s53
      %s55 = sshll.u32 [#allocation9], 4
      %s56 = int_to_ptr.vmem [resolvable:$true] %s55
      %61 = dma.hbm_to_vmem [thread:$0]  %s54, 8192, %s56, [#allocation8], 256, 256, 16
    $region21: #{tpu_custom_call.1} parent=1 // pred_fallthru
      _
    // Predicated region
    $region22: #{tpu_custom_call.1} parent=1 // pred_check
      _
    $region23: #{tpu_custom_call.1} parent=1 // pred_check_branch
      %63 = sbr.rel (0) target = $region25
    $region24: #{tpu_custom_call.1} parent=1 // pred_region
      _
    $region25: #{tpu_custom_call.1} parent=1 // pred_fallthru
      _
    // Predicated region
    $region26: #{tpu_custom_call.1} parent=1 // pred_check
      _
    $region27: #{tpu_custom_call.1} parent=1 // pred_check_branch
      %65 = sbr.rel (0) target = $region29
    $region28: #{tpu_custom_call.1} parent=1 // pred_region
      %67 = vsyncadd [#allocation11], 0
      %s68 = sshll.u32 %s6, 4
      %s69 = int_to_ptr.hbm [resolvable:$true] %s68
      %s70 = sshll.u32 [#allocation10], 4
      %s71 = int_to_ptr.vmem [resolvable:$true] %s70
      %76 = dma.hbm_to_vmem [thread:$0]  %s69, 8192, %s71, [#allocation11], 256, 256, 16
    $region29: #{tpu_custom_call.1} parent=1 // pred_fallthru
      _
    // Predicated region
    $region30: #{tpu_custom_call.1} parent=1 // pred_check
      _
    $region31: #{tpu_custom_call.1} parent=1 // pred_check_branch
      %78 = sbr.rel (0) target = $region33
    $region32: #{tpu_custom_call.1} parent=1 // pred_region
      _
    $region33: #{tpu_custom_call.1} parent=1 // pred_fallthru
      _
    // Predicated region
    $region34: #{tpu_custom_call.1} parent=1 // pred_check
      _
    $region35: #{tpu_custom_call.1} parent=1 // pred_check_branch
      %80 = sbr.rel (0) target = $region37
    $region36: #{tpu_custom_call.1} parent=1 // pred_region
      %82 = vsyncadd [#allocation11], 0
      %s83 = sshll.u32 %s8, 4
      %s84 = int_to_ptr.hbm [resolvable:$true] %s83
      %s85 = sshll.u32 [#allocation12], 4
      %s86 = int_to_ptr.vmem [resolvable:$true] %s85
      %91 = dma.hbm_to_vmem [thread:$0]  %s84, 1024, %s86, [#allocation11], 64, 64, 4
    $region37: #{tpu_custom_call.1} parent=1 // pred_fallthru
      _
    // Predicated region
    $region38: #{tpu_custom_call.1} parent=1 // pred_check
      _
    $region39: #{tpu_custom_call.1} parent=1 // pred_check_branch
      %93 = sbr.rel (0) target = $region41
    $region40: #{tpu_custom_call.1} parent=1 // pred_region
      _
    $region41: #{tpu_custom_call.1} parent=1 // pred_fallthru
      _
    // Predicated region
    $region42: #{tpu_custom_call.1} parent=1 // pred_check
      _
    $region43: #{tpu_custom_call.1} parent=1 // pred_check_branch
      %95 = sbr.rel (0) target = $region45
    $region44: #{tpu_custom_call.1} parent=1 // pred_region
      %97 = dma.done [#allocation5], 1024
    $region45: #{tpu_custom_call.1} parent=1 // pred_fallthru
      _
    // Predicated region
    $region46: #{tpu_custom_call.1} parent=1 // pred_check
      _
    $region47: #{tpu_custom_call.1} parent=1 // pred_check_branch
      %99 = sbr.rel (0) target = $region49
    $region48: #{tpu_custom_call.1} parent=1 // pred_region
      %101 = dma.done [#allocation8], 4096
    $region49: #{tpu_custom_call.1} parent=1 // pred_fallthru
      _
    // Predicated region
    $region50: #{tpu_custom_call.1} parent=1 // pred_check
      _
    $region51: #{tpu_custom_call.1} parent=1 // pred_check_branch
      %103 = sbr.rel (0) target = $region53
    $region52: #{tpu_custom_call.1} parent=1 // pred_region
      %105 = dma.done [#allocation8], 8192
    $region53: #{tpu_custom_call.1} parent=1 // pred_fallthru
      _
    // Predicated region
    $region54: #{tpu_custom_call.1} parent=1 // pred_check
      _
    $region55: #{tpu_custom_call.1} parent=1 // pred_check_branch
      %107 = sbr.rel (0) target = $region57
    $region56: #{tpu_custom_call.1} parent=1 // pred_region
      %109 = dma.done [#allocation11], 8192
    $region57: #{tpu_custom_call.1} parent=1 // pred_fallthru
      _
    // Predicated region
    $region58: #{tpu_custom_call.1} parent=1 // pred_check
      _
    $region59: #{tpu_custom_call.1} parent=1 // pred_check_branch
      %111 = sbr.rel (0) target = $region61
    $region60: #{tpu_custom_call.1} parent=1 // pred_region
      %113 = dma.done [#allocation11], 1024
    $region61: #{tpu_custom_call.1} parent=1 // pred_fallthru
      _
    %v115 = vld [vmem:[%s0] sm:$0xf]
    %v116 = vld [vmem:[%s0 + $0x4] sm:$0xf]
    %v117 = vld [vmem:[%s0 + $0x8] sm:$0xf]
    %v118 = vld [vmem:[%s0 + $0xc] sm:$0xf]
    %v119 = vld [vmem:[%s0 + $0x10] sm:$0xf]
    %v120 = vld [vmem:[%s0 + $0x14] sm:$0xf]
    %v121 = vld [vmem:[%s0 + $0x18] sm:$0xf]
    %v122 = vld [vmem:[%s0 + $0x1c] sm:$0xf]
    %v123 = vld [vmem:[#allocation4] sm:$0xff]
    %v124 = vld [vmem:[#allocation4 + $0x8] sm:$0xff]
    %v125 = vld [vmem:[#allocation4 + $0x10] sm:$0xff]
    %v126 = vld [vmem:[#allocation4 + $0x18] sm:$0xff]
    %v127 = vld [vmem:[#allocation4 + $0x20] sm:$0xff]
    %v128 = vld [vmem:[#allocation4 + $0x28] sm:$0xff]
    %v129 = vld [vmem:[#allocation4 + $0x30] sm:$0x11]
    %v130 = vld [vmem:[#allocation4 + $0x38] sm:$0x11]
    %v131 = vld [vmem:[%s3] sm:$0xf]
    %v133 = vperm.slane %v131, 0
    %v134 = vperm.slane %v131, 1
    %v135 = vperm.slane %v131, 2
    %v136 = vperm.slane %v131, 3
    %v149 = vunpack.c.l.b16 %v115
    %v150 = vunpack.c.l.b16 %v116
    %v151 = vunpack.c.l.b16 %v117
    %v152 = vunpack.c.l.b16 %v118
    %v153 = vunpack.c.l.b16 %v119
    %v154 = vunpack.c.l.b16 %v120
    %v155 = vunpack.c.l.b16 %v121
    %v156 = vunpack.c.l.b16 %v122
    %v157 = vpack.c.b16 %v150, %v149
    %v158 = vpack.c.b16 %v152, %v151
    %v159 = vpack.c.b16 %v154, %v153
    %v160 = vpack.c.b16 %v156, %v155
    %v169 = vunpack.c.l.b16 %v123
    %v170 = vunpack.c.h.b16 %v123
    %v171 = vunpack.c.l.b16 %v124
    %v172 = vunpack.c.h.b16 %v124
    %v173 = vunpack.c.l.b16 %v125
    %v174 = vunpack.c.h.b16 %v125
    %v175 = vunpack.c.l.b16 %v126
    %v176 = vunpack.c.h.b16 %v126
    %v177 = vunpack.c.l.b16 %v127
    %v178 = vunpack.c.h.b16 %v127
    %v179 = vunpack.c.l.b16 %v128
    %v180 = vunpack.c.h.b16 %v128
    %v181 = vunpack.c.l.b16 %v129
    %v182 = vunpack.c.h.b16 %v129
    %v183 = vunpack.c.l.b16 %v130
    %v184 = vunpack.c.h.b16 %v130
    %v185 = vpack.c.b16 %v173, %v169
    %v186 = vpack.c.b16 %v174, %v170
    %v187 = vpack.c.b16 %v175, %v171
    %v188 = vpack.c.b16 %v176, %v172
    %v189 = vpack.c.b16 %v181, %v177
    %v190 = vpack.c.b16 %v182, %v178
    %v191 = vpack.c.b16 %v183, %v179
    %v192 = vpack.c.b16 %v184, %v180
    %vm197 = vcmask 211968
    %v199 = vsel %vm197, %v157, 0
    %v202 = vsel %vm197, %v158, 0
    %v205 = vsel %vm197, %v159, 0
    %v208 = vsel %vm197, %v160, 0
    %vm210 = vcmask 1044480
    %v212 = vsel %vm210, %v189, 0
    %v215 = vsel %vm210, %v190, 0
    %v218 = vsel %vm210, %v191, 0
    %v221 = vsel %vm210, %v192, 0
    %223 = vmatpush.bf16.msra.mxu0 0
    %224 = vmatpush.bf16.msra.mxu0 0
    %225 = vmatpush.bf16.msra.mxu0 0
    %226 = vmatpush.bf16.msra.mxu0 0
    %227 = vmatpush.bf16.msra.mxu0 0
    %228 = vmatpush.bf16.msra.mxu0 0
    %229 = vmatpush.bf16.msra.mxu0 %v212
    %230 = vmatpush.bf16.msra.mxu0 %v185
    %231 = vmatmul.bf16.gmra.mxu0 %v199
    %v232 = vpop.f32.mrf.mxu0
    %v233 = vadd.f32 %v133, %v232
    %v234 = vpop.f32.mrf.mxu0
    %v235 = vadd.f32 %v133, %v234
    %236 = vmatmul.bf16.gmra.mxu0 %v202
    %v237 = vpop.f32.mrf.mxu0
    %v238 = vadd.f32 %v133, %v237
    %v239 = vpop.f32.mrf.mxu0
    %v240 = vadd.f32 %v133, %v239
    %241 = vmatmul.bf16.gmra.mxu0 %v205
    %v242 = vpop.f32.mrf.mxu0
    %v243 = vadd.f32 %v133, %v242
    %v244 = vpop.f32.mrf.mxu0
    %v245 = vadd.f32 %v133, %v244
    %246 = vmatmul.bf16.gmra.mxu0 %v208
    %v247 = vpop.f32.mrf.mxu0
    %v248 = vadd.f32 %v133, %v247
    %v249 = vpop.f32.mrf.mxu0
    %v250 = vadd.f32 %v133, %v249
    %251 = vdwg.mxu0
    %252 = vmatpush.bf16.msra.mxu0 0
    %253 = vmatpush.bf16.msra.mxu0 0
    %254 = vmatpush.bf16.msra.mxu0 0
    %255 = vmatpush.bf16.msra.mxu0 0
    %256 = vmatpush.bf16.msra.mxu0 0
    %257 = vmatpush.bf16.msra.mxu0 0
    %258 = vmatpush.bf16.msra.mxu0 %v215
    %259 = vmatpush.bf16.msra.mxu0 %v186
    %260 = vmatmul.bf16.gmra.mxu0 %v199
    %v261 = vpop.f32.mrf.mxu0
    %v262 = vadd.f32 %v134, %v261
    %v263 = vpop.f32.mrf.mxu0
    %v264 = vadd.f32 %v134, %v263
    %265 = vmatmul.bf16.gmra.mxu0 %v202
    %v266 = vpop.f32.mrf.mxu0
    %v267 = vadd.f32 %v134, %v266
    %v268 = vpop.f32.mrf.mxu0
    %v269 = vadd.f32 %v134, %v268
    %270 = vmatmul.bf16.gmra.mxu0 %v205
    %v271 = vpop.f32.mrf.mxu0
    %v272 = vadd.f32 %v134, %v271
    %v273 = vpop.f32.mrf.mxu0
    %v274 = vadd.f32 %v134, %v273
    %275 = vmatmul.bf16.gmra.mxu0 %v208
    %v276 = vpop.f32.mrf.mxu0
    %v277 = vadd.f32 %v134, %v276
    %v278 = vpop.f32.mrf.mxu0
    %v279 = vadd.f32 %v134, %v278
    %280 = vdwg.mxu0
    %281 = vmatpush.bf16.msra.mxu0 0
    %282 = vmatpush.bf16.msra.mxu0 0
    %283 = vmatpush.bf16.msra.mxu0 0
    %284 = vmatpush.bf16.msra.mxu0 0
    %285 = vmatpush.bf16.msra.mxu0 0
    %286 = vmatpush.bf16.msra.mxu0 0
    %287 = vmatpush.bf16.msra.mxu0 %v218
    %288 = vmatpush.bf16.msra.mxu0 %v187
    %289 = vmatmul.bf16.gmra.mxu0 %v199
    %v290 = vpop.f32.mrf.mxu0
    %v291 = vadd.f32 %v135, %v290
    %v292 = vpop.f32.mrf.mxu0
    %v293 = vadd.f32 %v135, %v292
    %294 = vmatmul.bf16.gmra.mxu0 %v202
    %v295 = vpop.f32.mrf.mxu0
    %v296 = vadd.f32 %v135, %v295
    %v297 = vpop.f32.mrf.mxu0
    %v298 = vadd.f32 %v135, %v297
    %299 = vmatmul.bf16.gmra.mxu0 %v205
    %v300 = vpop.f32.mrf.mxu0
    %v301 = vadd.f32 %v135, %v300
    %v302 = vpop.f32.mrf.mxu0
    %v303 = vadd.f32 %v135, %v302
    %304 = vmatmul.bf16.gmra.mxu0 %v208
    %v305 = vpop.f32.mrf.mxu0
    %v306 = vadd.f32 %v135, %v305
    %v307 = vpop.f32.mrf.mxu0
    %v308 = vadd.f32 %v135, %v307
    %309 = vdwg.mxu0
    %310 = vmatpush.bf16.msra.mxu0 0
    %311 = vmatpush.bf16.msra.mxu0 0
    %312 = vmatpush.bf16.msra.mxu0 0
    %313 = vmatpush.bf16.msra.mxu0 0
    %314 = vmatpush.bf16.msra.mxu0 0
    %315 = vmatpush.bf16.msra.mxu0 0
    %316 = vmatpush.bf16.msra.mxu0 %v221
    %317 = vmatpush.bf16.msra.mxu0 %v188
    %318 = vmatmul.bf16.gmra.mxu0 %v199
    %v319 = vpop.f32.mrf.mxu0
    %v320 = vadd.f32 %v136, %v319
    %v321 = vpop.f32.mrf.mxu0
    %v322 = vadd.f32 %v136, %v321
    %323 = vmatmul.bf16.gmra.mxu0 %v202
    %v324 = vpop.f32.mrf.mxu0
    %v325 = vadd.f32 %v136, %v324
    %v326 = vpop.f32.mrf.mxu0
    %v327 = vadd.f32 %v136, %v326
    %328 = vmatmul.bf16.gmra.mxu0 %v205
    %v329 = vpop.f32.mrf.mxu0
    %v330 = vadd.f32 %v136, %v329
    %v331 = vpop.f32.mrf.mxu0
    %v332 = vadd.f32 %v136, %v331
    %333 = vmatmul.bf16.gmra.mxu0 %v208
    %v334 = vpop.f32.mrf.mxu0
    %v335 = vadd.f32 %v136, %v334
    %v336 = vpop.f32.mrf.mxu0
    %v337 = vadd.f32 %v136, %v336
    %338 = vdwg.mxu0
    %339 = vst [vmem:[#allocation2] sm:$0xff] %v233
    %340 = vst [vmem:[#allocation2 + $0x8] sm:$0xff] %v262
    %341 = vst [vmem:[#allocation2 + $0x10] sm:$0xff] %v291
    %342 = vst [vmem:[#allocation2 + $0x18] sm:$0xff] %v320
    %343 = vst [vmem:[#allocation2 + $0x20] sm:$0xff] %v235
    %344 = vst [vmem:[#allocation2 + $0x28] sm:$0xff] %v264
    %345 = vst [vmem:[#allocation2 + $0x30] sm:$0xff] %v293
    %346 = vst [vmem:[#allocation2 + $0x38] sm:$0xff] %v322
    %347 = vst [vmem:[#allocation2 + $0x40] sm:$0xff] %v238
    %348 = vst [vmem:[#allocation2 + $0x48] sm:$0xff] %v267
    %349 = vst [vmem:[#allocation2 + $0x50] sm:$0xff] %v296
    %350 = vst [vmem:[#allocation2 + $0x58] sm:$0xff] %v325
    %351 = vst [vmem:[#allocation2 + $0x60] sm:$0xff] %v240
    %352 = vst [vmem:[#allocation2 + $0x68] sm:$0xff] %v269
    %353 = vst [vmem:[#allocation2 + $0x70] sm:$0xff] %v298
    %354 = vst [vmem:[#allocation2 + $0x78] sm:$0xff] %v327
    %355 = vst [vmem:[#allocation2 + $0x80] sm:$0xff] %v243
    %356 = vst [vmem:[#allocation2 + $0x88] sm:$0xff] %v272
    %357 = vst [vmem:[#allocation2 + $0x90] sm:$0xff] %v301
    %358 = vst [vmem:[#allocation2 + $0x98] sm:$0xff] %v330
    %359 = vst [vmem:[#allocation2 + $0xa0] sm:$0xff] %v245
    %360 = vst [vmem:[#allocation2 + $0xa8] sm:$0xff] %v274
    %361 = vst [vmem:[#allocation2 + $0xb0] sm:$0xff] %v303
    %362 = vst [vmem:[#allocation2 + $0xb8] sm:$0xff] %v332
    %363 = vst [vmem:[#allocation2 + $0xc0] sm:$0xff] %v248
    %364 = vst [vmem:[#allocation2 + $0xc8] sm:$0xff] %v277
    %365 = vst [vmem:[#allocation2 + $0xd0] sm:$0xff] %v306
    %366 = vst [vmem:[#allocation2 + $0xd8] sm:$0xff] %v335
    %367 = vst [vmem:[#allocation2 + $0xe0] sm:$0xff] %v250
    %368 = vst [vmem:[#allocation2 + $0xe8] sm:$0xff] %v279
    %369 = vst [vmem:[#allocation2 + $0xf0] sm:$0xff] %v308
    %370 = vst [vmem:[#allocation2 + $0xf8] sm:$0xff] %v337
    %v371 = vld [vmem:[#allocation7] sm:$0xff]
    %v372 = vld [vmem:[#allocation7 + $0x8] sm:$0xff]
    %v373 = vld [vmem:[#allocation7 + $0x10] sm:$0xff]
    %v374 = vld [vmem:[#allocation7 + $0x18] sm:$0xff]
    %v375 = vld [vmem:[#allocation7 + $0x20] sm:$0xff]
    %v376 = vld [vmem:[#allocation7 + $0x28] sm:$0xff]
    %v377 = vld [vmem:[#allocation7 + $0x30] sm:$0xff]
    %v378 = vld [vmem:[#allocation7 + $0x38] sm:$0xff]
    %v379 = vld [vmem:[#allocation7 + $0x40] sm:$0xff]
    %v380 = vld [vmem:[#allocation7 + $0x48] sm:$0xff]
    %v381 = vld [vmem:[#allocation7 + $0x50] sm:$0xff]
    %v382 = vld [vmem:[#allocation7 + $0x58] sm:$0xff]
    %v383 = vld [vmem:[#allocation7 + $0x60] sm:$0xff]
    %v384 = vld [vmem:[#allocation7 + $0x68] sm:$0xff]
    %v385 = vld [vmem:[#allocation7 + $0x70] sm:$0xff]
    %v386 = vld [vmem:[#allocation7 + $0x78] sm:$0xff]
    %v387 = vld [vmem:[#allocation7 + $0x80] sm:$0xff]
    %v388 = vld [vmem:[#allocation7 + $0x88] sm:$0xff]
    %v389 = vld [vmem:[#allocation7 + $0x90] sm:$0xff]
    %v390 = vld [vmem:[#allocation7 + $0x98] sm:$0xff]
    %v391 = vld [vmem:[#allocation7 + $0xa0] sm:$0xff]
    %v392 = vld [vmem:[#allocation7 + $0xa8] sm:$0xff]
    %v393 = vld [vmem:[#allocation7 + $0xb0] sm:$0xff]
    %v394 = vld [vmem:[#allocation7 + $0xb8] sm:$0xff]
    %v395 = vld [vmem:[#allocation7 + $0xc0] sm:$0xff]
    %v396 = vld [vmem:[#allocation7 + $0xc8] sm:$0xff]
    %v397 = vld [vmem:[#allocation7 + $0xd0] sm:$0xff]
    %v398 = vld [vmem:[#allocation7 + $0xd8] sm:$0xff]
    %v399 = vld [vmem:[#allocation7 + $0xe0] sm:$0xff]
    %v400 = vld [vmem:[#allocation7 + $0xe8] sm:$0xff]
    %v401 = vld [vmem:[#allocation7 + $0xf0] sm:$0xff]
    %v402 = vld [vmem:[#allocation7 + $0xf8] sm:$0xff]
    %v403 = vld [vmem:[#allocation9] sm:$0xff]
    %v404 = vld [vmem:[#allocation9 + $0x8] sm:$0xff]
    %v405 = vld [vmem:[#allocation9 + $0x10] sm:$0xff]
    %v406 = vld [vmem:[#allocation9 + $0x18] sm:$0xff]
    %v407 = vld [vmem:[#allocation9 + $0x20] sm:$0xff]
    %v408 = vld [vmem:[#allocation9 + $0x28] sm:$0xff]
    %v409 = vld [vmem:[#allocation9 + $0x30] sm:$0xff]
    %v410 = vld [vmem:[#allocation9 + $0x38] sm:$0xff]
    %v411 = vld [vmem:[#allocation9 + $0x40] sm:$0xff]
    %v412 = vld [vmem:[#allocation9 + $0x48] sm:$0xff]
    %v413 = vld [vmem:[#allocation9 + $0x50] sm:$0xff]
    %v414 = vld [vmem:[#allocation9 + $0x58] sm:$0xff]
    %v415 = vld [vmem:[#allocation9 + $0x60] sm:$0xff]
    %v416 = vld [vmem:[#allocation9 + $0x68] sm:$0xff]
    %v417 = vld [vmem:[#allocation9 + $0x70] sm:$0xff]
    %v418 = vld [vmem:[#allocation9 + $0x78] sm:$0xff]
    %v419 = vld [vmem:[#allocation9 + $0x80] sm:$0xff]
    %v420 = vld [vmem:[#allocation9 + $0x88] sm:$0xff]
    %v421 = vld [vmem:[#allocation9 + $0x90] sm:$0xff]
    %v422 = vld [vmem:[#allocation9 + $0x98] sm:$0xff]
    %v423 = vld [vmem:[#allocation9 + $0xa0] sm:$0xff]
    %v424 = vld [vmem:[#allocation9 + $0xa8] sm:$0xff]
    %v425 = vld [vmem:[#allocation9 + $0xb0] sm:$0xff]
    %v426 = vld [vmem:[#allocation9 + $0xb8] sm:$0xff]
    %v427 = vld [vmem:[#allocation9 + $0xc0] sm:$0xff]
    %v428 = vld [vmem:[#allocation9 + $0xc8] sm:$0xff]
    %v429 = vld [vmem:[#allocation9 + $0xd0] sm:$0xff]
    %v430 = vld [vmem:[#allocation9 + $0xd8] sm:$0xff]
    %v431 = vld [vmem:[#allocation9 + $0xe0] sm:$0xff]
    %v432 = vld [vmem:[#allocation9 + $0xe8] sm:$0xff]
    %v433 = vld [vmem:[#allocation9 + $0xf0] sm:$0xff]
    %v434 = vld [vmem:[#allocation9 + $0xf8] sm:$0xff]
    %v435 = vld [vmem:[#allocation9 + $0x100] sm:$0xff]
    %v436 = vld [vmem:[#allocation9 + $0x108] sm:$0xff]
    %v437 = vld [vmem:[#allocation9 + $0x110] sm:$0xff]
    %v438 = vld [vmem:[#allocation9 + $0x118] sm:$0xff]
    %v439 = vld [vmem:[#allocation9 + $0x120] sm:$0xff]
    %v440 = vld [vmem:[#allocation9 + $0x128] sm:$0xff]
    %v441 = vld [vmem:[#allocation9 + $0x130] sm:$0xff]
    %v442 = vld [vmem:[#allocation9 + $0x138] sm:$0xff]
    %v443 = vld [vmem:[#allocation9 + $0x140] sm:$0xff]
    %v444 = vld [vmem:[#allocation9 + $0x148] sm:$0xff]
    %v445 = vld [vmem:[#allocation9 + $0x150] sm:$0xff]
    %v446 = vld [vmem:[#allocation9 + $0x158] sm:$0xff]
    %v447 = vld [vmem:[#allocation9 + $0x160] sm:$0xff]
    %v448 = vld [vmem:[#allocation9 + $0x168] sm:$0xff]
    %v449 = vld [vmem:[#allocation9 + $0x170] sm:$0xff]
    %v450 = vld [vmem:[#allocation9 + $0x178] sm:$0xff]
    %v451 = vld [vmem:[#allocation9 + $0x180] sm:$0xff]
    %v452 = vld [vmem:[#allocation9 + $0x188] sm:$0xff]
    %v453 = vld [vmem:[#allocation9 + $0x190] sm:$0xff]
    %v454 = vld [vmem:[#allocation9 + $0x198] sm:$0xff]
    %v455 = vld [vmem:[#allocation9 + $0x1a0] sm:$0xff]
    %v456 = vld [vmem:[#allocation9 + $0x1a8] sm:$0xff]
    %v457 = vld [vmem:[#allocation9 + $0x1b0] sm:$0xff]
    %v458 = vld [vmem:[#allocation9 + $0x1b8] sm:$0xff]
    %v459 = vld [vmem:[#allocation9 + $0x1c0] sm:$0xff]
    %v460 = vld [vmem:[#allocation9 + $0x1c8] sm:$0xff]
    %v461 = vld [vmem:[#allocation9 + $0x1d0] sm:$0xff]
    %v462 = vld [vmem:[#allocation9 + $0x1d8] sm:$0xff]
    %v463 = vld [vmem:[#allocation9 + $0x1e0] sm:$0xff]
    %v464 = vld [vmem:[#allocation9 + $0x1e8] sm:$0xff]
    %v465 = vld [vmem:[#allocation9 + $0x1f0] sm:$0xff]
    %v466 = vld [vmem:[#allocation9 + $0x1f8] sm:$0xff]
    %v467 = vld [vmem:[#allocation10] sm:$0xff]
    %v468 = vld [vmem:[#allocation10 + $0x8] sm:$0xff]
    %v469 = vld [vmem:[#allocation10 + $0x10] sm:$0xff]
    %v470 = vld [vmem:[#allocation10 + $0x18] sm:$0xff]
    %v471 = vld [vmem:[#allocation10 + $0x20] sm:$0xff]
    %v472 = vld [vmem:[#allocation10 + $0x28] sm:$0xff]
    %v473 = vld [vmem:[#allocation10 + $0x30] sm:$0xff]
    %v474 = vld [vmem:[#allocation10 + $0x38] sm:$0xff]
    %v475 = vld [vmem:[#allocation10 + $0x40] sm:$0xff]
    %v476 = vld [vmem:[#allocation10 + $0x48] sm:$0xff]
    %v477 = vld [vmem:[#allocation10 + $0x50] sm:$0xff]
    %v478 = vld [vmem:[#allocation10 + $0x58] sm:$0xff]
    %v479 = vld [vmem:[#allocation10 + $0x60] sm:$0xff]
    %v480 = vld [vmem:[#allocation10 + $0x68] sm:$0xff]
    %v481 = vld [vmem:[#allocation10 + $0x70] sm:$0xff]
    %v482 = vld [vmem:[#allocation10 + $0x78] sm:$0xff]
    %v483 = vld [vmem:[#allocation10 + $0x80] sm:$0xff]
    %v484 = vld [vmem:[#allocation10 + $0x88] sm:$0xff]
    %v485 = vld [vmem:[#allocation10 + $0x90] sm:$0xff]
    %v486 = vld [vmem:[#allocation10 + $0x98] sm:$0xff]
    %v487 = vld [vmem:[#allocation10 + $0xa0] sm:$0xff]
    %v488 = vld [vmem:[#allocation10 + $0xa8] sm:$0xff]
    %v489 = vld [vmem:[#allocation10 + $0xb0] sm:$0xff]
    %v490 = vld [vmem:[#allocation10 + $0xb8] sm:$0xff]
    %v491 = vld [vmem:[#allocation10 + $0xc0] sm:$0xff]
    %v492 = vld [vmem:[#allocation10 + $0xc8] sm:$0xff]
    %v493 = vld [vmem:[#allocation10 + $0xd0] sm:$0xff]
    %v494 = vld [vmem:[#allocation10 + $0xd8] sm:$0xff]
    %v495 = vld [vmem:[#allocation10 + $0xe0] sm:$0xff]
    %v496 = vld [vmem:[#allocation10 + $0xe8] sm:$0xff]
    %v497 = vld [vmem:[#allocation10 + $0xf0] sm:$0xff]
    %v498 = vld [vmem:[#allocation10 + $0xf8] sm:$0xff]
    %v499 = vld [vmem:[#allocation10 + $0x100] sm:$0xff]
    %v500 = vld [vmem:[#allocation10 + $0x108] sm:$0xff]
    %v501 = vld [vmem:[#allocation10 + $0x110] sm:$0xff]
    %v502 = vld [vmem:[#allocation10 + $0x118] sm:$0xff]
    %v503 = vld [vmem:[#allocation10 + $0x120] sm:$0xff]
    %v504 = vld [vmem:[#allocation10 + $0x128] sm:$0xff]
    %v505 = vld [vmem:[#allocation10 + $0x130] sm:$0xff]
    %v506 = vld [vmem:[#allocation10 + $0x138] sm:$0xff]
    %v507 = vld [vmem:[#allocation10 + $0x140] sm:$0xff]
    %v508 = vld [vmem:[#allocation10 + $0x148] sm:$0xff]
    %v509 = vld [vmem:[#allocation10 + $0x150] sm:$0xff]
    %v510 = vld [vmem:[#allocation10 + $0x158] sm:$0xff]
    %v511 = vld [vmem:[#allocation10 + $0x160] sm:$0xff]
    %v512 = vld [vmem:[#allocation10 + $0x168] sm:$0xff]
    %v513 = vld [vmem:[#allocation10 + $0x170] sm:$0xff]
    %v514 = vld [vmem:[#allocation10 + $0x178] sm:$0xff]
    %v515 = vld [vmem:[#allocation10 + $0x180] sm:$0xff]
    %v516 = vld [vmem:[#allocation10 + $0x188] sm:$0xff]
    %v517 = vld [vmem:[#allocation10 + $0x190] sm:$0xff]
    %v518 = vld [vmem:[#allocation10 + $0x198] sm:$0xff]
    %v519 = vld [vmem:[#allocation10 + $0x1a0] sm:$0xff]
    %v520 = vld [vmem:[#allocation10 + $0x1a8] sm:$0xff]
    %v521 = vld [vmem:[#allocation10 + $0x1b0] sm:$0xff]
    %v522 = vld [vmem:[#allocation10 + $0x1b8] sm:$0xff]
    %v523 = vld [vmem:[#allocation10 + $0x1c0] sm:$0xff]
    %v524 = vld [vmem:[#allocation10 + $0x1c8] sm:$0xff]
    %v525 = vld [vmem:[#allocation10 + $0x1d0] sm:$0xff]
    %v526 = vld [vmem:[#allocation10 + $0x1d8] sm:$0xff]
    %v527 = vld [vmem:[#allocation10 + $0x1e0] sm:$0xff]
    %v528 = vld [vmem:[#allocation10 + $0x1e8] sm:$0xff]
    %v529 = vld [vmem:[#allocation10 + $0x1f0] sm:$0xff]
    %v530 = vld [vmem:[#allocation10 + $0x1f8] sm:$0xff]
    %v531 = vld [vmem:[%s5] sm:$0xf]
    %v533 = vperm.slane %v531, 0
    %v534 = vperm.slane %v531, 1
    %v535 = vperm.slane %v531, 2
    %v536 = vperm.slane %v531, 3
    %v541 = vld [vmem:[%s7] sm:$0xf]
    %v543 = vperm.slane %v541, 0
    %v544 = vperm.slane %v541, 1
    %v545 = vperm.slane %v541, 2
    %v546 = vperm.slane %v541, 3
    %s551 = smul.u32 0, 4
    %s552 = smul.addr %s551, 8
    %s553 = scalar_lea.vmem [#allocation2], %s552
    %v554 = vld [vmem:[%s553] sm:$0xff]
    %v555 = vld [vmem:[%s553 + $0x8] sm:$0xff]
    %v556 = vld [vmem:[%s553 + $0x10] sm:$0xff]
    %v557 = vld [vmem:[%s553 + $0x18] sm:$0xff]
    %v590 = vunpack.c.l.b16 %v371
    %v591 = vunpack.c.h.b16 %v371
    %v592 = vunpack.c.l.b16 %v372
    %v593 = vunpack.c.h.b16 %v372
    %v594 = vunpack.c.l.b16 %v373
    %v595 = vunpack.c.h.b16 %v373
    %v596 = vunpack.c.l.b16 %v374
    %v597 = vunpack.c.h.b16 %v374
    %v598 = vunpack.c.l.b16 %v375
    %v599 = vunpack.c.h.b16 %v375
    %v600 = vunpack.c.l.b16 %v376
    %v601 = vunpack.c.h.b16 %v376
    %v602 = vunpack.c.l.b16 %v377
    %v603 = vunpack.c.h.b16 %v377
    %v604 = vunpack.c.l.b16 %v378
    %v605 = vunpack.c.h.b16 %v378
    %v606 = vunpack.c.l.b16 %v379
    %v607 = vunpack.c.h.b16 %v379
    %v608 = vunpack.c.l.b16 %v380
    %v609 = vunpack.c.h.b16 %v380
    %v610 = vunpack.c.l.b16 %v381
    %v611 = vunpack.c.h.b16 %v381
    %v612 = vunpack.c.l.b16 %v382
    %v613 = vunpack.c.h.b16 %v382
    %v614 = vunpack.c.l.b16 %v383
    %v615 = vunpack.c.h.b16 %v383
    %v616 = vunpack.c.l.b16 %v384
    %v617 = vunpack.c.h.b16 %v384
    %v618 = vunpack.c.l.b16 %v385
    %v619 = vunpack.c.h.b16 %v385
    %v620 = vunpack.c.l.b16 %v386
    %v621 = vunpack.c.h.b16 %v386
    %v622 = vunpack.c.l.b16 %v387
    %v623 = vunpack.c.h.b16 %v387
    %v624 = vunpack.c.l.b16 %v388
    %v625 = vunpack.c.h.b16 %v388
    %v626 = vunpack.c.l.b16 %v389
    %v627 = vunpack.c.h.b16 %v389
    %v628 = vunpack.c.l.b16 %v390
    %v629 = vunpack.c.h.b16 %v390
    %v630 = vunpack.c.l.b16 %v391
    %v631 = vunpack.c.h.b16 %v391
    %v632 = vunpack.c.l.b16 %v392
    %v633 = vunpack.c.h.b16 %v392
    %v634 = vunpack.c.l.b16 %v393
    %v635 = vunpack.c.h.b16 %v393
    %v636 = vunpack.c.l.b16 %v394
    %v637 = vunpack.c.h.b16 %v394
    %v638 = vunpack.c.l.b16 %v395
    %v639 = vunpack.c.h.b16 %v395
    %v640 = vunpack.c.l.b16 %v396
    %v641 = vunpack.c.h.b16 %v396
    %v642 = vunpack.c.l.b16 %v397
    %v643 = vunpack.c.h.b16 %v397
    %v644 = vunpack.c.l.b16 %v398
    %v645 = vunpack.c.h.b16 %v398
    %v646 = vunpack.c.l.b16 %v399
    %v647 = vunpack.c.h.b16 %v399
    %v648 = vunpack.c.l.b16 %v400
    %v649 = vunpack.c.h.b16 %v400
    %v650 = vunpack.c.l.b16 %v401
    %v651 = vunpack.c.h.b16 %v401
    %v652 = vunpack.c.l.b16 %v402
    %v653 = vunpack.c.h.b16 %v402
    %v654 = vpack.c.b16 %v594, %v590
    %v655 = vpack.c.b16 %v595, %v591
    %v656 = vpack.c.b16 %v596, %v592
    %v657 = vpack.c.b16 %v597, %v593
    %v658 = vpack.c.b16 %v602, %v598
    %v659 = vpack.c.b16 %v603, %v599
    %v660 = vpack.c.b16 %v604, %v600
    %v661 = vpack.c.b16 %v605, %v601
    %v662 = vpack.c.b16 %v610, %v606
    %v663 = vpack.c.b16 %v611, %v607
    %v664 = vpack.c.b16 %v612, %v608
    %v665 = vpack.c.b16 %v613, %v609
    %v666 = vpack.c.b16 %v618, %v614
    %v667 = vpack.c.b16 %v619, %v615
    %v668 = vpack.c.b16 %v620, %v616
    %v669 = vpack.c.b16 %v621, %v617
    %v670 = vpack.c.b16 %v626, %v622
    %v671 = vpack.c.b16 %v627, %v623
    %v672 = vpack.c.b16 %v628, %v624
    %v673 = vpack.c.b16 %v629, %v625
    %v674 = vpack.c.b16 %v634, %v630
    %v675 = vpack.c.b16 %v635, %v631
    %v676 = vpack.c.b16 %v636, %v632
    %v677 = vpack.c.b16 %v637, %v633
    %v678 = vpack.c.b16 %v642, %v638
    %v679 = vpack.c.b16 %v643, %v639
    %v680 = vpack.c.b16 %v644, %v640
    %v681 = vpack.c.b16 %v645, %v641
    %v682 = vpack.c.b16 %v650, %v646
    %v683 = vpack.c.b16 %v651, %v647
    %v684 = vpack.c.b16 %v652, %v648
    %v685 = vpack.c.b16 %v653, %v649
    %718 = vmatpush.bf16.msra.mxu0 %v682
    %719 = vmatpush.bf16.msra.mxu0 %v678
    %720 = vmatpush.bf16.msra.mxu0 %v674
    %721 = vmatpush.bf16.msra.mxu0 %v670
    %722 = vmatpush.bf16.msra.mxu0 %v666
    %723 = vmatpush.bf16.msra.mxu0 %v662
    %724 = vmatpush.bf16.msra.mxu0 %v658
    %725 = vmatpush.bf16.msra.mxu0 %v654
    %726 = vmatmul.bf16.gmra.mxu0 0
    %v727 = vpop.f32.mrf.mxu0
    %v728 = vadd.f32 0.0, %v727
    %v729 = vpop.f32.mrf.mxu0
    %730 = vdwg.mxu0
    %731 = vmatpush.bf16.msra.mxu0 %v683
    %732 = vmatpush.bf16.msra.mxu0 %v679
    %733 = vmatpush.bf16.msra.mxu0 %v675
    %734 = vmatpush.bf16.msra.mxu0 %v671
    %735 = vmatpush.bf16.msra.mxu0 %v667
    %736 = vmatpush.bf16.msra.mxu0 %v663
    %737 = vmatpush.bf16.msra.mxu0 %v659
    %738 = vmatpush.bf16.msra.mxu0 %v655
    %739 = vmatmul.bf16.gmra.mxu0 0
    %v740 = vpop.f32.mrf.mxu0
    %v741 = vadd.f32 0.0, %v740
    %v742 = vpop.f32.mrf.mxu0
    %743 = vdwg.mxu0
    %744 = vmatpush.bf16.msra.mxu0 %v684
    %745 = vmatpush.bf16.msra.mxu0 %v680
    %746 = vmatpush.bf16.msra.mxu0 %v676
    %747 = vmatpush.bf16.msra.mxu0 %v672
    %748 = vmatpush.bf16.msra.mxu0 %v668
    %749 = vmatpush.bf16.msra.mxu0 %v664
    %750 = vmatpush.bf16.msra.mxu0 %v660
    %751 = vmatpush.bf16.msra.mxu0 %v656
    %752 = vmatmul.bf16.gmra.mxu0 0
    %v753 = vpop.f32.mrf.mxu0
    %v754 = vadd.f32 0.0, %v753
    %v755 = vpop.f32.mrf.mxu0
    %756 = vdwg.mxu0
    %757 = vmatpush.bf16.msra.mxu0 %v685
    %758 = vmatpush.bf16.msra.mxu0 %v681
    %759 = vmatpush.bf16.msra.mxu0 %v677
    %760 = vmatpush.bf16.msra.mxu0 %v673
    %761 = vmatpush.bf16.msra.mxu0 %v669
    %762 = vmatpush.bf16.msra.mxu0 %v665
    %763 = vmatpush.bf16.msra.mxu0 %v661
    %764 = vmatpush.bf16.msra.mxu0 %v657
    %765 = vmatmul.bf16.gmra.mxu0 0
    %v766 = vpop.f32.mrf.mxu0
    %v767 = vadd.f32 0.0, %v766
    %v768 = vpop.f32.mrf.mxu0
    %769 = vdwg.mxu0
    %v770 = vadd.f32 %v554, %v728
    %v771 = vadd.f32 %v555, %v741
    %v772 = vadd.f32 %v556, %v754
    %v773 = vadd.f32 %v557, %v767
    %v774 = vxor.u32 %v770, 2147483648
    %v775 = vmul.f32 %v774, 1.442695
    %v776 = vpow.pop %v775
    %v777 = vadd.f32 %v776, 1.0
    %v778 = vrcp.pop %v777
    %v779 = vmul.f32 %v777, %v778
    %v780 = vsub.f32 1.0, %v779
    %v781 = vmul.f32 %v778, %v780
    %v782 = vadd.f32 %v778, %v781
    %vm783 = vweird.f32 %v777
    %vm784 = vweird.f32 %v778
    %vm785 = vmor %vm783, %vm784
    %v786 = vsel %vm785, %v778, %v782
    %v787 = vand.u32 2147483647, %v777
    %vm788 = vcmp.eq.f32.partialorder %v787, 8.507059e+37
    %v789 = vand.u32 %v777, 2147483648
    %v790 = vor.u32 1.1754944e-38, %v789
    %v791 = vsel %vm788, %v790, %v786
    %v792 = vmul.f32 1.0, %v791
    %v793 = vxor.u32 %v771, 2147483648
    %v794 = vmul.f32 %v793, 1.442695
    %v795 = vpow.pop %v794
    %v796 = vadd.f32 %v795, 1.0
    %v797 = vrcp.pop %v796
    %v798 = vmul.f32 %v796, %v797
    %v799 = vsub.f32 1.0, %v798
    %v800 = vmul.f32 %v797, %v799
    %v801 = vadd.f32 %v797, %v800
    %vm802 = vweird.f32 %v796
    %vm803 = vweird.f32 %v797
    %vm804 = vmor %vm802, %vm803
    %v805 = vsel %vm804, %v797, %v801
    %v806 = vand.u32 2147483647, %v796
    %vm807 = vcmp.eq.f32.partialorder %v806, 8.507059e+37
    %v808 = vand.u32 %v796, 2147483648
    %v809 = vor.u32 1.1754944e-38, %v808
    %v810 = vsel %vm807, %v809, %v805
    %v811 = vmul.f32 1.0, %v810
    %v812 = vtanh.pop %v772
    %v813 = vxor.u32 %v773, 2147483648
    %v814 = vmul.f32 %v813, 1.442695
    %v815 = vpow.pop %v814
    %v816 = vadd.f32 %v815, 1.0
    %v817 = vrcp.pop %v816
    %v818 = vmul.f32 %v816, %v817
    %v819 = vsub.f32 1.0, %v818
    %v820 = vmul.f32 %v817, %v819
    %v821 = vadd.f32 %v817, %v820
    %vm822 = vweird.f32 %v816
    %vm823 = vweird.f32 %v817
    %vm824 = vmor %vm822, %vm823
    %v825 = vsel %vm824, %v817, %v821
    %v826 = vand.u32 2147483647, %v816
    %vm827 = vcmp.eq.f32.partialorder %v826, 8.507059e+37
    %v828 = vand.u32 %v816, 2147483648
    %v829 = vor.u32 1.1754944e-38, %v828
    %v830 = vsel %vm827, %v829, %v825
    %v831 = vmul.f32 1.0, %v830
    %v832 = vmul.f32 %v811, 0.0
    %v833 = vmul.f32 %v792, %v812
    %v834 = vadd.f32 %v832, %v833
    %v835 = vtanh.pop %v834
    %v836 = vmul.f32 %v831, %v835
    %v837 = vpack.c.bf16 %v836, %v836
    %v838 = vpack.c.bf16 0.0, 0.0
    %v903 = vunpack.c.l.b16 %v403
    %v904 = vunpack.c.h.b16 %v403
    %v905 = vunpack.c.l.b16 %v404
    %v906 = vunpack.c.h.b16 %v404
    %v907 = vunpack.c.l.b16 %v405
    %v908 = vunpack.c.h.b16 %v405
    %v909 = vunpack.c.l.b16 %v406
    %v910 = vunpack.c.h.b16 %v406
    %v911 = vunpack.c.l.b16 %v407
    %v912 = vunpack.c.h.b16 %v407
    %v913 = vunpack.c.l.b16 %v408
    %v914 = vunpack.c.h.b16 %v408
    %v915 = vunpack.c.l.b16 %v409
    %v916 = vunpack.c.h.b16 %v409
    %v917 = vunpack.c.l.b16 %v410
    %v918 = vunpack.c.h.b16 %v410
    %v919 = vunpack.c.l.b16 %v411
    %v920 = vunpack.c.h.b16 %v411
    %v921 = vunpack.c.l.b16 %v412
    %v922 = vunpack.c.h.b16 %v412
    %v923 = vunpack.c.l.b16 %v413
    %v924 = vunpack.c.h.b16 %v413
    %v925 = vunpack.c.l.b16 %v414
    %v926 = vunpack.c.h.b16 %v414
    %v927 = vunpack.c.l.b16 %v415
    %v928 = vunpack.c.h.b16 %v415
    %v929 = vunpack.c.l.b16 %v416
    %v930 = vunpack.c.h.b16 %v416
    %v931 = vunpack.c.l.b16 %v417
    %v932 = vunpack.c.h.b16 %v417
    %v933 = vunpack.c.l.b16 %v418
    %v934 = vunpack.c.h.b16 %v418
    %v935 = vunpack.c.l.b16 %v419
    %v936 = vunpack.c.h.b16 %v419
    %v937 = vunpack.c.l.b16 %v420
    %v938 = vunpack.c.h.b16 %v420
    %v939 = vunpack.c.l.b16 %v421
    %v940 = vunpack.c.h.b16 %v421
    %v941 = vunpack.c.l.b16 %v422
    %v942 = vunpack.c.h.b16 %v422
    %v943 = vunpack.c.l.b16 %v423
    %v944 = vunpack.c.h.b16 %v423
    %v945 = vunpack.c.l.b16 %v424
    %v946 = vunpack.c.h.b16 %v424
    %v947 = vunpack.c.l.b16 %v425
    %v948 = vunpack.c.h.b16 %v425
    %v949 = vunpack.c.l.b16 %v426
    %v950 = vunpack.c.h.b16 %v426
    %v951 = vunpack.c.l.b16 %v427
    %v952 = vunpack.c.h.b16 %v427
    %v953 = vunpack.c.l.b16 %v428
    %v954 = vunpack.c.h.b16 %v428
    %v955 = vunpack.c.l.b16 %v429
    %v956 = vunpack.c.h.b16 %v429
    %v957 = vunpack.c.l.b16 %v430
    %v958 = vunpack.c.h.b16 %v430
    %v959 = vunpack.c.l.b16 %v431
    %v960 = vunpack.c.h.b16 %v431
    %v961 = vunpack.c.l.b16 %v432
    %v962 = vunpack.c.h.b16 %v432
    %v963 = vunpack.c.l.b16 %v433
    %v964 = vunpack.c.h.b16 %v433
    %v965 = vunpack.c.l.b16 %v434
    %v966 = vunpack.c.h.b16 %v434
    %v967 = vunpack.c.l.b16 %v435
    %v968 = vunpack.c.h.b16 %v435
    %v969 = vunpack.c.l.b16 %v436
    %v970 = vunpack.c.h.b16 %v436
    %v971 = vunpack.c.l.b16 %v437
    %v972 = vunpack.c.h.b16 %v437
    %v973 = vunpack.c.l.b16 %v438
    %v974 = vunpack.c.h.b16 %v438
    %v975 = vunpack.c.l.b16 %v439
    %v976 = vunpack.c.h.b16 %v439
    %v977 = vunpack.c.l.b16 %v440
    %v978 = vunpack.c.h.b16 %v440
    %v979 = vunpack.c.l.b16 %v441
    %v980 = vunpack.c.h.b16 %v441
    %v981 = vunpack.c.l.b16 %v442
    %v982 = vunpack.c.h.b16 %v442
    %v983 = vunpack.c.l.b16 %v443
    %v984 = vunpack.c.h.b16 %v443
    %v985 = vunpack.c.l.b16 %v444
    %v986 = vunpack.c.h.b16 %v444
    %v987 = vunpack.c.l.b16 %v445
    %v988 = vunpack.c.h.b16 %v445
    %v989 = vunpack.c.l.b16 %v446
    %v990 = vunpack.c.h.b16 %v446
    %v991 = vunpack.c.l.b16 %v447
    %v992 = vunpack.c.h.b16 %v447
    %v993 = vunpack.c.l.b16 %v448
    %v994 = vunpack.c.h.b16 %v448
    %v995 = vunpack.c.l.b16 %v449
    %v996 = vunpack.c.h.b16 %v449
    %v997 = vunpack.c.l.b16 %v450
    %v998 = vunpack.c.h.b16 %v450
    %v999 = vunpack.c.l.b16 %v451
    %v1000 = vunpack.c.h.b16 %v451
    %v1001 = vunpack.c.l.b16 %v452
    %v1002 = vunpack.c.h.b16 %v452
    %v1003 = vunpack.c.l.b16 %v453
    %v1004 = vunpack.c.h.b16 %v453
    %v1005 = vunpack.c.l.b16 %v454
    %v1006 = vunpack.c.h.b16 %v454
    %v1007 = vunpack.c.l.b16 %v455
    %v1008 = vunpack.c.h.b16 %v455
    %v1009 = vunpack.c.l.b16 %v456
    %v1010 = vunpack.c.h.b16 %v456
    %v1011 = vunpack.c.l.b16 %v457
    %v1012 = vunpack.c.h.b16 %v457
    %v1013 = vunpack.c.l.b16 %v458
    %v1014 = vunpack.c.h.b16 %v458
    %v1015 = vunpack.c.l.b16 %v459
    %v1016 = vunpack.c.h.b16 %v459
    %v1017 = vunpack.c.l.b16 %v460
    %v1018 = vunpack.c.h.b16 %v460
    %v1019 = vunpack.c.l.b16 %v461
    %v1020 = vunpack.c.h.b16 %v461
    %v1021 = vunpack.c.l.b16 %v462
    %v1022 = vunpack.c.h.b16 %v462
    %v1023 = vunpack.c.l.b16 %v463
    %v1024 = vunpack.c.h.b16 %v463
    %v1025 = vunpack.c.l.b16 %v464
    %v1026 = vunpack.c.h.b16 %v464
    %v1027 = vunpack.c.l.b16 %v465
    %v1028 = vunpack.c.h.b16 %v465
    %v1029 = vunpack.c.l.b16 %v466
    %v1030 = vunpack.c.h.b16 %v466
    %v1031 = vpack.c.b16 %v907, %v903
    %v1032 = vpack.c.b16 %v908, %v904
    %v1033 = vpack.c.b16 %v909, %v905
    %v1034 = vpack.c.b16 %v910, %v906
    %v1035 = vpack.c.b16 %v915, %v911
    %v1036 = vpack.c.b16 %v916, %v912
    %v1037 = vpack.c.b16 %v917, %v913
    %v1038 = vpack.c.b16 %v918, %v914
    %v1039 = vpack.c.b16 %v923, %v919
    %v1040 = vpack.c.b16 %v924, %v920
    %v1041 = vpack.c.b16 %v925, %v921
    %v1042 = vpack.c.b16 %v926, %v922
    %v1043 = vpack.c.b16 %v931, %v927
    %v1044 = vpack.c.b16 %v932, %v928
    %v1045 = vpack.c.b16 %v933, %v929
    %v1046 = vpack.c.b16 %v934, %v930
    %v1047 = vpack.c.b16 %v939, %v935
    %v1048 = vpack.c.b16 %v940, %v936
    %v1049 = vpack.c.b16 %v941, %v937
    %v1050 = vpack.c.b16 %v942, %v938
    %v1051 = vpack.c.b16 %v947, %v943
    %v1052 = vpack.c.b16 %v948, %v944
    %v1053 = vpack.c.b16 %v949, %v945
    %v1054 = vpack.c.b16 %v950, %v946
    %v1055 = vpack.c.b16 %v955, %v951
    %v1056 = vpack.c.b16 %v956, %v952
    %v1057 = vpack.c.b16 %v957, %v953
    %v1058 = vpack.c.b16 %v958, %v954
    %v1059 = vpack.c.b16 %v963, %v959
    %v1060 = vpack.c.b16 %v964, %v960
    %v1061 = vpack.c.b16 %v965, %v961
    %v1062 = vpack.c.b16 %v966, %v962
    %v1063 = vpack.c.b16 %v971, %v967
    %v1064 = vpack.c.b16 %v972, %v968
    %v1065 = vpack.c.b16 %v973, %v969
    %v1066 = vpack.c.b16 %v974, %v970
    %v1067 = vpack.c.b16 %v979, %v975
    %v1068 = vpack.c.b16 %v980, %v976
    %v1069 = vpack.c.b16 %v981, %v977
    %v1070 = vpack.c.b16 %v982, %v978
    %v1071 = vpack.c.b16 %v987, %v983
    %v1072 = vpack.c.b16 %v988, %v984
    %v1073 = vpack.c.b16 %v989, %v985
    %v1074 = vpack.c.b16 %v990, %v986
    %v1075 = vpack.c.b16 %v995, %v991
    %v1076 = vpack.c.b16 %v996, %v992
    %v1077 = vpack.c.b16 %v997, %v993
    %v1078 = vpack.c.b16 %v998, %v994
    %v1079 = vpack.c.b16 %v1003, %v999
    %v1080 = vpack.c.b16 %v1004, %v1000
    %v1081 = vpack.c.b16 %v1005, %v1001
    %v1082 = vpack.c.b16 %v1006, %v1002
    %v1083 = vpack.c.b16 %v1011, %v1007
    %v1084 = vpack.c.b16 %v1012, %v1008
    %v1085 = vpack.c.b16 %v1013, %v1009
    %v1086 = vpack.c.b16 %v1014, %v1010
    %v1087 = vpack.c.b16 %v1019, %v1015
    %v1088 = vpack.c.b16 %v1020, %v1016
    %v1089 = vpack.c.b16 %v1021, %v1017
    %v1090 = vpack.c.b16 %v1022, %v1018
    %v1091 = vpack.c.b16 %v1027, %v1023
    %v1092 = vpack.c.b16 %v1028, %v1024
    %v1093 = vpack.c.b16 %v1029, %v1025
    %v1094 = vpack.c.b16 %v1030, %v1026
    %1159 = vmatpush.bf16.msra.mxu0 %v1059
    %1160 = vmatpush.bf16.msra.mxu0 %v1055
    %1161 = vmatpush.bf16.msra.mxu0 %v1051
    %1162 = vmatpush.bf16.msra.mxu0 %v1047
    %1163 = vmatpush.bf16.msra.mxu0 %v1043
    %1164 = vmatpush.bf16.msra.mxu0 %v1039
    %1165 = vmatpush.bf16.msra.mxu0 %v1035
    %1166 = vmatpush.bf16.msra.mxu0 %v1031
    %1167 = vmatmul.bf16.gmra.mxu0 %v837
    %v1168 = vpop.f32.mrf.mxu0
    %v1169 = vadd.f32 %v533, %v1168
    %v1170 = vpop.f32.mrf.mxu0
    %1171 = vdwg.mxu0
    %1172 = vmatpush.bf16.msra.mxu0 %v1091
    %1173 = vmatpush.bf16.msra.mxu0 %v1087
    %1174 = vmatpush.bf16.msra.mxu0 %v1083
    %1175 = vmatpush.bf16.msra.mxu0 %v1079
    %1176 = vmatpush.bf16.msra.mxu0 %v1075
    %1177 = vmatpush.bf16.msra.mxu0 %v1071
    %1178 = vmatpush.bf16.msra.mxu0 %v1067
    %1179 = vmatpush.bf16.msra.mxu0 %v1063
    %1180 = vmatmul.bf16.gmra.mxu0 %v838
    %v1181 = vpop.f32.mrf.mxu0
    %v1182 = vadd.f32 %v1169, %v1181
    %v1183 = vpop.f32.mrf.mxu0
    %1184 = vdwg.mxu0
    %1185 = vmatpush.bf16.msra.mxu0 %v1060
    %1186 = vmatpush.bf16.msra.mxu0 %v1056
    %1187 = vmatpush.bf16.msra.mxu0 %v1052
    %1188 = vmatpush.bf16.msra.mxu0 %v1048
    %1189 = vmatpush.bf16.msra.mxu0 %v1044
    %1190 = vmatpush.bf16.msra.mxu0 %v1040
    %1191 = vmatpush.bf16.msra.mxu0 %v1036
    %1192 = vmatpush.bf16.msra.mxu0 %v1032
    %1193 = vmatmul.bf16.gmra.mxu0 %v837
    %v1194 = vpop.f32.mrf.mxu0
    %v1195 = vadd.f32 %v534, %v1194
    %v1196 = vpop.f32.mrf.mxu0
    %1197 = vdwg.mxu0
    %1198 = vmatpush.bf16.msra.mxu0 %v1092
    %1199 = vmatpush.bf16.msra.mxu0 %v1088
    %1200 = vmatpush.bf16.msra.mxu0 %v1084
    %1201 = vmatpush.bf16.msra.mxu0 %v1080
    %1202 = vmatpush.bf16.msra.mxu0 %v1076
    %1203 = vmatpush.bf16.msra.mxu0 %v1072
    %1204 = vmatpush.bf16.msra.mxu0 %v1068
    %1205 = vmatpush.bf16.msra.mxu0 %v1064
    %1206 = vmatmul.bf16.gmra.mxu0 %v838
    %v1207 = vpop.f32.mrf.mxu0
    %v1208 = vadd.f32 %v1195, %v1207
    %v1209 = vpop.f32.mrf.mxu0
    %1210 = vdwg.mxu0
    %1211 = vmatpush.bf16.msra.mxu0 %v1061
    %1212 = vmatpush.bf16.msra.mxu0 %v1057
    %1213 = vmatpush.bf16.msra.mxu0 %v1053
    %1214 = vmatpush.bf16.msra.mxu0 %v1049
    %1215 = vmatpush.bf16.msra.mxu0 %v1045
    %1216 = vmatpush.bf16.msra.mxu0 %v1041
    %1217 = vmatpush.bf16.msra.mxu0 %v1037
    %1218 = vmatpush.bf16.msra.mxu0 %v1033
    %1219 = vmatmul.bf16.gmra.mxu0 %v837
    %v1220 = vpop.f32.mrf.mxu0
    %v1221 = vadd.f32 %v535, %v1220
    %v1222 = vpop.f32.mrf.mxu0
    %1223 = vdwg.mxu0
    %1224 = vmatpush.bf16.msra.mxu0 %v1093
    %1225 = vmatpush.bf16.msra.mxu0 %v1089
    %1226 = vmatpush.bf16.msra.mxu0 %v1085
    %1227 = vmatpush.bf16.msra.mxu0 %v1081
    %1228 = vmatpush.bf16.msra.mxu0 %v1077
    %1229 = vmatpush.bf16.msra.mxu0 %v1073
    %1230 = vmatpush.bf16.msra.mxu0 %v1069
    %1231 = vmatpush.bf16.msra.mxu0 %v1065
    %1232 = vmatmul.bf16.gmra.mxu0 %v838
    %v1233 = vpop.f32.mrf.mxu0
    %v1234 = vadd.f32 %v1221, %v1233
    %v1235 = vpop.f32.mrf.mxu0
    %1236 = vdwg.mxu0
    %1237 = vmatpush.bf16.msra.mxu0 %v1062
    %1238 = vmatpush.bf16.msra.mxu0 %v1058
    %1239 = vmatpush.bf16.msra.mxu0 %v1054
    %1240 = vmatpush.bf16.msra.mxu0 %v1050
    %1241 = vmatpush.bf16.msra.mxu0 %v1046
    %1242 = vmatpush.bf16.msra.mxu0 %v1042
    %1243 = vmatpush.bf16.msra.mxu0 %v1038
    %1244 = vmatpush.bf16.msra.mxu0 %v1034
    %1245 = vmatmul.bf16.gmra.mxu0 %v837
    %v1246 = vpop.f32.mrf.mxu0
    %v1247 = vadd.f32 %v536, %v1246
    %v1248 = vpop.f32.mrf.mxu0
    %1249 = vdwg.mxu0
    %1250 = vmatpush.bf16.msra.mxu0 %v1094
    %1251 = vmatpush.bf16.msra.mxu0 %v1090
    %1252 = vmatpush.bf16.msra.mxu0 %v1086
    %1253 = vmatpush.bf16.msra.mxu0 %v1082
    %1254 = vmatpush.bf16.msra.mxu0 %v1078
    %1255 = vmatpush.bf16.msra.mxu0 %v1074
    %1256 = vmatpush.bf16.msra.mxu0 %v1070
    %1257 = vmatpush.bf16.msra.mxu0 %v1066
    %1258 = vmatmul.bf16.gmra.mxu0 %v838
    %v1259 = vpop.f32.mrf.mxu0
    %v1260 = vadd.f32 %v1247, %v1259
    %v1261 = vpop.f32.mrf.mxu0
    %1262 = vdwg.mxu0
    %v1263 = vxor.u32 %v1182, 2147483648
    %v1264 = vmul.f32 %v1263, 1.442695
    %v1265 = vpow.pop %v1264
    %v1266 = vadd.f32 %v1265, 1.0
    %v1267 = vrcp.pop %v1266
    %v1268 = vmul.f32 %v1266, %v1267
    %v1269 = vsub.f32 1.0, %v1268
    %v1270 = vmul.f32 %v1267, %v1269
    %v1271 = vadd.f32 %v1267, %v1270
    %vm1272 = vweird.f32 %v1266
    %vm1273 = vweird.f32 %v1267
    %vm1274 = vmor %vm1272, %vm1273
    %v1275 = vsel %vm1274, %v1267, %v1271
    %v1276 = vand.u32 2147483647, %v1266
    %vm1277 = vcmp.eq.f32.partialorder %v1276, 8.507059e+37
    %v1278 = vand.u32 %v1266, 2147483648
    %v1279 = vor.u32 1.1754944e-38, %v1278
    %v1280 = vsel %vm1277, %v1279, %v1275
    %v1281 = vmul.f32 1.0, %v1280
    %v1282 = vxor.u32 %v1208, 2147483648
    %v1283 = vmul.f32 %v1282, 1.442695
    %v1284 = vpow.pop %v1283
    %v1285 = vadd.f32 %v1284, 1.0
    %v1286 = vrcp.pop %v1285
    %v1287 = vmul.f32 %v1285, %v1286
    %v1288 = vsub.f32 1.0, %v1287
    %v1289 = vmul.f32 %v1286, %v1288
    %v1290 = vadd.f32 %v1286, %v1289
    %vm1291 = vweird.f32 %v1285
    %vm1292 = vweird.f32 %v1286
    %vm1293 = vmor %vm1291, %vm1292
    %v1294 = vsel %vm1293, %v1286, %v1290
    %v1295 = vand.u32 2147483647, %v1285
    %vm1296 = vcmp.eq.f32.partialorder %v1295, 8.507059e+37
    %v1297 = vand.u32 %v1285, 2147483648
    %v1298 = vor.u32 1.1754944e-38, %v1297
    %v1299 = vsel %vm1296, %v1298, %v1294
    %v1300 = vmul.f32 1.0, %v1299
    %v1301 = vtanh.pop %v1234
    %v1302 = vxor.u32 %v1260, 2147483648
    %v1303 = vmul.f32 %v1302, 1.442695
    %v1304 = vpow.pop %v1303
    %v1305 = vadd.f32 %v1304, 1.0
    %v1306 = vrcp.pop %v1305
    %v1307 = vmul.f32 %v1305, %v1306
    %v1308 = vsub.f32 1.0, %v1307
    %v1309 = vmul.f32 %v1306, %v1308
    %v1310 = vadd.f32 %v1306, %v1309
    %vm1311 = vweird.f32 %v1305
    %vm1312 = vweird.f32 %v1306
    %vm1313 = vmor %vm1311, %vm1312
    %v1314 = vsel %vm1313, %v1306, %v1310
    %v1315 = vand.u32 2147483647, %v1305
    %vm1316 = vcmp.eq.f32.partialorder %v1315, 8.507059e+37
    %v1317 = vand.u32 %v1305, 2147483648
    %v1318 = vor.u32 1.1754944e-38, %v1317
    %v1319 = vsel %vm1316, %v1318, %v1314
    %v1320 = vmul.f32 1.0, %v1319
    %v1321 = vmul.f32 %v1300, 0.0
    %v1322 = vmul.f32 %v1281, %v1301
    %v1323 = vadd.f32 %v1321, %v1322
    %v1324 = vtanh.pop %v1323
    %v1325 = vmul.f32 %v1320, %v1324
    %v1326 = vpack.c.bf16 %v1325, %v1325
    %v1391 = vunpack.c.l.b16 %v467
    %v1392 = vunpack.c.h.b16 %v467
    %v1393 = vunpack.c.l.b16 %v468
    %v1394 = vunpack.c.h.b16 %v468
    %v1395 = vunpack.c.l.b16 %v469
    %v1396 = vunpack.c.h.b16 %v469
    %v1397 = vunpack.c.l.b16 %v470
    %v1398 = vunpack.c.h.b16 %v470
    %v1399 = vunpack.c.l.b16 %v471
    %v1400 = vunpack.c.h.b16 %v471
    %v1401 = vunpack.c.l.b16 %v472
    %v1402 = vunpack.c.h.b16 %v472
    %v1403 = vunpack.c.l.b16 %v473
    %v1404 = vunpack.c.h.b16 %v473
    %v1405 = vunpack.c.l.b16 %v474
    %v1406 = vunpack.c.h.b16 %v474
    %v1407 = vunpack.c.l.b16 %v475
    %v1408 = vunpack.c.h.b16 %v475
    %v1409 = vunpack.c.l.b16 %v476
    %v1410 = vunpack.c.h.b16 %v476
    %v1411 = vunpack.c.l.b16 %v477
    %v1412 = vunpack.c.h.b16 %v477
    %v1413 = vunpack.c.l.b16 %v478
    %v1414 = vunpack.c.h.b16 %v478
    %v1415 = vunpack.c.l.b16 %v479
    %v1416 = vunpack.c.h.b16 %v479
    %v1417 = vunpack.c.l.b16 %v480
    %v1418 = vunpack.c.h.b16 %v480
    %v1419 = vunpack.c.l.b16 %v481
    %v1420 = vunpack.c.h.b16 %v481
    %v1421 = vunpack.c.l.b16 %v482
    %v1422 = vunpack.c.h.b16 %v482
    %v1423 = vunpack.c.l.b16 %v483
    %v1424 = vunpack.c.h.b16 %v483
    %v1425 = vunpack.c.l.b16 %v484
    %v1426 = vunpack.c.h.b16 %v484
    %v1427 = vunpack.c.l.b16 %v485
    %v1428 = vunpack.c.h.b16 %v485
    %v1429 = vunpack.c.l.b16 %v486
    %v1430 = vunpack.c.h.b16 %v486
    %v1431 = vunpack.c.l.b16 %v487
    %v1432 = vunpack.c.h.b16 %v487
    %v1433 = vunpack.c.l.b16 %v488
    %v1434 = vunpack.c.h.b16 %v488
    %v1435 = vunpack.c.l.b16 %v489
    %v1436 = vunpack.c.h.b16 %v489
    %v1437 = vunpack.c.l.b16 %v490
    %v1438 = vunpack.c.h.b16 %v490
    %v1439 = vunpack.c.l.b16 %v491
    %v1440 = vunpack.c.h.b16 %v491
    %v1441 = vunpack.c.l.b16 %v492
    %v1442 = vunpack.c.h.b16 %v492
    %v1443 = vunpack.c.l.b16 %v493
    %v1444 = vunpack.c.h.b16 %v493
    %v1445 = vunpack.c.l.b16 %v494
    %v1446 = vunpack.c.h.b16 %v494
    %v1447 = vunpack.c.l.b16 %v495
    %v1448 = vunpack.c.h.b16 %v495
    %v1449 = vunpack.c.l.b16 %v496
    %v1450 = vunpack.c.h.b16 %v496
    %v1451 = vunpack.c.l.b16 %v497
    %v1452 = vunpack.c.h.b16 %v497
    %v1453 = vunpack.c.l.b16 %v498
    %v1454 = vunpack.c.h.b16 %v498
    %v1455 = vunpack.c.l.b16 %v499
    %v1456 = vunpack.c.h.b16 %v499
    %v1457 = vunpack.c.l.b16 %v500
    %v1458 = vunpack.c.h.b16 %v500
    %v1459 = vunpack.c.l.b16 %v501
    %v1460 = vunpack.c.h.b16 %v501
    %v1461 = vunpack.c.l.b16 %v502
    %v1462 = vunpack.c.h.b16 %v502
    %v1463 = vunpack.c.l.b16 %v503
    %v1464 = vunpack.c.h.b16 %v503
    %v1465 = vunpack.c.l.b16 %v504
    %v1466 = vunpack.c.h.b16 %v504
    %v1467 = vunpack.c.l.b16 %v505
    %v1468 = vunpack.c.h.b16 %v505
    %v1469 = vunpack.c.l.b16 %v506
    %v1470 = vunpack.c.h.b16 %v506
    %v1471 = vunpack.c.l.b16 %v507
    %v1472 = vunpack.c.h.b16 %v507
    %v1473 = vunpack.c.l.b16 %v508
    %v1474 = vunpack.c.h.b16 %v508
    %v1475 = vunpack.c.l.b16 %v509
    %v1476 = vunpack.c.h.b16 %v509
    %v1477 = vunpack.c.l.b16 %v510
    %v1478 = vunpack.c.h.b16 %v510
    %v1479 = vunpack.c.l.b16 %v511
    %v1480 = vunpack.c.h.b16 %v511
    %v1481 = vunpack.c.l.b16 %v512
    %v1482 = vunpack.c.h.b16 %v512
    %v1483 = vunpack.c.l.b16 %v513
    %v1484 = vunpack.c.h.b16 %v513
    %v1485 = vunpack.c.l.b16 %v514
    %v1486 = vunpack.c.h.b16 %v514
    %v1487 = vunpack.c.l.b16 %v515
    %v1488 = vunpack.c.h.b16 %v515
    %v1489 = vunpack.c.l.b16 %v516
    %v1490 = vunpack.c.h.b16 %v516
    %v1491 = vunpack.c.l.b16 %v517
    %v1492 = vunpack.c.h.b16 %v517
    %v1493 = vunpack.c.l.b16 %v518
    %v1494 = vunpack.c.h.b16 %v518
    %v1495 = vunpack.c.l.b16 %v519
    %v1496 = vunpack.c.h.b16 %v519
    %v1497 = vunpack.c.l.b16 %v520
    %v1498 = vunpack.c.h.b16 %v520
    %v1499 = vunpack.c.l.b16 %v521
    %v1500 = vunpack.c.h.b16 %v521
    %v1501 = vunpack.c.l.b16 %v522
    %v1502 = vunpack.c.h.b16 %v522
    %v1503 = vunpack.c.l.b16 %v523
    %v1504 = vunpack.c.h.b16 %v523
    %v1505 = vunpack.c.l.b16 %v524
    %v1506 = vunpack.c.h.b16 %v524
    %v1507 = vunpack.c.l.b16 %v525
    %v1508 = vunpack.c.h.b16 %v525
    %v1509 = vunpack.c.l.b16 %v526
    %v1510 = vunpack.c.h.b16 %v526
    %v1511 = vunpack.c.l.b16 %v527
    %v1512 = vunpack.c.h.b16 %v527
    %v1513 = vunpack.c.l.b16 %v528
    %v1514 = vunpack.c.h.b16 %v528
    %v1515 = vunpack.c.l.b16 %v529
    %v1516 = vunpack.c.h.b16 %v529
    %v1517 = vunpack.c.l.b16 %v530
    %v1518 = vunpack.c.h.b16 %v530
    %v1519 = vpack.c.b16 %v1395, %v1391
    %v1520 = vpack.c.b16 %v1396, %v1392
    %v1521 = vpack.c.b16 %v1397, %v1393
    %v1522 = vpack.c.b16 %v1398, %v1394
    %v1523 = vpack.c.b16 %v1403, %v1399
    %v1524 = vpack.c.b16 %v1404, %v1400
    %v1525 = vpack.c.b16 %v1405, %v1401
    %v1526 = vpack.c.b16 %v1406, %v1402
    %v1527 = vpack.c.b16 %v1411, %v1407
    %v1528 = vpack.c.b16 %v1412, %v1408
    %v1529 = vpack.c.b16 %v1413, %v1409
    %v1530 = vpack.c.b16 %v1414, %v1410
    %v1531 = vpack.c.b16 %v1419, %v1415
    %v1532 = vpack.c.b16 %v1420, %v1416
    %v1533 = vpack.c.b16 %v1421, %v1417
    %v1534 = vpack.c.b16 %v1422, %v1418
    %v1535 = vpack.c.b16 %v1427, %v1423
    %v1536 = vpack.c.b16 %v1428, %v1424
    %v1537 = vpack.c.b16 %v1429, %v1425
    %v1538 = vpack.c.b16 %v1430, %v1426
    %v1539 = vpack.c.b16 %v1435, %v1431
    %v1540 = vpack.c.b16 %v1436, %v1432
    %v1541 = vpack.c.b16 %v1437, %v1433
    %v1542 = vpack.c.b16 %v1438, %v1434
    %v1543 = vpack.c.b16 %v1443, %v1439
    %v1544 = vpack.c.b16 %v1444, %v1440
    %v1545 = vpack.c.b16 %v1445, %v1441
    %v1546 = vpack.c.b16 %v1446, %v1442
    %v1547 = vpack.c.b16 %v1451, %v1447
    %v1548 = vpack.c.b16 %v1452, %v1448
    %v1549 = vpack.c.b16 %v1453, %v1449
    %v1550 = vpack.c.b16 %v1454, %v1450
    %v1551 = vpack.c.b16 %v1459, %v1455
    %v1552 = vpack.c.b16 %v1460, %v1456
    %v1553 = vpack.c.b16 %v1461, %v1457
    %v1554 = vpack.c.b16 %v1462, %v1458
    %v1555 = vpack.c.b16 %v1467, %v1463
    %v1556 = vpack.c.b16 %v1468, %v1464
    %v1557 = vpack.c.b16 %v1469, %v1465
    %v1558 = vpack.c.b16 %v1470, %v1466
    %v1559 = vpack.c.b16 %v1475, %v1471
    %v1560 = vpack.c.b16 %v1476, %v1472
    %v1561 = vpack.c.b16 %v1477, %v1473
    %v1562 = vpack.c.b16 %v1478, %v1474
    %v1563 = vpack.c.b16 %v1483, %v1479
    %v1564 = vpack.c.b16 %v1484, %v1480
    %v1565 = vpack.c.b16 %v1485, %v1481
    %v1566 = vpack.c.b16 %v1486, %v1482
    %v1567 = vpack.c.b16 %v1491, %v1487
    %v1568 = vpack.c.b16 %v1492, %v1488
    %v1569 = vpack.c.b16 %v1493, %v1489
    %v1570 = vpack.c.b16 %v1494, %v1490
    %v1571 = vpack.c.b16 %v1499, %v1495
    %v1572 = vpack.c.b16 %v1500, %v1496
    %v1573 = vpack.c.b16 %v1501, %v1497
    %v1574 = vpack.c.b16 %v1502, %v1498
    %v1575 = vpack.c.b16 %v1507, %v1503
    %v1576 = vpack.c.b16 %v1508, %v1504
    %v1577 = vpack.c.b16 %v1509, %v1505
    %v1578 = vpack.c.b16 %v1510, %v1506
    %v1579 = vpack.c.b16 %v1515, %v1511
    %v1580 = vpack.c.b16 %v1516, %v1512
    %v1581 = vpack.c.b16 %v1517, %v1513
    %v1582 = vpack.c.b16 %v1518, %v1514
    %1647 = vmatpush.bf16.msra.mxu0 %v1547
    %1648 = vmatpush.bf16.msra.mxu0 %v1543
    %1649 = vmatpush.bf16.msra.mxu0 %v1539
    %1650 = vmatpush.bf16.msra.mxu0 %v1535
    %1651 = vmatpush.bf16.msra.mxu0 %v1531
    %1652 = vmatpush.bf16.msra.mxu0 %v1527
    %1653 = vmatpush.bf16.msra.mxu0 %v1523
    %1654 = vmatpush.bf16.msra.mxu0 %v1519
    %1655 = vmatmul.bf16.gmra.mxu0 %v1326
    %v1656 = vpop.f32.mrf.mxu0
    %v1657 = vadd.f32 %v543, %v1656
    %v1658 = vpop.f32.mrf.mxu0
    %1659 = vdwg.mxu0
    %1660 = vmatpush.bf16.msra.mxu0 %v1579
    %1661 = vmatpush.bf16.msra.mxu0 %v1575
    %1662 = vmatpush.bf16.msra.mxu0 %v1571
    %1663 = vmatpush.bf16.msra.mxu0 %v1567
    %1664 = vmatpush.bf16.msra.mxu0 %v1563
    %1665 = vmatpush.bf16.msra.mxu0 %v1559
    %1666 = vmatpush.bf16.msra.mxu0 %v1555
    %1667 = vmatpush.bf16.msra.mxu0 %v1551
    %1668 = vmatmul.bf16.gmra.mxu0 %v838
    %v1669 = vpop.f32.mrf.mxu0
    %v1670 = vadd.f32 %v1657, %v1669
    %v1671 = vpop.f32.mrf.mxu0
    %1672 = vdwg.mxu0
    %1673 = vmatpush.bf16.msra.mxu0 %v1548
    %1674 = vmatpush.bf16.msra.mxu0 %v1544
    %1675 = vmatpush.bf16.msra.mxu0 %v1540
    %1676 = vmatpush.bf16.msra.mxu0 %v1536
    %1677 = vmatpush.bf16.msra.mxu0 %v1532
    %1678 = vmatpush.bf16.msra.mxu0 %v1528
    %1679 = vmatpush.bf16.msra.mxu0 %v1524
    %1680 = vmatpush.bf16.msra.mxu0 %v1520
    %1681 = vmatmul.bf16.gmra.mxu0 %v1326
    %v1682 = vpop.f32.mrf.mxu0
    %v1683 = vadd.f32 %v544, %v1682
    %v1684 = vpop.f32.mrf.mxu0
    %1685 = vdwg.mxu0
    %1686 = vmatpush.bf16.msra.mxu0 %v1580
    %1687 = vmatpush.bf16.msra.mxu0 %v1576
    %1688 = vmatpush.bf16.msra.mxu0 %v1572
    %1689 = vmatpush.bf16.msra.mxu0 %v1568
    %1690 = vmatpush.bf16.msra.mxu0 %v1564
    %1691 = vmatpush.bf16.msra.mxu0 %v1560
    %1692 = vmatpush.bf16.msra.mxu0 %v1556
    %1693 = vmatpush.bf16.msra.mxu0 %v1552
    %1694 = vmatmul.bf16.gmra.mxu0 %v838
    %v1695 = vpop.f32.mrf.mxu0
    %v1696 = vadd.f32 %v1683, %v1695
    %v1697 = vpop.f32.mrf.mxu0
    %1698 = vdwg.mxu0
    %1699 = vmatpush.bf16.msra.mxu0 %v1549
    %1700 = vmatpush.bf16.msra.mxu0 %v1545
    %1701 = vmatpush.bf16.msra.mxu0 %v1541
    %1702 = vmatpush.bf16.msra.mxu0 %v1537
    %1703 = vmatpush.bf16.msra.mxu0 %v1533
    %1704 = vmatpush.bf16.msra.mxu0 %v1529
    %1705 = vmatpush.bf16.msra.mxu0 %v1525
    %1706 = vmatpush.bf16.msra.mxu0 %v1521
    %1707 = vmatmul.bf16.gmra.mxu0 %v1326
    %v1708 = vpop.f32.mrf.mxu0
    %v1709 = vadd.f32 %v545, %v1708
    %v1710 = vpop.f32.mrf.mxu0
    %1711 = vdwg.mxu0
    %1712 = vmatpush.bf16.msra.mxu0 %v1581
    %1713 = vmatpush.bf16.msra.mxu0 %v1577
    %1714 = vmatpush.bf16.msra.mxu0 %v1573
    %1715 = vmatpush.bf16.msra.mxu0 %v1569
    %1716 = vmatpush.bf16.msra.mxu0 %v1565
    %1717 = vmatpush.bf16.msra.mxu0 %v1561
    %1718 = vmatpush.bf16.msra.mxu0 %v1557
    %1719 = vmatpush.bf16.msra.mxu0 %v1553
    %1720 = vmatmul.bf16.gmra.mxu0 %v838
    %v1721 = vpop.f32.mrf.mxu0
    %v1722 = vadd.f32 %v1709, %v1721
    %v1723 = vpop.f32.mrf.mxu0
    %1724 = vdwg.mxu0
    %1725 = vmatpush.bf16.msra.mxu0 %v1550
    %1726 = vmatpush.bf16.msra.mxu0 %v1546
    %1727 = vmatpush.bf16.msra.mxu0 %v1542
    %1728 = vmatpush.bf16.msra.mxu0 %v1538
    %1729 = vmatpush.bf16.msra.mxu0 %v1534
    %1730 = vmatpush.bf16.msra.mxu0 %v1530
    %1731 = vmatpush.bf16.msra.mxu0 %v1526
    %1732 = vmatpush.bf16.msra.mxu0 %v1522
    %1733 = vmatmul.bf16.gmra.mxu0 %v1326
    %v1734 = vpop.f32.mrf.mxu0
    %v1735 = vadd.f32 %v546, %v1734
    %v1736 = vpop.f32.mrf.mxu0
    %1737 = vdwg.mxu0
    %1738 = vmatpush.bf16.msra.mxu0 %v1582
    %1739 = vmatpush.bf16.msra.mxu0 %v1578
    %1740 = vmatpush.bf16.msra.mxu0 %v1574
    %1741 = vmatpush.bf16.msra.mxu0 %v1570
    %1742 = vmatpush.bf16.msra.mxu0 %v1566
    %1743 = vmatpush.bf16.msra.mxu0 %v1562
    %1744 = vmatpush.bf16.msra.mxu0 %v1558
    %1745 = vmatpush.bf16.msra.mxu0 %v1554
    %1746 = vmatmul.bf16.gmra.mxu0 %v838
    %v1747 = vpop.f32.mrf.mxu0
    %v1748 = vadd.f32 %v1735, %v1747
    %v1749 = vpop.f32.mrf.mxu0
    %1750 = vdwg.mxu0
    %v1751 = vxor.u32 %v1670, 2147483648
    %v1752 = vmul.f32 %v1751, 1.442695
    %v1753 = vpow.pop %v1752
    %v1754 = vadd.f32 %v1753, 1.0
    %v1755 = vrcp.pop %v1754
    %v1756 = vmul.f32 %v1754, %v1755
    %v1757 = vsub.f32 1.0, %v1756
    %v1758 = vmul.f32 %v1755, %v1757
    %v1759 = vadd.f32 %v1755, %v1758
    %vm1760 = vweird.f32 %v1754
    %vm1761 = vweird.f32 %v1755
    %vm1762 = vmor %vm1760, %vm1761
    %v1763 = vsel %vm1762, %v1755, %v1759
    %v1764 = vand.u32 2147483647, %v1754
    %vm1765 = vcmp.eq.f32.partialorder %v1764, 8.507059e+37
    %v1766 = vand.u32 %v1754, 2147483648
    %v1767 = vor.u32 1.1754944e-38, %v1766
    %v1768 = vsel %vm1765, %v1767, %v1763
    %v1769 = vmul.f32 1.0, %v1768
    %v1770 = vxor.u32 %v1696, 2147483648
    %v1771 = vmul.f32 %v1770, 1.442695
    %v1772 = vpow.pop %v1771
    %v1773 = vadd.f32 %v1772, 1.0
    %v1774 = vrcp.pop %v1773
    %v1775 = vmul.f32 %v1773, %v1774
    %v1776 = vsub.f32 1.0, %v1775
    %v1777 = vmul.f32 %v1774, %v1776
    %v1778 = vadd.f32 %v1774, %v1777
    %vm1779 = vweird.f32 %v1773
    %vm1780 = vweird.f32 %v1774
    %vm1781 = vmor %vm1779, %vm1780
    %v1782 = vsel %vm1781, %v1774, %v1778
    %v1783 = vand.u32 2147483647, %v1773
    %vm1784 = vcmp.eq.f32.partialorder %v1783, 8.507059e+37
    %v1785 = vand.u32 %v1773, 2147483648
    %v1786 = vor.u32 1.1754944e-38, %v1785
    %v1787 = vsel %vm1784, %v1786, %v1782
    %v1788 = vmul.f32 1.0, %v1787
    %v1789 = vtanh.pop %v1722
    %v1790 = vxor.u32 %v1748, 2147483648
    %v1791 = vmul.f32 %v1790, 1.442695
    %v1792 = vpow.pop %v1791
    %v1793 = vadd.f32 %v1792, 1.0
    %v1794 = vrcp.pop %v1793
    %v1795 = vmul.f32 %v1793, %v1794
    %v1796 = vsub.f32 1.0, %v1795
    %v1797 = vmul.f32 %v1794, %v1796
    %v1798 = vadd.f32 %v1794, %v1797
    %vm1799 = vweird.f32 %v1793
    %vm1800 = vweird.f32 %v1794
    %vm1801 = vmor %vm1799, %vm1800
    %v1802 = vsel %vm1801, %v1794, %v1798
    %v1803 = vand.u32 2147483647, %v1793
    %vm1804 = vcmp.eq.f32.partialorder %v1803, 8.507059e+37
    %v1805 = vand.u32 %v1793, 2147483648
    %v1806 = vor.u32 1.1754944e-38, %v1805
    %v1807 = vsel %vm1804, %v1806, %v1802
    %v1808 = vmul.f32 1.0, %v1807
    %v1809 = vmul.f32 %v1788, 0.0
    %v1810 = vmul.f32 %v1769, %v1789
    %v1811 = vadd.f32 %v1809, %v1810
    %v1812 = vtanh.pop %v1811
    %v1813 = vmul.f32 %v1808, %v1812
    %1814 = vst [vmem:[#allocation3] sm:$0xff] %v1813
    %s1815 = smul.u32 1, 4
    %s1816 = smul.addr %s1815, 8
    %s1817 = scalar_lea.vmem [#allocation2], %s1816
    %v1818 = vld [vmem:[%s1817] sm:$0xff]
    %v1819 = vld [vmem:[%s1817 + $0x8] sm:$0xff]
    %v1820 = vld [vmem:[%s1817 + $0x10] sm:$0xff]
    %v1821 = vld [vmem:[%s1817 + $0x18] sm:$0xff]
    %1822 = vmatpush.bf16.msra.mxu0 %v682
    %1823 = vmatpush.bf16.msra.mxu0 %v678
    %1824 = vmatpush.bf16.msra.mxu0 %v674
    %1825 = vmatpush.bf16.msra.mxu0 %v670
    %1826 = vmatpush.bf16.msra.mxu0 %v666
    %1827 = vmatpush.bf16.msra.mxu0 %v662
    %1828 = vmatpush.bf16.msra.mxu0 %v658
    %1829 = vmatpush.bf16.msra.mxu0 %v654
    %1830 = vmatmul.bf16.gmra.mxu0 %v837
    %v1831 = vpop.f32.mrf.mxu0
    %v1832 = vadd.f32 0.0, %v1831
    %v1833 = vpop.f32.mrf.mxu0
    %1834 = vdwg.mxu0
    %1835 = vmatpush.bf16.msra.mxu0 %v683
    %1836 = vmatpush.bf16.msra.mxu0 %v679
    %1837 = vmatpush.bf16.msra.mxu0 %v675
    %1838 = vmatpush.bf16.msra.mxu0 %v671
    %1839 = vmatpush.bf16.msra.mxu0 %v667
    %1840 = vmatpush.bf16.msra.mxu0 %v663
    %1841 = vmatpush.bf16.msra.mxu0 %v659
    %1842 = vmatpush.bf16.msra.mxu0 %v655
    %1843 = vmatmul.bf16.gmra.mxu0 %v837
    %v1844 = vpop.f32.mrf.mxu0
    %v1845 = vadd.f32 0.0, %v1844
    %v1846 = vpop.f32.mrf.mxu0
    %1847 = vdwg.mxu0
    %1848 = vmatpush.bf16.msra.mxu0 %v684
    %1849 = vmatpush.bf16.msra.mxu0 %v680
    %1850 = vmatpush.bf16.msra.mxu0 %v676
    %1851 = vmatpush.bf16.msra.mxu0 %v672
    %1852 = vmatpush.bf16.msra.mxu0 %v668
    %1853 = vmatpush.bf16.msra.mxu0 %v664
    %1854 = vmatpush.bf16.msra.mxu0 %v660
    %1855 = vmatpush.bf16.msra.mxu0 %v656
    %1856 = vmatmul.bf16.gmra.mxu0 %v837
    %v1857 = vpop.f32.mrf.mxu0
    %v1858 = vadd.f32 0.0, %v1857
    %v1859 = vpop.f32.mrf.mxu0
    %1860 = vdwg.mxu0
    %1861 = vmatpush.bf16.msra.mxu0 %v685
    %1862 = vmatpush.bf16.msra.mxu0 %v681
    %1863 = vmatpush.bf16.msra.mxu0 %v677
    %1864 = vmatpush.bf16.msra.mxu0 %v673
    %1865 = vmatpush.bf16.msra.mxu0 %v669
    %1866 = vmatpush.bf16.msra.mxu0 %v665
    %1867 = vmatpush.bf16.msra.mxu0 %v661
    %1868 = vmatpush.bf16.msra.mxu0 %v657
    %1869 = vmatmul.bf16.gmra.mxu0 %v837
    %v1870 = vpop.f32.mrf.mxu0
    %v1871 = vadd.f32 0.0, %v1870
    %v1872 = vpop.f32.mrf.mxu0
    %1873 = vdwg.mxu0
    %v1874 = vadd.f32 %v1818, %v1832
    %v1875 = vadd.f32 %v1819, %v1845
    %v1876 = vadd.f32 %v1820, %v1858
    %v1877 = vadd.f32 %v1821, %v1871
    %v1878 = vxor.u32 %v1874, 2147483648
    %v1879 = vmul.f32 %v1878, 1.442695
    %v1880 = vpow.pop %v1879
    %v1881 = vadd.f32 %v1880, 1.0
    %v1882 = vrcp.pop %v1881
    %v1883 = vmul.f32 %v1881, %v1882
    %v1884 = vsub.f32 1.0, %v1883
    %v1885 = vmul.f32 %v1882, %v1884
    %v1886 = vadd.f32 %v1882, %v1885
    %vm1887 = vweird.f32 %v1881
    %vm1888 = vweird.f32 %v1882
    %vm1889 = vmor %vm1887, %vm1888
    %v1890 = vsel %vm1889, %v1882, %v1886
    %v1891 = vand.u32 2147483647, %v1881
    %vm1892 = vcmp.eq.f32.partialorder %v1891, 8.507059e+37
    %v1893 = vand.u32 %v1881, 2147483648
    %v1894 = vor.u32 1.1754944e-38, %v1893
    %v1895 = vsel %vm1892, %v1894, %v1890
    %v1896 = vmul.f32 1.0, %v1895
    %v1897 = vxor.u32 %v1875, 2147483648
    %v1898 = vmul.f32 %v1897, 1.442695
    %v1899 = vpow.pop %v1898
    %v1900 = vadd.f32 %v1899, 1.0
    %v1901 = vrcp.pop %v1900
    %v1902 = vmul.f32 %v1900, %v1901
    %v1903 = vsub.f32 1.0, %v1902
    %v1904 = vmul.f32 %v1901, %v1903
    %v1905 = vadd.f32 %v1901, %v1904
    %vm1906 = vweird.f32 %v1900
    %vm1907 = vweird.f32 %v1901
    %vm1908 = vmor %vm1906, %vm1907
    %v1909 = vsel %vm1908, %v1901, %v1905
    %v1910 = vand.u32 2147483647, %v1900
    %vm1911 = vcmp.eq.f32.partialorder %v1910, 8.507059e+37
    %v1912 = vand.u32 %v1900, 2147483648
    %v1913 = vor.u32 1.1754944e-38, %v1912
    %v1914 = vsel %vm1911, %v1913, %v1909
    %v1915 = vmul.f32 1.0, %v1914
    %v1916 = vtanh.pop %v1876
    %v1917 = vxor.u32 %v1877, 2147483648
    %v1918 = vmul.f32 %v1917, 1.442695
    %v1919 = vpow.pop %v1918
    %v1920 = vadd.f32 %v1919, 1.0
    %v1921 = vrcp.pop %v1920
    %v1922 = vmul.f32 %v1920, %v1921
    %v1923 = vsub.f32 1.0, %v1922
    %v1924 = vmul.f32 %v1921, %v1923
    %v1925 = vadd.f32 %v1921, %v1924
    %vm1926 = vweird.f32 %v1920
    %vm1927 = vweird.f32 %v1921
    %vm1928 = vmor %vm1926, %vm1927
    %v1929 = vsel %vm1928, %v1921, %v1925
    %v1930 = vand.u32 2147483647, %v1920
    %vm1931 = vcmp.eq.f32.partialorder %v1930, 8.507059e+37
    %v1932 = vand.u32 %v1920, 2147483648
    %v1933 = vor.u32 1.1754944e-38, %v1932
    %v1934 = vsel %vm1931, %v1933, %v1929
    %v1935 = vmul.f32 1.0, %v1934
    %v1936 = vmul.f32 %v1915, %v834
    %v1937 = vmul.f32 %v1896, %v1916
    %v1938 = vadd.f32 %v1936, %v1937
    %v1939 = vtanh.pop %v1938
    %v1940 = vmul.f32 %v1935, %v1939
    %v1941 = vpack.c.bf16 %v1940, %v1940
    %1942 = vmatpush.bf16.msra.mxu0 %v1059
    %1943 = vmatpush.bf16.msra.mxu0 %v1055
    %1944 = vmatpush.bf16.msra.mxu0 %v1051
    %1945 = vmatpush.bf16.msra.mxu0 %v1047
    %1946 = vmatpush.bf16.msra.mxu0 %v1043
    %1947 = vmatpush.bf16.msra.mxu0 %v1039
    %1948 = vmatpush.bf16.msra.mxu0 %v1035
    %1949 = vmatpush.bf16.msra.mxu0 %v1031
    %1950 = vmatmul.bf16.gmra.mxu0 %v1941
    %v1951 = vpop.f32.mrf.mxu0
    %v1952 = vadd.f32 %v533, %v1951
    %v1953 = vpop.f32.mrf.mxu0
    %1954 = vdwg.mxu0
    %1955 = vmatpush.bf16.msra.mxu0 %v1091
    %1956 = vmatpush.bf16.msra.mxu0 %v1087
    %1957 = vmatpush.bf16.msra.mxu0 %v1083
    %1958 = vmatpush.bf16.msra.mxu0 %v1079
    %1959 = vmatpush.bf16.msra.mxu0 %v1075
    %1960 = vmatpush.bf16.msra.mxu0 %v1071
    %1961 = vmatpush.bf16.msra.mxu0 %v1067
    %1962 = vmatpush.bf16.msra.mxu0 %v1063
    %1963 = vmatmul.bf16.gmra.mxu0 %v1326
    %v1964 = vpop.f32.mrf.mxu0
    %v1965 = vadd.f32 %v1952, %v1964
    %v1966 = vpop.f32.mrf.mxu0
    %1967 = vdwg.mxu0
    %1968 = vmatpush.bf16.msra.mxu0 %v1060
    %1969 = vmatpush.bf16.msra.mxu0 %v1056
    %1970 = vmatpush.bf16.msra.mxu0 %v1052
    %1971 = vmatpush.bf16.msra.mxu0 %v1048
    %1972 = vmatpush.bf16.msra.mxu0 %v1044
    %1973 = vmatpush.bf16.msra.mxu0 %v1040
    %1974 = vmatpush.bf16.msra.mxu0 %v1036
    %1975 = vmatpush.bf16.msra.mxu0 %v1032
    %1976 = vmatmul.bf16.gmra.mxu0 %v1941
    %v1977 = vpop.f32.mrf.mxu0
    %v1978 = vadd.f32 %v534, %v1977
    %v1979 = vpop.f32.mrf.mxu0
    %1980 = vdwg.mxu0
    %1981 = vmatpush.bf16.msra.mxu0 %v1092
    %1982 = vmatpush.bf16.msra.mxu0 %v1088
    %1983 = vmatpush.bf16.msra.mxu0 %v1084
    %1984 = vmatpush.bf16.msra.mxu0 %v1080
    %1985 = vmatpush.bf16.msra.mxu0 %v1076
    %1986 = vmatpush.bf16.msra.mxu0 %v1072
    %1987 = vmatpush.bf16.msra.mxu0 %v1068
    %1988 = vmatpush.bf16.msra.mxu0 %v1064
    %1989 = vmatmul.bf16.gmra.mxu0 %v1326
    %v1990 = vpop.f32.mrf.mxu0
    %v1991 = vadd.f32 %v1978, %v1990
    %v1992 = vpop.f32.mrf.mxu0
    %1993 = vdwg.mxu0
    %1994 = vmatpush.bf16.msra.mxu0 %v1061
    %1995 = vmatpush.bf16.msra.mxu0 %v1057
    %1996 = vmatpush.bf16.msra.mxu0 %v1053
    %1997 = vmatpush.bf16.msra.mxu0 %v1049
    %1998 = vmatpush.bf16.msra.mxu0 %v1045
    %1999 = vmatpush.bf16.msra.mxu0 %v1041
    %2000 = vmatpush.bf16.msra.mxu0 %v1037
    %2001 = vmatpush.bf16.msra.mxu0 %v1033
    %2002 = vmatmul.bf16.gmra.mxu0 %v1941
    %v2003 = vpop.f32.mrf.mxu0
    %v2004 = vadd.f32 %v535, %v2003
    %v2005 = vpop.f32.mrf.mxu0
    %2006 = vdwg.mxu0
    %2007 = vmatpush.bf16.msra.mxu0 %v1093
    %2008 = vmatpush.bf16.msra.mxu0 %v1089
    %2009 = vmatpush.bf16.msra.mxu0 %v1085
    %2010 = vmatpush.bf16.msra.mxu0 %v1081
    %2011 = vmatpush.bf16.msra.mxu0 %v1077
    %2012 = vmatpush.bf16.msra.mxu0 %v1073
    %2013 = vmatpush.bf16.msra.mxu0 %v1069
    %2014 = vmatpush.bf16.msra.mxu0 %v1065
    %2015 = vmatmul.bf16.gmra.mxu0 %v1326
    %v2016 = vpop.f32.mrf.mxu0
    %v2017 = vadd.f32 %v2004, %v2016
    %v2018 = vpop.f32.mrf.mxu0
    %2019 = vdwg.mxu0
    %2020 = vmatpush.bf16.msra.mxu0 %v1062
    %2021 = vmatpush.bf16.msra.mxu0 %v1058
    %2022 = vmatpush.bf16.msra.mxu0 %v1054
    %2023 = vmatpush.bf16.msra.mxu0 %v1050
    %2024 = vmatpush.bf16.msra.mxu0 %v1046
    %2025 = vmatpush.bf16.msra.mxu0 %v1042
    %2026 = vmatpush.bf16.msra.mxu0 %v1038
    %2027 = vmatpush.bf16.msra.mxu0 %v1034
    %2028 = vmatmul.bf16.gmra.mxu0 %v1941
    %v2029 = vpop.f32.mrf.mxu0
    %v2030 = vadd.f32 %v536, %v2029
    %v2031 = vpop.f32.mrf.mxu0
    %2032 = vdwg.mxu0
    %2033 = vmatpush.bf16.msra.mxu0 %v1094
    %2034 = vmatpush.bf16.msra.mxu0 %v1090
    %2035 = vmatpush.bf16.msra.mxu0 %v1086
    %2036 = vmatpush.bf16.msra.mxu0 %v1082
    %2037 = vmatpush.bf16.msra.mxu0 %v1078
    %2038 = vmatpush.bf16.msra.mxu0 %v1074
    %2039 = vmatpush.bf16.msra.mxu0 %v1070
    %2040 = vmatpush.bf16.msra.mxu0 %v1066
    %2041 = vmatmul.bf16.gmra.mxu0 %v1326
    %v2042 = vpop.f32.mrf.mxu0
    %v2043 = vadd.f32 %v2030, %v2042
    %v2044 = vpop.f32.mrf.mxu0
    %2045 = vdwg.mxu0
    %v2046 = vxor.u32 %v1965, 2147483648
    %v2047 = vmul.f32 %v2046, 1.442695
    %v2048 = vpow.pop %v2047
    %v2049 = vadd.f32 %v2048, 1.0
    %v2050 = vrcp.pop %v2049
    %v2051 = vmul.f32 %v2049, %v2050
    %v2052 = vsub.f32 1.0, %v2051
    %v2053 = vmul.f32 %v2050, %v2052
    %v2054 = vadd.f32 %v2050, %v2053
    %vm2055 = vweird.f32 %v2049
    %vm2056 = vweird.f32 %v2050
    %vm2057 = vmor %vm2055, %vm2056
    %v2058 = vsel %vm2057, %v2050, %v2054
    %v2059 = vand.u32 2147483647, %v2049
    %vm2060 = vcmp.eq.f32.partialorder %v2059, 8.507059e+37
    %v2061 = vand.u32 %v2049, 2147483648
    %v2062 = vor.u32 1.1754944e-38, %v2061
    %v2063 = vsel %vm2060, %v2062, %v2058
    %v2064 = vmul.f32 1.0, %v2063
    %v2065 = vxor.u32 %v1991, 2147483648
    %v2066 = vmul.f32 %v2065, 1.442695
    %v2067 = vpow.pop %v2066
    %v2068 = vadd.f32 %v2067, 1.0
    %v2069 = vrcp.pop %v2068
    %v2070 = vmul.f32 %v2068, %v2069
    %v2071 = vsub.f32 1.0, %v2070
    %v2072 = vmul.f32 %v2069, %v2071
    %v2073 = vadd.f32 %v2069, %v2072
    %vm2074 = vweird.f32 %v2068
    %vm2075 = vweird.f32 %v2069
    %vm2076 = vmor %vm2074, %vm2075
    %v2077 = vsel %vm2076, %v2069, %v2073
    %v2078 = vand.u32 2147483647, %v2068
    %vm2079 = vcmp.eq.f32.partialorder %v2078, 8.507059e+37
    %v2080 = vand.u32 %v2068, 2147483648
    %v2081 = vor.u32 1.1754944e-38, %v2080
    %v2082 = vsel %vm2079, %v2081, %v2077
    %v2083 = vmul.f32 1.0, %v2082
    %v2084 = vtanh.pop %v2017
    %v2085 = vxor.u32 %v2043, 2147483648
    %v2086 = vmul.f32 %v2085, 1.442695
    %v2087 = vpow.pop %v2086
    %v2088 = vadd.f32 %v2087, 1.0
    %v2089 = vrcp.pop %v2088
    %v2090 = vmul.f32 %v2088, %v2089
    %v2091 = vsub.f32 1.0, %v2090
    %v2092 = vmul.f32 %v2089, %v2091
    %v2093 = vadd.f32 %v2089, %v2092
    %vm2094 = vweird.f32 %v2088
    %vm2095 = vweird.f32 %v2089
    %vm2096 = vmor %vm2094, %vm2095
    %v2097 = vsel %vm2096, %v2089, %v2093
    %v2098 = vand.u32 2147483647, %v2088
    %vm2099 = vcmp.eq.f32.partialorder %v2098, 8.507059e+37
    %v2100 = vand.u32 %v2088, 2147483648
    %v2101 = vor.u32 1.1754944e-38, %v2100
    %v2102 = vsel %vm2099, %v2101, %v2097
    %v2103 = vmul.f32 1.0, %v2102
    %v2104 = vmul.f32 %v2083, %v1323
    %v2105 = vmul.f32 %v2064, %v2084
    %v2106 = vadd.f32 %v2104, %v2105
    %v2107 = vtanh.pop %v2106
    %v2108 = vmul.f32 %v2103, %v2107
    %v2109 = vpack.c.bf16 %v2108, %v2108
    %v2110 = vpack.c.bf16 %v1813, %v1813
    %2111 = vmatpush.bf16.msra.mxu0 %v1547
    %2112 = vmatpush.bf16.msra.mxu0 %v1543
    %2113 = vmatpush.bf16.msra.mxu0 %v1539
    %2114 = vmatpush.bf16.msra.mxu0 %v1535
    %2115 = vmatpush.bf16.msra.mxu0 %v1531
    %2116 = vmatpush.bf16.msra.mxu0 %v1527
    %2117 = vmatpush.bf16.msra.mxu0 %v1523
    %2118 = vmatpush.bf16.msra.mxu0 %v1519
    %2119 = vmatmul.bf16.gmra.mxu0 %v2109
    %v2120 = vpop.f32.mrf.mxu0
    %v2121 = vadd.f32 %v543, %v2120
    %v2122 = vpop.f32.mrf.mxu0
    %2123 = vdwg.mxu0
    %2124 = vmatpush.bf16.msra.mxu0 %v1579
    %2125 = vmatpush.bf16.msra.mxu0 %v1575
    %2126 = vmatpush.bf16.msra.mxu0 %v1571
    %2127 = vmatpush.bf16.msra.mxu0 %v1567
    %2128 = vmatpush.bf16.msra.mxu0 %v1563
    %2129 = vmatpush.bf16.msra.mxu0 %v1559
    %2130 = vmatpush.bf16.msra.mxu0 %v1555
    %2131 = vmatpush.bf16.msra.mxu0 %v1551
    %2132 = vmatmul.bf16.gmra.mxu0 %v2110
    %v2133 = vpop.f32.mrf.mxu0
    %v2134 = vadd.f32 %v2121, %v2133
    %v2135 = vpop.f32.mrf.mxu0
    %2136 = vdwg.mxu0
    %2137 = vmatpush.bf16.msra.mxu0 %v1548
    %2138 = vmatpush.bf16.msra.mxu0 %v1544
    %2139 = vmatpush.bf16.msra.mxu0 %v1540
    %2140 = vmatpush.bf16.msra.mxu0 %v1536
    %2141 = vmatpush.bf16.msra.mxu0 %v1532
    %2142 = vmatpush.bf16.msra.mxu0 %v1528
    %2143 = vmatpush.bf16.msra.mxu0 %v1524
    %2144 = vmatpush.bf16.msra.mxu0 %v1520
    %2145 = vmatmul.bf16.gmra.mxu0 %v2109
    %v2146 = vpop.f32.mrf.mxu0
    %v2147 = vadd.f32 %v544, %v2146
    %v2148 = vpop.f32.mrf.mxu0
    %2149 = vdwg.mxu0
    %2150 = vmatpush.bf16.msra.mxu0 %v1580
    %2151 = vmatpush.bf16.msra.mxu0 %v1576
    %2152 = vmatpush.bf16.msra.mxu0 %v1572
    %2153 = vmatpush.bf16.msra.mxu0 %v1568
    %2154 = vmatpush.bf16.msra.mxu0 %v1564
    %2155 = vmatpush.bf16.msra.mxu0 %v1560
    %2156 = vmatpush.bf16.msra.mxu0 %v1556
    %2157 = vmatpush.bf16.msra.mxu0 %v1552
    %2158 = vmatmul.bf16.gmra.mxu0 %v2110
    %v2159 = vpop.f32.mrf.mxu0
    %v2160 = vadd.f32 %v2147, %v2159
    %v2161 = vpop.f32.mrf.mxu0
    %2162 = vdwg.mxu0
    %2163 = vmatpush.bf16.msra.mxu0 %v1549
    %2164 = vmatpush.bf16.msra.mxu0 %v1545
    %2165 = vmatpush.bf16.msra.mxu0 %v1541
    %2166 = vmatpush.bf16.msra.mxu0 %v1537
    %2167 = vmatpush.bf16.msra.mxu0 %v1533
    %2168 = vmatpush.bf16.msra.mxu0 %v1529
    %2169 = vmatpush.bf16.msra.mxu0 %v1525
    %2170 = vmatpush.bf16.msra.mxu0 %v1521
    %2171 = vmatmul.bf16.gmra.mxu0 %v2109
    %v2172 = vpop.f32.mrf.mxu0
    %v2173 = vadd.f32 %v545, %v2172
    %v2174 = vpop.f32.mrf.mxu0
    %2175 = vdwg.mxu0
    %2176 = vmatpush.bf16.msra.mxu0 %v1581
    %2177 = vmatpush.bf16.msra.mxu0 %v1577
    %2178 = vmatpush.bf16.msra.mxu0 %v1573
    %2179 = vmatpush.bf16.msra.mxu0 %v1569
    %2180 = vmatpush.bf16.msra.mxu0 %v1565
    %2181 = vmatpush.bf16.msra.mxu0 %v1561
    %2182 = vmatpush.bf16.msra.mxu0 %v1557
    %2183 = vmatpush.bf16.msra.mxu0 %v1553
    %2184 = vmatmul.bf16.gmra.mxu0 %v2110
    %v2185 = vpop.f32.mrf.mxu0
    %v2186 = vadd.f32 %v2173, %v2185
    %v2187 = vpop.f32.mrf.mxu0
    %2188 = vdwg.mxu0
    %2189 = vmatpush.bf16.msra.mxu0 %v1550
    %2190 = vmatpush.bf16.msra.mxu0 %v1546
    %2191 = vmatpush.bf16.msra.mxu0 %v1542
    %2192 = vmatpush.bf16.msra.mxu0 %v1538
    %2193 = vmatpush.bf16.msra.mxu0 %v1534
    %2194 = vmatpush.bf16.msra.mxu0 %v1530
    %2195 = vmatpush.bf16.msra.mxu0 %v1526
    %2196 = vmatpush.bf16.msra.mxu0 %v1522
    %2197 = vmatmul.bf16.gmra.mxu0 %v2109
    %v2198 = vpop.f32.mrf.mxu0
    %v2199 = vadd.f32 %v546, %v2198
    %v2200 = vpop.f32.mrf.mxu0
    %2201 = vdwg.mxu0
    %2202 = vmatpush.bf16.msra.mxu0 %v1582
    %2203 = vmatpush.bf16.msra.mxu0 %v1578
    %2204 = vmatpush.bf16.msra.mxu0 %v1574
    %2205 = vmatpush.bf16.msra.mxu0 %v1570
    %2206 = vmatpush.bf16.msra.mxu0 %v1566
    %2207 = vmatpush.bf16.msra.mxu0 %v1562
    %2208 = vmatpush.bf16.msra.mxu0 %v1558
    %2209 = vmatpush.bf16.msra.mxu0 %v1554
    %2210 = vmatmul.bf16.gmra.mxu0 %v2110
    %v2211 = vpop.f32.mrf.mxu0
    %v2212 = vadd.f32 %v2199, %v2211
    %v2213 = vpop.f32.mrf.mxu0
    %2214 = vdwg.mxu0
    %v2215 = vxor.u32 %v2134, 2147483648
    %v2216 = vmul.f32 %v2215, 1.442695
    %v2217 = vpow.pop %v2216
    %v2218 = vadd.f32 %v2217, 1.0
    %v2219 = vrcp.pop %v2218
    %v2220 = vmul.f32 %v2218, %v2219
    %v2221 = vsub.f32 1.0, %v2220
    %v2222 = vmul.f32 %v2219, %v2221
    %v2223 = vadd.f32 %v2219, %v2222
    %vm2224 = vweird.f32 %v2218
    %vm2225 = vweird.f32 %v2219
    %vm2226 = vmor %vm2224, %vm2225
    %v2227 = vsel %vm2226, %v2219, %v2223
    %v2228 = vand.u32 2147483647, %v2218
    %vm2229 = vcmp.eq.f32.partialorder %v2228, 8.507059e+37
    %v2230 = vand.u32 %v2218, 2147483648
    %v2231 = vor.u32 1.1754944e-38, %v2230
    %v2232 = vsel %vm2229, %v2231, %v2227
    %v2233 = vmul.f32 1.0, %v2232
    %v2234 = vxor.u32 %v2160, 2147483648
    %v2235 = vmul.f32 %v2234, 1.442695
    %v2236 = vpow.pop %v2235
    %v2237 = vadd.f32 %v2236, 1.0
    %v2238 = vrcp.pop %v2237
    %v2239 = vmul.f32 %v2237, %v2238
    %v2240 = vsub.f32 1.0, %v2239
    %v2241 = vmul.f32 %v2238, %v2240
    %v2242 = vadd.f32 %v2238, %v2241
    %vm2243 = vweird.f32 %v2237
    %vm2244 = vweird.f32 %v2238
    %vm2245 = vmor %vm2243, %vm2244
    %v2246 = vsel %vm2245, %v2238, %v2242
    %v2247 = vand.u32 2147483647, %v2237
    %vm2248 = vcmp.eq.f32.partialorder %v2247, 8.507059e+37
    %v2249 = vand.u32 %v2237, 2147483648
    %v2250 = vor.u32 1.1754944e-38, %v2249
    %v2251 = vsel %vm2248, %v2250, %v2246
    %v2252 = vmul.f32 1.0, %v2251
    %v2253 = vtanh.pop %v2186
    %v2254 = vxor.u32 %v2212, 2147483648
    %v2255 = vmul.f32 %v2254, 1.442695
    %v2256 = vpow.pop %v2255
    %v2257 = vadd.f32 %v2256, 1.0
    %v2258 = vrcp.pop %v2257
    %v2259 = vmul.f32 %v2257, %v2258
    %v2260 = vsub.f32 1.0, %v2259
    %v2261 = vmul.f32 %v2258, %v2260
    %v2262 = vadd.f32 %v2258, %v2261
    %vm2263 = vweird.f32 %v2257
    %vm2264 = vweird.f32 %v2258
    %vm2265 = vmor %vm2263, %vm2264
    %v2266 = vsel %vm2265, %v2258, %v2262
    %v2267 = vand.u32 2147483647, %v2257
    %vm2268 = vcmp.eq.f32.partialorder %v2267, 8.507059e+37
    %v2269 = vand.u32 %v2257, 2147483648
    %v2270 = vor.u32 1.1754944e-38, %v2269
    %v2271 = vsel %vm2268, %v2270, %v2266
    %v2272 = vmul.f32 1.0, %v2271
    %v2273 = vmul.f32 %v2252, %v1811
    %v2274 = vmul.f32 %v2233, %v2253
    %v2275 = vadd.f32 %v2273, %v2274
    %v2276 = vtanh.pop %v2275
    %v2277 = vmul.f32 %v2272, %v2276
    %s2278 = scalar_lea.vmem [#allocation3], 8
    %2279 = vst [vmem:[%s2278] sm:$0xff] %v2277
    %s2280 = smul.u32 2, 4
    %s2281 = smul.addr %s2280, 8
    %s2282 = scalar_lea.vmem [#allocation2], %s2281
    %v2283 = vld [vmem:[%s2282] sm:$0xff]
    %v2284 = vld [vmem:[%s2282 + $0x8] sm:$0xff]
    %v2285 = vld [vmem:[%s2282 + $0x10] sm:$0xff]
    %v2286 = vld [vmem:[%s2282 + $0x18] sm:$0xff]
    %2287 = vmatpush.bf16.msra.mxu0 %v682
    %2288 = vmatpush.bf16.msra.mxu0 %v678
    %2289 = vmatpush.bf16.msra.mxu0 %v674
    %2290 = vmatpush.bf16.msra.mxu0 %v670
    %2291 = vmatpush.bf16.msra.mxu0 %v666
    %2292 = vmatpush.bf16.msra.mxu0 %v662
    %2293 = vmatpush.bf16.msra.mxu0 %v658
    %2294 = vmatpush.bf16.msra.mxu0 %v654
    %2295 = vmatmul.bf16.gmra.mxu0 %v1941
    %v2296 = vpop.f32.mrf.mxu0
    %v2297 = vadd.f32 0.0, %v2296
    %v2298 = vpop.f32.mrf.mxu0
    %2299 = vdwg.mxu0
    %2300 = vmatpush.bf16.msra.mxu0 %v683
    %2301 = vmatpush.bf16.msra.mxu0 %v679
    %2302 = vmatpush.bf16.msra.mxu0 %v675
    %2303 = vmatpush.bf16.msra.mxu0 %v671
    %2304 = vmatpush.bf16.msra.mxu0 %v667
    %2305 = vmatpush.bf16.msra.mxu0 %v663
    %2306 = vmatpush.bf16.msra.mxu0 %v659
    %2307 = vmatpush.bf16.msra.mxu0 %v655
    %2308 = vmatmul.bf16.gmra.mxu0 %v1941
    %v2309 = vpop.f32.mrf.mxu0
    %v2310 = vadd.f32 0.0, %v2309
    %v2311 = vpop.f32.mrf.mxu0
    %2312 = vdwg.mxu0
    %2313 = vmatpush.bf16.msra.mxu0 %v684
    %2314 = vmatpush.bf16.msra.mxu0 %v680
    %2315 = vmatpush.bf16.msra.mxu0 %v676
    %2316 = vmatpush.bf16.msra.mxu0 %v672
    %2317 = vmatpush.bf16.msra.mxu0 %v668
    %2318 = vmatpush.bf16.msra.mxu0 %v664
    %2319 = vmatpush.bf16.msra.mxu0 %v660
    %2320 = vmatpush.bf16.msra.mxu0 %v656
    %2321 = vmatmul.bf16.gmra.mxu0 %v1941
    %v2322 = vpop.f32.mrf.mxu0
    %v2323 = vadd.f32 0.0, %v2322
    %v2324 = vpop.f32.mrf.mxu0
    %2325 = vdwg.mxu0
    %2326 = vmatpush.bf16.msra.mxu0 %v685
    %2327 = vmatpush.bf16.msra.mxu0 %v681
    %2328 = vmatpush.bf16.msra.mxu0 %v677
    %2329 = vmatpush.bf16.msra.mxu0 %v673
    %2330 = vmatpush.bf16.msra.mxu0 %v669
    %2331 = vmatpush.bf16.msra.mxu0 %v665
    %2332 = vmatpush.bf16.msra.mxu0 %v661
    %2333 = vmatpush.bf16.msra.mxu0 %v657
    %2334 = vmatmul.bf16.gmra.mxu0 %v1941
    %v2335 = vpop.f32.mrf.mxu0
    %v2336 = vadd.f32 0.0, %v2335
    %v2337 = vpop.f32.mrf.mxu0
    %2338 = vdwg.mxu0
    %v2339 = vadd.f32 %v2283, %v2297
    %v2340 = vadd.f32 %v2284, %v2310
    %v2341 = vadd.f32 %v2285, %v2323
    %v2342 = vadd.f32 %v2286, %v2336
    %v2343 = vxor.u32 %v2339, 2147483648
    %v2344 = vmul.f32 %v2343, 1.442695
    %v2345 = vpow.pop %v2344
    %v2346 = vadd.f32 %v2345, 1.0
    %v2347 = vrcp.pop %v2346
    %v2348 = vmul.f32 %v2346, %v2347
    %v2349 = vsub.f32 1.0, %v2348
    %v2350 = vmul.f32 %v2347, %v2349
    %v2351 = vadd.f32 %v2347, %v2350
    %vm2352 = vweird.f32 %v2346
    %vm2353 = vweird.f32 %v2347
    %vm2354 = vmor %vm2352, %vm2353
    %v2355 = vsel %vm2354, %v2347, %v2351
    %v2356 = vand.u32 2147483647, %v2346
    %vm2357 = vcmp.eq.f32.partialorder %v2356, 8.507059e+37
    %v2358 = vand.u32 %v2346, 2147483648
    %v2359 = vor.u32 1.1754944e-38, %v2358
    %v2360 = vsel %vm2357, %v2359, %v2355
    %v2361 = vmul.f32 1.0, %v2360
    %v2362 = vxor.u32 %v2340, 2147483648
    %v2363 = vmul.f32 %v2362, 1.442695
    %v2364 = vpow.pop %v2363
    %v2365 = vadd.f32 %v2364, 1.0
    %v2366 = vrcp.pop %v2365
    %v2367 = vmul.f32 %v2365, %v2366
    %v2368 = vsub.f32 1.0, %v2367
    %v2369 = vmul.f32 %v2366, %v2368
    %v2370 = vadd.f32 %v2366, %v2369
    %vm2371 = vweird.f32 %v2365
    %vm2372 = vweird.f32 %v2366
    %vm2373 = vmor %vm2371, %vm2372
    %v2374 = vsel %vm2373, %v2366, %v2370
    %v2375 = vand.u32 2147483647, %v2365
    %vm2376 = vcmp.eq.f32.partialorder %v2375, 8.507059e+37
    %v2377 = vand.u32 %v2365, 2147483648
    %v2378 = vor.u32 1.1754944e-38, %v2377
    %v2379 = vsel %vm2376, %v2378, %v2374
    %v2380 = vmul.f32 1.0, %v2379
    %v2381 = vtanh.pop %v2341
    %v2382 = vxor.u32 %v2342, 2147483648
    %v2383 = vmul.f32 %v2382, 1.442695
    %v2384 = vpow.pop %v2383
    %v2385 = vadd.f32 %v2384, 1.0
    %v2386 = vrcp.pop %v2385
    %v2387 = vmul.f32 %v2385, %v2386
    %v2388 = vsub.f32 1.0, %v2387
    %v2389 = vmul.f32 %v2386, %v2388
    %v2390 = vadd.f32 %v2386, %v2389
    %vm2391 = vweird.f32 %v2385
    %vm2392 = vweird.f32 %v2386
    %vm2393 = vmor %vm2391, %vm2392
    %v2394 = vsel %vm2393, %v2386, %v2390
    %v2395 = vand.u32 2147483647, %v2385
    %vm2396 = vcmp.eq.f32.partialorder %v2395, 8.507059e+37
    %v2397 = vand.u32 %v2385, 2147483648
    %v2398 = vor.u32 1.1754944e-38, %v2397
    %v2399 = vsel %vm2396, %v2398, %v2394
    %v2400 = vmul.f32 1.0, %v2399
    %v2401 = vmul.f32 %v2380, %v1938
    %v2402 = vmul.f32 %v2361, %v2381
    %v2403 = vadd.f32 %v2401, %v2402
    %v2404 = vtanh.pop %v2403
    %v2405 = vmul.f32 %v2400, %v2404
    %v2406 = vpack.c.bf16 %v2405, %v2405
    %2407 = vmatpush.bf16.msra.mxu0 %v1059
    %2408 = vmatpush.bf16.msra.mxu0 %v1055
    %2409 = vmatpush.bf16.msra.mxu0 %v1051
    %2410 = vmatpush.bf16.msra.mxu0 %v1047
    %2411 = vmatpush.bf16.msra.mxu0 %v1043
    %2412 = vmatpush.bf16.msra.mxu0 %v1039
    %2413 = vmatpush.bf16.msra.mxu0 %v1035
    %2414 = vmatpush.bf16.msra.mxu0 %v1031
    %2415 = vmatmul.bf16.gmra.mxu0 %v2406
    %v2416 = vpop.f32.mrf.mxu0
    %v2417 = vadd.f32 %v533, %v2416
    %v2418 = vpop.f32.mrf.mxu0
    %2419 = vdwg.mxu0
    %2420 = vmatpush.bf16.msra.mxu0 %v1091
    %2421 = vmatpush.bf16.msra.mxu0 %v1087
    %2422 = vmatpush.bf16.msra.mxu0 %v1083
    %2423 = vmatpush.bf16.msra.mxu0 %v1079
    %2424 = vmatpush.bf16.msra.mxu0 %v1075
    %2425 = vmatpush.bf16.msra.mxu0 %v1071
    %2426 = vmatpush.bf16.msra.mxu0 %v1067
    %2427 = vmatpush.bf16.msra.mxu0 %v1063
    %2428 = vmatmul.bf16.gmra.mxu0 %v2109
    %v2429 = vpop.f32.mrf.mxu0
    %v2430 = vadd.f32 %v2417, %v2429
    %v2431 = vpop.f32.mrf.mxu0
    %2432 = vdwg.mxu0
    %2433 = vmatpush.bf16.msra.mxu0 %v1060
    %2434 = vmatpush.bf16.msra.mxu0 %v1056
    %2435 = vmatpush.bf16.msra.mxu0 %v1052
    %2436 = vmatpush.bf16.msra.mxu0 %v1048
    %2437 = vmatpush.bf16.msra.mxu0 %v1044
    %2438 = vmatpush.bf16.msra.mxu0 %v1040
    %2439 = vmatpush.bf16.msra.mxu0 %v1036
    %2440 = vmatpush.bf16.msra.mxu0 %v1032
    %2441 = vmatmul.bf16.gmra.mxu0 %v2406
    %v2442 = vpop.f32.mrf.mxu0
    %v2443 = vadd.f32 %v534, %v2442
    %v2444 = vpop.f32.mrf.mxu0
    %2445 = vdwg.mxu0
    %2446 = vmatpush.bf16.msra.mxu0 %v1092
    %2447 = vmatpush.bf16.msra.mxu0 %v1088
    %2448 = vmatpush.bf16.msra.mxu0 %v1084
    %2449 = vmatpush.bf16.msra.mxu0 %v1080
    %2450 = vmatpush.bf16.msra.mxu0 %v1076
    %2451 = vmatpush.bf16.msra.mxu0 %v1072
    %2452 = vmatpush.bf16.msra.mxu0 %v1068
    %2453 = vmatpush.bf16.msra.mxu0 %v1064
    %2454 = vmatmul.bf16.gmra.mxu0 %v2109
    %v2455 = vpop.f32.mrf.mxu0
    %v2456 = vadd.f32 %v2443, %v2455
    %v2457 = vpop.f32.mrf.mxu0
    %2458 = vdwg.mxu0
    %2459 = vmatpush.bf16.msra.mxu0 %v1061
    %2460 = vmatpush.bf16.msra.mxu0 %v1057
    %2461 = vmatpush.bf16.msra.mxu0 %v1053
    %2462 = vmatpush.bf16.msra.mxu0 %v1049
    %2463 = vmatpush.bf16.msra.mxu0 %v1045
    %2464 = vmatpush.bf16.msra.mxu0 %v1041
    %2465 = vmatpush.bf16.msra.mxu0 %v1037
    %2466 = vmatpush.bf16.msra.mxu0 %v1033
    %2467 = vmatmul.bf16.gmra.mxu0 %v2406
    %v2468 = vpop.f32.mrf.mxu0
    %v2469 = vadd.f32 %v535, %v2468
    %v2470 = vpop.f32.mrf.mxu0
    %2471 = vdwg.mxu0
    %2472 = vmatpush.bf16.msra.mxu0 %v1093
    %2473 = vmatpush.bf16.msra.mxu0 %v1089
    %2474 = vmatpush.bf16.msra.mxu0 %v1085
    %2475 = vmatpush.bf16.msra.mxu0 %v1081
    %2476 = vmatpush.bf16.msra.mxu0 %v1077
    %2477 = vmatpush.bf16.msra.mxu0 %v1073
    %2478 = vmatpush.bf16.msra.mxu0 %v1069
    %2479 = vmatpush.bf16.msra.mxu0 %v1065
    %2480 = vmatmul.bf16.gmra.mxu0 %v2109
    %v2481 = vpop.f32.mrf.mxu0
    %v2482 = vadd.f32 %v2469, %v2481
    %v2483 = vpop.f32.mrf.mxu0
    %2484 = vdwg.mxu0
    %2485 = vmatpush.bf16.msra.mxu0 %v1062
    %2486 = vmatpush.bf16.msra.mxu0 %v1058
    %2487 = vmatpush.bf16.msra.mxu0 %v1054
    %2488 = vmatpush.bf16.msra.mxu0 %v1050
    %2489 = vmatpush.bf16.msra.mxu0 %v1046
    %2490 = vmatpush.bf16.msra.mxu0 %v1042
    %2491 = vmatpush.bf16.msra.mxu0 %v1038
    %2492 = vmatpush.bf16.msra.mxu0 %v1034
    %2493 = vmatmul.bf16.gmra.mxu0 %v2406
    %v2494 = vpop.f32.mrf.mxu0
    %v2495 = vadd.f32 %v536, %v2494
    %v2496 = vpop.f32.mrf.mxu0
    %2497 = vdwg.mxu0
    %2498 = vmatpush.bf16.msra.mxu0 %v1094
    %2499 = vmatpush.bf16.msra.mxu0 %v1090
    %2500 = vmatpush.bf16.msra.mxu0 %v1086
    %2501 = vmatpush.bf16.msra.mxu0 %v1082
    %2502 = vmatpush.bf16.msra.mxu0 %v1078
    %2503 = vmatpush.bf16.msra.mxu0 %v1074
    %2504 = vmatpush.bf16.msra.mxu0 %v1070
    %2505 = vmatpush.bf16.msra.mxu0 %v1066
    %2506 = vmatmul.bf16.gmra.mxu0 %v2109
    %v2507 = vpop.f32.mrf.mxu0
    %v2508 = vadd.f32 %v2495, %v2507
    %v2509 = vpop.f32.mrf.mxu0
    %2510 = vdwg.mxu0
    %v2511 = vxor.u32 %v2430, 2147483648
    %v2512 = vmul.f32 %v2511, 1.442695
    %v2513 = vpow.pop %v2512
    %v2514 = vadd.f32 %v2513, 1.0
    %v2515 = vrcp.pop %v2514
    %v2516 = vmul.f32 %v2514, %v2515
    %v2517 = vsub.f32 1.0, %v2516
    %v2518 = vmul.f32 %v2515, %v2517
    %v2519 = vadd.f32 %v2515, %v2518
    %vm2520 = vweird.f32 %v2514
    %vm2521 = vweird.f32 %v2515
    %vm2522 = vmor %vm2520, %vm2521
    %v2523 = vsel %vm2522, %v2515, %v2519
    %v2524 = vand.u32 2147483647, %v2514
    %vm2525 = vcmp.eq.f32.partialorder %v2524, 8.507059e+37
    %v2526 = vand.u32 %v2514, 2147483648
    %v2527 = vor.u32 1.1754944e-38, %v2526
    %v2528 = vsel %vm2525, %v2527, %v2523
    %v2529 = vmul.f32 1.0, %v2528
    %v2530 = vxor.u32 %v2456, 2147483648
    %v2531 = vmul.f32 %v2530, 1.442695
    %v2532 = vpow.pop %v2531
    %v2533 = vadd.f32 %v2532, 1.0
    %v2534 = vrcp.pop %v2533
    %v2535 = vmul.f32 %v2533, %v2534
    %v2536 = vsub.f32 1.0, %v2535
    %v2537 = vmul.f32 %v2534, %v2536
    %v2538 = vadd.f32 %v2534, %v2537
    %vm2539 = vweird.f32 %v2533
    %vm2540 = vweird.f32 %v2534
    %vm2541 = vmor %vm2539, %vm2540
    %v2542 = vsel %vm2541, %v2534, %v2538
    %v2543 = vand.u32 2147483647, %v2533
    %vm2544 = vcmp.eq.f32.partialorder %v2543, 8.507059e+37
    %v2545 = vand.u32 %v2533, 2147483648
    %v2546 = vor.u32 1.1754944e-38, %v2545
    %v2547 = vsel %vm2544, %v2546, %v2542
    %v2548 = vmul.f32 1.0, %v2547
    %v2549 = vtanh.pop %v2482
    %v2550 = vxor.u32 %v2508, 2147483648
    %v2551 = vmul.f32 %v2550, 1.442695
    %v2552 = vpow.pop %v2551
    %v2553 = vadd.f32 %v2552, 1.0
    %v2554 = vrcp.pop %v2553
    %v2555 = vmul.f32 %v2553, %v2554
    %v2556 = vsub.f32 1.0, %v2555
    %v2557 = vmul.f32 %v2554, %v2556
    %v2558 = vadd.f32 %v2554, %v2557
    %vm2559 = vweird.f32 %v2553
    %vm2560 = vweird.f32 %v2554
    %vm2561 = vmor %vm2559, %vm2560
    %v2562 = vsel %vm2561, %v2554, %v2558
    %v2563 = vand.u32 2147483647, %v2553
    %vm2564 = vcmp.eq.f32.partialorder %v2563, 8.507059e+37
    %v2565 = vand.u32 %v2553, 2147483648
    %v2566 = vor.u32 1.1754944e-38, %v2565
    %v2567 = vsel %vm2564, %v2566, %v2562
    %v2568 = vmul.f32 1.0, %v2567
    %v2569 = vmul.f32 %v2548, %v2106
    %v2570 = vmul.f32 %v2529, %v2549
    %v2571 = vadd.f32 %v2569, %v2570
    %v2572 = vtanh.pop %v2571
    %v2573 = vmul.f32 %v2568, %v2572
    %v2574 = vpack.c.bf16 %v2573, %v2573
    %v2575 = vpack.c.bf16 %v2277, %v2277
    %2576 = vmatpush.bf16.msra.mxu0 %v1547
    %2577 = vmatpush.bf16.msra.mxu0 %v1543
    %2578 = vmatpush.bf16.msra.mxu0 %v1539
    %2579 = vmatpush.bf16.msra.mxu0 %v1535
    %2580 = vmatpush.bf16.msra.mxu0 %v1531
    %2581 = vmatpush.bf16.msra.mxu0 %v1527
    %2582 = vmatpush.bf16.msra.mxu0 %v1523
    %2583 = vmatpush.bf16.msra.mxu0 %v1519
    %2584 = vmatmul.bf16.gmra.mxu0 %v2574
    %v2585 = vpop.f32.mrf.mxu0
    %v2586 = vadd.f32 %v543, %v2585
    %v2587 = vpop.f32.mrf.mxu0
    %2588 = vdwg.mxu0
    %2589 = vmatpush.bf16.msra.mxu0 %v1579
    %2590 = vmatpush.bf16.msra.mxu0 %v1575
    %2591 = vmatpush.bf16.msra.mxu0 %v1571
    %2592 = vmatpush.bf16.msra.mxu0 %v1567
    %2593 = vmatpush.bf16.msra.mxu0 %v1563
    %2594 = vmatpush.bf16.msra.mxu0 %v1559
    %2595 = vmatpush.bf16.msra.mxu0 %v1555
    %2596 = vmatpush.bf16.msra.mxu0 %v1551
    %2597 = vmatmul.bf16.gmra.mxu0 %v2575
    %v2598 = vpop.f32.mrf.mxu0
    %v2599 = vadd.f32 %v2586, %v2598
    %v2600 = vpop.f32.mrf.mxu0
    %2601 = vdwg.mxu0
    %2602 = vmatpush.bf16.msra.mxu0 %v1548
    %2603 = vmatpush.bf16.msra.mxu0 %v1544
    %2604 = vmatpush.bf16.msra.mxu0 %v1540
    %2605 = vmatpush.bf16.msra.mxu0 %v1536
    %2606 = vmatpush.bf16.msra.mxu0 %v1532
    %2607 = vmatpush.bf16.msra.mxu0 %v1528
    %2608 = vmatpush.bf16.msra.mxu0 %v1524
    %2609 = vmatpush.bf16.msra.mxu0 %v1520
    %2610 = vmatmul.bf16.gmra.mxu0 %v2574
    %v2611 = vpop.f32.mrf.mxu0
    %v2612 = vadd.f32 %v544, %v2611
    %v2613 = vpop.f32.mrf.mxu0
    %2614 = vdwg.mxu0
    %2615 = vmatpush.bf16.msra.mxu0 %v1580
    %2616 = vmatpush.bf16.msra.mxu0 %v1576
    %2617 = vmatpush.bf16.msra.mxu0 %v1572
    %2618 = vmatpush.bf16.msra.mxu0 %v1568
    %2619 = vmatpush.bf16.msra.mxu0 %v1564
    %2620 = vmatpush.bf16.msra.mxu0 %v1560
    %2621 = vmatpush.bf16.msra.mxu0 %v1556
    %2622 = vmatpush.bf16.msra.mxu0 %v1552
    %2623 = vmatmul.bf16.gmra.mxu0 %v2575
    %v2624 = vpop.f32.mrf.mxu0
    %v2625 = vadd.f32 %v2612, %v2624
    %v2626 = vpop.f32.mrf.mxu0
    %2627 = vdwg.mxu0
    %2628 = vmatpush.bf16.msra.mxu0 %v1549
    %2629 = vmatpush.bf16.msra.mxu0 %v1545
    %2630 = vmatpush.bf16.msra.mxu0 %v1541
    %2631 = vmatpush.bf16.msra.mxu0 %v1537
    %2632 = vmatpush.bf16.msra.mxu0 %v1533
    %2633 = vmatpush.bf16.msra.mxu0 %v1529
    %2634 = vmatpush.bf16.msra.mxu0 %v1525
    %2635 = vmatpush.bf16.msra.mxu0 %v1521
    %2636 = vmatmul.bf16.gmra.mxu0 %v2574
    %v2637 = vpop.f32.mrf.mxu0
    %v2638 = vadd.f32 %v545, %v2637
    %v2639 = vpop.f32.mrf.mxu0
    %2640 = vdwg.mxu0
    %2641 = vmatpush.bf16.msra.mxu0 %v1581
    %2642 = vmatpush.bf16.msra.mxu0 %v1577
    %2643 = vmatpush.bf16.msra.mxu0 %v1573
    %2644 = vmatpush.bf16.msra.mxu0 %v1569
    %2645 = vmatpush.bf16.msra.mxu0 %v1565
    %2646 = vmatpush.bf16.msra.mxu0 %v1561
    %2647 = vmatpush.bf16.msra.mxu0 %v1557
    %2648 = vmatpush.bf16.msra.mxu0 %v1553
    %2649 = vmatmul.bf16.gmra.mxu0 %v2575
    %v2650 = vpop.f32.mrf.mxu0
    %v2651 = vadd.f32 %v2638, %v2650
    %v2652 = vpop.f32.mrf.mxu0
    %2653 = vdwg.mxu0
    %2654 = vmatpush.bf16.msra.mxu0 %v1550
    %2655 = vmatpush.bf16.msra.mxu0 %v1546
    %2656 = vmatpush.bf16.msra.mxu0 %v1542
    %2657 = vmatpush.bf16.msra.mxu0 %v1538
    %2658 = vmatpush.bf16.msra.mxu0 %v1534
    %2659 = vmatpush.bf16.msra.mxu0 %v1530
    %2660 = vmatpush.bf16.msra.mxu0 %v1526
    %2661 = vmatpush.bf16.msra.mxu0 %v1522
    %2662 = vmatmul.bf16.gmra.mxu0 %v2574
    %v2663 = vpop.f32.mrf.mxu0
    %v2664 = vadd.f32 %v546, %v2663
    %v2665 = vpop.f32.mrf.mxu0
    %2666 = vdwg.mxu0
    %2667 = vmatpush.bf16.msra.mxu0 %v1582
    %2668 = vmatpush.bf16.msra.mxu0 %v1578
    %2669 = vmatpush.bf16.msra.mxu0 %v1574
    %2670 = vmatpush.bf16.msra.mxu0 %v1570
    %2671 = vmatpush.bf16.msra.mxu0 %v1566
    %2672 = vmatpush.bf16.msra.mxu0 %v1562
    %2673 = vmatpush.bf16.msra.mxu0 %v1558
    %2674 = vmatpush.bf16.msra.mxu0 %v1554
    %2675 = vmatmul.bf16.gmra.mxu0 %v2575
    %v2676 = vpop.f32.mrf.mxu0
    %v2677 = vadd.f32 %v2664, %v2676
    %v2678 = vpop.f32.mrf.mxu0
    %2679 = vdwg.mxu0
    %v2680 = vxor.u32 %v2599, 2147483648
    %v2681 = vmul.f32 %v2680, 1.442695
    %v2682 = vpow.pop %v2681
    %v2683 = vadd.f32 %v2682, 1.0
    %v2684 = vrcp.pop %v2683
    %v2685 = vmul.f32 %v2683, %v2684
    %v2686 = vsub.f32 1.0, %v2685
    %v2687 = vmul.f32 %v2684, %v2686
    %v2688 = vadd.f32 %v2684, %v2687
    %vm2689 = vweird.f32 %v2683
    %vm2690 = vweird.f32 %v2684
    %vm2691 = vmor %vm2689, %vm2690
    %v2692 = vsel %vm2691, %v2684, %v2688
    %v2693 = vand.u32 2147483647, %v2683
    %vm2694 = vcmp.eq.f32.partialorder %v2693, 8.507059e+37
    %v2695 = vand.u32 %v2683, 2147483648
    %v2696 = vor.u32 1.1754944e-38, %v2695
    %v2697 = vsel %vm2694, %v2696, %v2692
    %v2698 = vmul.f32 1.0, %v2697
    %v2699 = vxor.u32 %v2625, 2147483648
    %v2700 = vmul.f32 %v2699, 1.442695
    %v2701 = vpow.pop %v2700
    %v2702 = vadd.f32 %v2701, 1.0
    %v2703 = vrcp.pop %v2702
    %v2704 = vmul.f32 %v2702, %v2703
    %v2705 = vsub.f32 1.0, %v2704
    %v2706 = vmul.f32 %v2703, %v2705
    %v2707 = vadd.f32 %v2703, %v2706
    %vm2708 = vweird.f32 %v2702
    %vm2709 = vweird.f32 %v2703
    %vm2710 = vmor %vm2708, %vm2709
    %v2711 = vsel %vm2710, %v2703, %v2707
    %v2712 = vand.u32 2147483647, %v2702
    %vm2713 = vcmp.eq.f32.partialorder %v2712, 8.507059e+37
    %v2714 = vand.u32 %v2702, 2147483648
    %v2715 = vor.u32 1.1754944e-38, %v2714
    %v2716 = vsel %vm2713, %v2715, %v2711
    %v2717 = vmul.f32 1.0, %v2716
    %v2718 = vtanh.pop %v2651
    %v2719 = vxor.u32 %v2677, 2147483648
    %v2720 = vmul.f32 %v2719, 1.442695
    %v2721 = vpow.pop %v2720
    %v2722 = vadd.f32 %v2721, 1.0
    %v2723 = vrcp.pop %v2722
    %v2724 = vmul.f32 %v2722, %v2723
    %v2725 = vsub.f32 1.0, %v2724
    %v2726 = vmul.f32 %v2723, %v2725
    %v2727 = vadd.f32 %v2723, %v2726
    %vm2728 = vweird.f32 %v2722
    %vm2729 = vweird.f32 %v2723
    %vm2730 = vmor %vm2728, %vm2729
    %v2731 = vsel %vm2730, %v2723, %v2727
    %v2732 = vand.u32 2147483647, %v2722
    %vm2733 = vcmp.eq.f32.partialorder %v2732, 8.507059e+37
    %v2734 = vand.u32 %v2722, 2147483648
    %v2735 = vor.u32 1.1754944e-38, %v2734
    %v2736 = vsel %vm2733, %v2735, %v2731
    %v2737 = vmul.f32 1.0, %v2736
    %v2738 = vmul.f32 %v2717, %v2275
    %v2739 = vmul.f32 %v2698, %v2718
    %v2740 = vadd.f32 %v2738, %v2739
    %v2741 = vtanh.pop %v2740
    %v2742 = vmul.f32 %v2737, %v2741
    %s2743 = scalar_lea.vmem [#allocation3], 16
    %2744 = vst [vmem:[%s2743] sm:$0xff] %v2742
    %s2745 = smul.u32 3, 4
    %s2746 = smul.addr %s2745, 8
    %s2747 = scalar_lea.vmem [#allocation2], %s2746
    %v2748 = vld [vmem:[%s2747] sm:$0xff]
    %v2749 = vld [vmem:[%s2747 + $0x8] sm:$0xff]
    %v2750 = vld [vmem:[%s2747 + $0x10] sm:$0xff]
    %v2751 = vld [vmem:[%s2747 + $0x18] sm:$0xff]
    %2752 = vmatpush.bf16.msra.mxu0 %v682
    %2753 = vmatpush.bf16.msra.mxu0 %v678
    %2754 = vmatpush.bf16.msra.mxu0 %v674
    %2755 = vmatpush.bf16.msra.mxu0 %v670
    %2756 = vmatpush.bf16.msra.mxu0 %v666
    %2757 = vmatpush.bf16.msra.mxu0 %v662
    %2758 = vmatpush.bf16.msra.mxu0 %v658
    %2759 = vmatpush.bf16.msra.mxu0 %v654
    %2760 = vmatmul.bf16.gmra.mxu0 %v2406
    %v2761 = vpop.f32.mrf.mxu0
    %v2762 = vadd.f32 0.0, %v2761
    %v2763 = vpop.f32.mrf.mxu0
    %2764 = vdwg.mxu0
    %2765 = vmatpush.bf16.msra.mxu0 %v683
    %2766 = vmatpush.bf16.msra.mxu0 %v679
    %2767 = vmatpush.bf16.msra.mxu0 %v675
    %2768 = vmatpush.bf16.msra.mxu0 %v671
    %2769 = vmatpush.bf16.msra.mxu0 %v667
    %2770 = vmatpush.bf16.msra.mxu0 %v663
    %2771 = vmatpush.bf16.msra.mxu0 %v659
    %2772 = vmatpush.bf16.msra.mxu0 %v655
    %2773 = vmatmul.bf16.gmra.mxu0 %v2406
    %v2774 = vpop.f32.mrf.mxu0
    %v2775 = vadd.f32 0.0, %v2774
    %v2776 = vpop.f32.mrf.mxu0
    %2777 = vdwg.mxu0
    %2778 = vmatpush.bf16.msra.mxu0 %v684
    %2779 = vmatpush.bf16.msra.mxu0 %v680
    %2780 = vmatpush.bf16.msra.mxu0 %v676
    %2781 = vmatpush.bf16.msra.mxu0 %v672
    %2782 = vmatpush.bf16.msra.mxu0 %v668
    %2783 = vmatpush.bf16.msra.mxu0 %v664
    %2784 = vmatpush.bf16.msra.mxu0 %v660
    %2785 = vmatpush.bf16.msra.mxu0 %v656
    %2786 = vmatmul.bf16.gmra.mxu0 %v2406
    %v2787 = vpop.f32.mrf.mxu0
    %v2788 = vadd.f32 0.0, %v2787
    %v2789 = vpop.f32.mrf.mxu0
    %2790 = vdwg.mxu0
    %2791 = vmatpush.bf16.msra.mxu0 %v685
    %2792 = vmatpush.bf16.msra.mxu0 %v681
    %2793 = vmatpush.bf16.msra.mxu0 %v677
    %2794 = vmatpush.bf16.msra.mxu0 %v673
    %2795 = vmatpush.bf16.msra.mxu0 %v669
    %2796 = vmatpush.bf16.msra.mxu0 %v665
    %2797 = vmatpush.bf16.msra.mxu0 %v661
    %2798 = vmatpush.bf16.msra.mxu0 %v657
    %2799 = vmatmul.bf16.gmra.mxu0 %v2406
    %v2800 = vpop.f32.mrf.mxu0
    %v2801 = vadd.f32 0.0, %v2800
    %v2802 = vpop.f32.mrf.mxu0
    %2803 = vdwg.mxu0
    %v2804 = vadd.f32 %v2748, %v2762
    %v2805 = vadd.f32 %v2749, %v2775
    %v2806 = vadd.f32 %v2750, %v2788
    %v2807 = vadd.f32 %v2751, %v2801
    %v2808 = vxor.u32 %v2804, 2147483648
    %v2809 = vmul.f32 %v2808, 1.442695
    %v2810 = vpow.pop %v2809
    %v2811 = vadd.f32 %v2810, 1.0
    %v2812 = vrcp.pop %v2811
    %v2813 = vmul.f32 %v2811, %v2812
    %v2814 = vsub.f32 1.0, %v2813
    %v2815 = vmul.f32 %v2812, %v2814
    %v2816 = vadd.f32 %v2812, %v2815
    %vm2817 = vweird.f32 %v2811
    %vm2818 = vweird.f32 %v2812
    %vm2819 = vmor %vm2817, %vm2818
    %v2820 = vsel %vm2819, %v2812, %v2816
    %v2821 = vand.u32 2147483647, %v2811
    %vm2822 = vcmp.eq.f32.partialorder %v2821, 8.507059e+37
    %v2823 = vand.u32 %v2811, 2147483648
    %v2824 = vor.u32 1.1754944e-38, %v2823
    %v2825 = vsel %vm2822, %v2824, %v2820
    %v2826 = vmul.f32 1.0, %v2825
    %v2827 = vxor.u32 %v2805, 2147483648
    %v2828 = vmul.f32 %v2827, 1.442695
    %v2829 = vpow.pop %v2828
    %v2830 = vadd.f32 %v2829, 1.0
    %v2831 = vrcp.pop %v2830
    %v2832 = vmul.f32 %v2830, %v2831
    %v2833 = vsub.f32 1.0, %v2832
    %v2834 = vmul.f32 %v2831, %v2833
    %v2835 = vadd.f32 %v2831, %v2834
    %vm2836 = vweird.f32 %v2830
    %vm2837 = vweird.f32 %v2831
    %vm2838 = vmor %vm2836, %vm2837
    %v2839 = vsel %vm2838, %v2831, %v2835
    %v2840 = vand.u32 2147483647, %v2830
    %vm2841 = vcmp.eq.f32.partialorder %v2840, 8.507059e+37
    %v2842 = vand.u32 %v2830, 2147483648
    %v2843 = vor.u32 1.1754944e-38, %v2842
    %v2844 = vsel %vm2841, %v2843, %v2839
    %v2845 = vmul.f32 1.0, %v2844
    %v2846 = vtanh.pop %v2806
    %v2847 = vxor.u32 %v2807, 2147483648
    %v2848 = vmul.f32 %v2847, 1.442695
    %v2849 = vpow.pop %v2848
    %v2850 = vadd.f32 %v2849, 1.0
    %v2851 = vrcp.pop %v2850
    %v2852 = vmul.f32 %v2850, %v2851
    %v2853 = vsub.f32 1.0, %v2852
    %v2854 = vmul.f32 %v2851, %v2853
    %v2855 = vadd.f32 %v2851, %v2854
    %vm2856 = vweird.f32 %v2850
    %vm2857 = vweird.f32 %v2851
    %vm2858 = vmor %vm2856, %vm2857
    %v2859 = vsel %vm2858, %v2851, %v2855
    %v2860 = vand.u32 2147483647, %v2850
    %vm2861 = vcmp.eq.f32.partialorder %v2860, 8.507059e+37
    %v2862 = vand.u32 %v2850, 2147483648
    %v2863 = vor.u32 1.1754944e-38, %v2862
    %v2864 = vsel %vm2861, %v2863, %v2859
    %v2865 = vmul.f32 1.0, %v2864
    %v2866 = vmul.f32 %v2845, %v2403
    %v2867 = vmul.f32 %v2826, %v2846
    %v2868 = vadd.f32 %v2866, %v2867
    %v2869 = vtanh.pop %v2868
    %v2870 = vmul.f32 %v2865, %v2869
    %v2871 = vpack.c.bf16 %v2870, %v2870
    %2872 = vmatpush.bf16.msra.mxu0 %v1059
    %2873 = vmatpush.bf16.msra.mxu0 %v1055
    %2874 = vmatpush.bf16.msra.mxu0 %v1051
    %2875 = vmatpush.bf16.msra.mxu0 %v1047
    %2876 = vmatpush.bf16.msra.mxu0 %v1043
    %2877 = vmatpush.bf16.msra.mxu0 %v1039
    %2878 = vmatpush.bf16.msra.mxu0 %v1035
    %2879 = vmatpush.bf16.msra.mxu0 %v1031
    %2880 = vmatmul.bf16.gmra.mxu0 %v2871
    %v2881 = vpop.f32.mrf.mxu0
    %v2882 = vadd.f32 %v533, %v2881
    %v2883 = vpop.f32.mrf.mxu0
    %2884 = vdwg.mxu0
    %2885 = vmatpush.bf16.msra.mxu0 %v1091
    %2886 = vmatpush.bf16.msra.mxu0 %v1087
    %2887 = vmatpush.bf16.msra.mxu0 %v1083
    %2888 = vmatpush.bf16.msra.mxu0 %v1079
    %2889 = vmatpush.bf16.msra.mxu0 %v1075
    %2890 = vmatpush.bf16.msra.mxu0 %v1071
    %2891 = vmatpush.bf16.msra.mxu0 %v1067
    %2892 = vmatpush.bf16.msra.mxu0 %v1063
    %2893 = vmatmul.bf16.gmra.mxu0 %v2574
    %v2894 = vpop.f32.mrf.mxu0
    %v2895 = vadd.f32 %v2882, %v2894
    %v2896 = vpop.f32.mrf.mxu0
    %2897 = vdwg.mxu0
    %2898 = vmatpush.bf16.msra.mxu0 %v1060
    %2899 = vmatpush.bf16.msra.mxu0 %v1056
    %2900 = vmatpush.bf16.msra.mxu0 %v1052
    %2901 = vmatpush.bf16.msra.mxu0 %v1048
    %2902 = vmatpush.bf16.msra.mxu0 %v1044
    %2903 = vmatpush.bf16.msra.mxu0 %v1040
    %2904 = vmatpush.bf16.msra.mxu0 %v1036
    %2905 = vmatpush.bf16.msra.mxu0 %v1032
    %2906 = vmatmul.bf16.gmra.mxu0 %v2871
    %v2907 = vpop.f32.mrf.mxu0
    %v2908 = vadd.f32 %v534, %v2907
    %v2909 = vpop.f32.mrf.mxu0
    %2910 = vdwg.mxu0
    %2911 = vmatpush.bf16.msra.mxu0 %v1092
    %2912 = vmatpush.bf16.msra.mxu0 %v1088
    %2913 = vmatpush.bf16.msra.mxu0 %v1084
    %2914 = vmatpush.bf16.msra.mxu0 %v1080
    %2915 = vmatpush.bf16.msra.mxu0 %v1076
    %2916 = vmatpush.bf16.msra.mxu0 %v1072
    %2917 = vmatpush.bf16.msra.mxu0 %v1068
    %2918 = vmatpush.bf16.msra.mxu0 %v1064
    %2919 = vmatmul.bf16.gmra.mxu0 %v2574
    %v2920 = vpop.f32.mrf.mxu0
    %v2921 = vadd.f32 %v2908, %v2920
    %v2922 = vpop.f32.mrf.mxu0
    %2923 = vdwg.mxu0
    %2924 = vmatpush.bf16.msra.mxu0 %v1061
    %2925 = vmatpush.bf16.msra.mxu0 %v1057
    %2926 = vmatpush.bf16.msra.mxu0 %v1053
    %2927 = vmatpush.bf16.msra.mxu0 %v1049
    %2928 = vmatpush.bf16.msra.mxu0 %v1045
    %2929 = vmatpush.bf16.msra.mxu0 %v1041
    %2930 = vmatpush.bf16.msra.mxu0 %v1037
    %2931 = vmatpush.bf16.msra.mxu0 %v1033
    %2932 = vmatmul.bf16.gmra.mxu0 %v2871
    %v2933 = vpop.f32.mrf.mxu0
    %v2934 = vadd.f32 %v535, %v2933
    %v2935 = vpop.f32.mrf.mxu0
    %2936 = vdwg.mxu0
    %2937 = vmatpush.bf16.msra.mxu0 %v1093
    %2938 = vmatpush.bf16.msra.mxu0 %v1089
    %2939 = vmatpush.bf16.msra.mxu0 %v1085
    %2940 = vmatpush.bf16.msra.mxu0 %v1081
    %2941 = vmatpush.bf16.msra.mxu0 %v1077
    %2942 = vmatpush.bf16.msra.mxu0 %v1073
    %2943 = vmatpush.bf16.msra.mxu0 %v1069
    %2944 = vmatpush.bf16.msra.mxu0 %v1065
    %2945 = vmatmul.bf16.gmra.mxu0 %v2574
    %v2946 = vpop.f32.mrf.mxu0
    %v2947 = vadd.f32 %v2934, %v2946
    %v2948 = vpop.f32.mrf.mxu0
    %2949 = vdwg.mxu0
    %2950 = vmatpush.bf16.msra.mxu0 %v1062
    %2951 = vmatpush.bf16.msra.mxu0 %v1058
    %2952 = vmatpush.bf16.msra.mxu0 %v1054
    %2953 = vmatpush.bf16.msra.mxu0 %v1050
    %2954 = vmatpush.bf16.msra.mxu0 %v1046
    %2955 = vmatpush.bf16.msra.mxu0 %v1042
    %2956 = vmatpush.bf16.msra.mxu0 %v1038
    %2957 = vmatpush.bf16.msra.mxu0 %v1034
    %2958 = vmatmul.bf16.gmra.mxu0 %v2871
    %v2959 = vpop.f32.mrf.mxu0
    %v2960 = vadd.f32 %v536, %v2959
    %v2961 = vpop.f32.mrf.mxu0
    %2962 = vdwg.mxu0
    %2963 = vmatpush.bf16.msra.mxu0 %v1094
    %2964 = vmatpush.bf16.msra.mxu0 %v1090
    %2965 = vmatpush.bf16.msra.mxu0 %v1086
    %2966 = vmatpush.bf16.msra.mxu0 %v1082
    %2967 = vmatpush.bf16.msra.mxu0 %v1078
    %2968 = vmatpush.bf16.msra.mxu0 %v1074
    %2969 = vmatpush.bf16.msra.mxu0 %v1070
    %2970 = vmatpush.bf16.msra.mxu0 %v1066
    %2971 = vmatmul.bf16.gmra.mxu0 %v2574
    %v2972 = vpop.f32.mrf.mxu0
    %v2973 = vadd.f32 %v2960, %v2972
    %v2974 = vpop.f32.mrf.mxu0
    %2975 = vdwg.mxu0
    %v2976 = vxor.u32 %v2895, 2147483648
    %v2977 = vmul.f32 %v2976, 1.442695
    %v2978 = vpow.pop %v2977
    %v2979 = vadd.f32 %v2978, 1.0
    %v2980 = vrcp.pop %v2979
    %v2981 = vmul.f32 %v2979, %v2980
    %v2982 = vsub.f32 1.0, %v2981
    %v2983 = vmul.f32 %v2980, %v2982
    %v2984 = vadd.f32 %v2980, %v2983
    %vm2985 = vweird.f32 %v2979
    %vm2986 = vweird.f32 %v2980
    %vm2987 = vmor %vm2985, %vm2986
    %v2988 = vsel %vm2987, %v2980, %v2984
    %v2989 = vand.u32 2147483647, %v2979
    %vm2990 = vcmp.eq.f32.partialorder %v2989, 8.507059e+37
    %v2991 = vand.u32 %v2979, 2147483648
    %v2992 = vor.u32 1.1754944e-38, %v2991
    %v2993 = vsel %vm2990, %v2992, %v2988
    %v2994 = vmul.f32 1.0, %v2993
    %v2995 = vxor.u32 %v2921, 2147483648
    %v2996 = vmul.f32 %v2995, 1.442695
    %v2997 = vpow.pop %v2996
    %v2998 = vadd.f32 %v2997, 1.0
    %v2999 = vrcp.pop %v2998
    %v3000 = vmul.f32 %v2998, %v2999
    %v3001 = vsub.f32 1.0, %v3000
    %v3002 = vmul.f32 %v2999, %v3001
    %v3003 = vadd.f32 %v2999, %v3002
    %vm3004 = vweird.f32 %v2998
    %vm3005 = vweird.f32 %v2999
    %vm3006 = vmor %vm3004, %vm3005
    %v3007 = vsel %vm3006, %v2999, %v3003
    %v3008 = vand.u32 2147483647, %v2998
    %vm3009 = vcmp.eq.f32.partialorder %v3008, 8.507059e+37
    %v3010 = vand.u32 %v2998, 2147483648
    %v3011 = vor.u32 1.1754944e-38, %v3010
    %v3012 = vsel %vm3009, %v3011, %v3007
    %v3013 = vmul.f32 1.0, %v3012
    %v3014 = vtanh.pop %v2947
    %v3015 = vxor.u32 %v2973, 2147483648
    %v3016 = vmul.f32 %v3015, 1.442695
    %v3017 = vpow.pop %v3016
    %v3018 = vadd.f32 %v3017, 1.0
    %v3019 = vrcp.pop %v3018
    %v3020 = vmul.f32 %v3018, %v3019
    %v3021 = vsub.f32 1.0, %v3020
    %v3022 = vmul.f32 %v3019, %v3021
    %v3023 = vadd.f32 %v3019, %v3022
    %vm3024 = vweird.f32 %v3018
    %vm3025 = vweird.f32 %v3019
    %vm3026 = vmor %vm3024, %vm3025
    %v3027 = vsel %vm3026, %v3019, %v3023
    %v3028 = vand.u32 2147483647, %v3018
    %vm3029 = vcmp.eq.f32.partialorder %v3028, 8.507059e+37
    %v3030 = vand.u32 %v3018, 2147483648
    %v3031 = vor.u32 1.1754944e-38, %v3030
    %v3032 = vsel %vm3029, %v3031, %v3027
    %v3033 = vmul.f32 1.0, %v3032
    %v3034 = vmul.f32 %v3013, %v2571
    %v3035 = vmul.f32 %v2994, %v3014
    %v3036 = vadd.f32 %v3034, %v3035
    %v3037 = vtanh.pop %v3036
    %v3038 = vmul.f32 %v3033, %v3037
    %v3039 = vpack.c.bf16 %v3038, %v3038
    %v3040 = vpack.c.bf16 %v2742, %v2742
    %3041 = vmatpush.bf16.msra.mxu0 %v1547
    %3042 = vmatpush.bf16.msra.mxu0 %v1543
    %3043 = vmatpush.bf16.msra.mxu0 %v1539
    %3044 = vmatpush.bf16.msra.mxu0 %v1535
    %3045 = vmatpush.bf16.msra.mxu0 %v1531
    %3046 = vmatpush.bf16.msra.mxu0 %v1527
    %3047 = vmatpush.bf16.msra.mxu0 %v1523
    %3048 = vmatpush.bf16.msra.mxu0 %v1519
    %3049 = vmatmul.bf16.gmra.mxu0 %v3039
    %v3050 = vpop.f32.mrf.mxu0
    %v3051 = vadd.f32 %v543, %v3050
    %v3052 = vpop.f32.mrf.mxu0
    %3053 = vdwg.mxu0
    %3054 = vmatpush.bf16.msra.mxu0 %v1579
    %3055 = vmatpush.bf16.msra.mxu0 %v1575
    %3056 = vmatpush.bf16.msra.mxu0 %v1571
    %3057 = vmatpush.bf16.msra.mxu0 %v1567
    %3058 = vmatpush.bf16.msra.mxu0 %v1563
    %3059 = vmatpush.bf16.msra.mxu0 %v1559
    %3060 = vmatpush.bf16.msra.mxu0 %v1555
    %3061 = vmatpush.bf16.msra.mxu0 %v1551
    %3062 = vmatmul.bf16.gmra.mxu0 %v3040
    %v3063 = vpop.f32.mrf.mxu0
    %v3064 = vadd.f32 %v3051, %v3063
    %v3065 = vpop.f32.mrf.mxu0
    %3066 = vdwg.mxu0
    %3067 = vmatpush.bf16.msra.mxu0 %v1548
    %3068 = vmatpush.bf16.msra.mxu0 %v1544
    %3069 = vmatpush.bf16.msra.mxu0 %v1540
    %3070 = vmatpush.bf16.msra.mxu0 %v1536
    %3071 = vmatpush.bf16.msra.mxu0 %v1532
    %3072 = vmatpush.bf16.msra.mxu0 %v1528
    %3073 = vmatpush.bf16.msra.mxu0 %v1524
    %3074 = vmatpush.bf16.msra.mxu0 %v1520
    %3075 = vmatmul.bf16.gmra.mxu0 %v3039
    %v3076 = vpop.f32.mrf.mxu0
    %v3077 = vadd.f32 %v544, %v3076
    %v3078 = vpop.f32.mrf.mxu0
    %3079 = vdwg.mxu0
    %3080 = vmatpush.bf16.msra.mxu0 %v1580
    %3081 = vmatpush.bf16.msra.mxu0 %v1576
    %3082 = vmatpush.bf16.msra.mxu0 %v1572
    %3083 = vmatpush.bf16.msra.mxu0 %v1568
    %3084 = vmatpush.bf16.msra.mxu0 %v1564
    %3085 = vmatpush.bf16.msra.mxu0 %v1560
    %3086 = vmatpush.bf16.msra.mxu0 %v1556
    %3087 = vmatpush.bf16.msra.mxu0 %v1552
    %3088 = vmatmul.bf16.gmra.mxu0 %v3040
    %v3089 = vpop.f32.mrf.mxu0
    %v3090 = vadd.f32 %v3077, %v3089
    %v3091 = vpop.f32.mrf.mxu0
    %3092 = vdwg.mxu0
    %3093 = vmatpush.bf16.msra.mxu0 %v1549
    %3094 = vmatpush.bf16.msra.mxu0 %v1545
    %3095 = vmatpush.bf16.msra.mxu0 %v1541
    %3096 = vmatpush.bf16.msra.mxu0 %v1537
    %3097 = vmatpush.bf16.msra.mxu0 %v1533
    %3098 = vmatpush.bf16.msra.mxu0 %v1529
    %3099 = vmatpush.bf16.msra.mxu0 %v1525
    %3100 = vmatpush.bf16.msra.mxu0 %v1521
    %3101 = vmatmul.bf16.gmra.mxu0 %v3039
    %v3102 = vpop.f32.mrf.mxu0
    %v3103 = vadd.f32 %v545, %v3102
    %v3104 = vpop.f32.mrf.mxu0
    %3105 = vdwg.mxu0
    %3106 = vmatpush.bf16.msra.mxu0 %v1581
    %3107 = vmatpush.bf16.msra.mxu0 %v1577
    %3108 = vmatpush.bf16.msra.mxu0 %v1573
    %3109 = vmatpush.bf16.msra.mxu0 %v1569
    %3110 = vmatpush.bf16.msra.mxu0 %v1565
    %3111 = vmatpush.bf16.msra.mxu0 %v1561
    %3112 = vmatpush.bf16.msra.mxu0 %v1557
    %3113 = vmatpush.bf16.msra.mxu0 %v1553
    %3114 = vmatmul.bf16.gmra.mxu0 %v3040
    %v3115 = vpop.f32.mrf.mxu0
    %v3116 = vadd.f32 %v3103, %v3115
    %v3117 = vpop.f32.mrf.mxu0
    %3118 = vdwg.mxu0
    %3119 = vmatpush.bf16.msra.mxu0 %v1550
    %3120 = vmatpush.bf16.msra.mxu0 %v1546
    %3121 = vmatpush.bf16.msra.mxu0 %v1542
    %3122 = vmatpush.bf16.msra.mxu0 %v1538
    %3123 = vmatpush.bf16.msra.mxu0 %v1534
    %3124 = vmatpush.bf16.msra.mxu0 %v1530
    %3125 = vmatpush.bf16.msra.mxu0 %v1526
    %3126 = vmatpush.bf16.msra.mxu0 %v1522
    %3127 = vmatmul.bf16.gmra.mxu0 %v3039
    %v3128 = vpop.f32.mrf.mxu0
    %v3129 = vadd.f32 %v546, %v3128
    %v3130 = vpop.f32.mrf.mxu0
    %3131 = vdwg.mxu0
    %3132 = vmatpush.bf16.msra.mxu0 %v1582
    %3133 = vmatpush.bf16.msra.mxu0 %v1578
    %3134 = vmatpush.bf16.msra.mxu0 %v1574
    %3135 = vmatpush.bf16.msra.mxu0 %v1570
    %3136 = vmatpush.bf16.msra.mxu0 %v1566
    %3137 = vmatpush.bf16.msra.mxu0 %v1562
    %3138 = vmatpush.bf16.msra.mxu0 %v1558
    %3139 = vmatpush.bf16.msra.mxu0 %v1554
    %3140 = vmatmul.bf16.gmra.mxu0 %v3040
    %v3141 = vpop.f32.mrf.mxu0
    %v3142 = vadd.f32 %v3129, %v3141
    %v3143 = vpop.f32.mrf.mxu0
    %3144 = vdwg.mxu0
    %v3145 = vxor.u32 %v3064, 2147483648
    %v3146 = vmul.f32 %v3145, 1.442695
    %v3147 = vpow.pop %v3146
    %v3148 = vadd.f32 %v3147, 1.0
    %v3149 = vrcp.pop %v3148
    %v3150 = vmul.f32 %v3148, %v3149
    %v3151 = vsub.f32 1.0, %v3150
    %v3152 = vmul.f32 %v3149, %v3151
    %v3153 = vadd.f32 %v3149, %v3152
    %vm3154 = vweird.f32 %v3148
    %vm3155 = vweird.f32 %v3149
    %vm3156 = vmor %vm3154, %vm3155
    %v3157 = vsel %vm3156, %v3149, %v3153
    %v3158 = vand.u32 2147483647, %v3148
    %vm3159 = vcmp.eq.f32.partialorder %v3158, 8.507059e+37
    %v3160 = vand.u32 %v3148, 2147483648
    %v3161 = vor.u32 1.1754944e-38, %v3160
    %v3162 = vsel %vm3159, %v3161, %v3157
    %v3163 = vmul.f32 1.0, %v3162
    %v3164 = vxor.u32 %v3090, 2147483648
    %v3165 = vmul.f32 %v3164, 1.442695
    %v3166 = vpow.pop %v3165
    %v3167 = vadd.f32 %v3166, 1.0
    %v3168 = vrcp.pop %v3167
    %v3169 = vmul.f32 %v3167, %v3168
    %v3170 = vsub.f32 1.0, %v3169
    %v3171 = vmul.f32 %v3168, %v3170
    %v3172 = vadd.f32 %v3168, %v3171
    %vm3173 = vweird.f32 %v3167
    %vm3174 = vweird.f32 %v3168
    %vm3175 = vmor %vm3173, %vm3174
    %v3176 = vsel %vm3175, %v3168, %v3172
    %v3177 = vand.u32 2147483647, %v3167
    %vm3178 = vcmp.eq.f32.partialorder %v3177, 8.507059e+37
    %v3179 = vand.u32 %v3167, 2147483648
    %v3180 = vor.u32 1.1754944e-38, %v3179
    %v3181 = vsel %vm3178, %v3180, %v3176
    %v3182 = vmul.f32 1.0, %v3181
    %v3183 = vtanh.pop %v3116
    %v3184 = vxor.u32 %v3142, 2147483648
    %v3185 = vmul.f32 %v3184, 1.442695
    %v3186 = vpow.pop %v3185
    %v3187 = vadd.f32 %v3186, 1.0
    %v3188 = vrcp.pop %v3187
    %v3189 = vmul.f32 %v3187, %v3188
    %v3190 = vsub.f32 1.0, %v3189
    %v3191 = vmul.f32 %v3188, %v3190
    %v3192 = vadd.f32 %v3188, %v3191
    %vm3193 = vweird.f32 %v3187
    %vm3194 = vweird.f32 %v3188
    %vm3195 = vmor %vm3193, %vm3194
    %v3196 = vsel %vm3195, %v3188, %v3192
    %v3197 = vand.u32 2147483647, %v3187
    %vm3198 = vcmp.eq.f32.partialorder %v3197, 8.507059e+37
    %v3199 = vand.u32 %v3187, 2147483648
    %v3200 = vor.u32 1.1754944e-38, %v3199
    %v3201 = vsel %vm3198, %v3200, %v3196
    %v3202 = vmul.f32 1.0, %v3201
    %v3203 = vmul.f32 %v3182, %v2740
    %v3204 = vmul.f32 %v3163, %v3183
    %v3205 = vadd.f32 %v3203, %v3204
    %v3206 = vtanh.pop %v3205
    %v3207 = vmul.f32 %v3202, %v3206
    %s3208 = scalar_lea.vmem [#allocation3], 24
    %3209 = vst [vmem:[%s3208] sm:$0xff] %v3207
    %s3210 = smul.u32 4, 4
    %s3211 = smul.addr %s3210, 8
    %s3212 = scalar_lea.vmem [#allocation2], %s3211
    %v3213 = vld [vmem:[%s3212] sm:$0xff]
    %v3214 = vld [vmem:[%s3212 + $0x8] sm:$0xff]
    %v3215 = vld [vmem:[%s3212 + $0x10] sm:$0xff]
    %v3216 = vld [vmem:[%s3212 + $0x18] sm:$0xff]
    %3217 = vmatpush.bf16.msra.mxu0 %v682
    %3218 = vmatpush.bf16.msra.mxu0 %v678
    %3219 = vmatpush.bf16.msra.mxu0 %v674
    %3220 = vmatpush.bf16.msra.mxu0 %v670
    %3221 = vmatpush.bf16.msra.mxu0 %v666
    %3222 = vmatpush.bf16.msra.mxu0 %v662
    %3223 = vmatpush.bf16.msra.mxu0 %v658
    %3224 = vmatpush.bf16.msra.mxu0 %v654
    %3225 = vmatmul.bf16.gmra.mxu0 %v2871
    %v3226 = vpop.f32.mrf.mxu0
    %v3227 = vadd.f32 0.0, %v3226
    %v3228 = vpop.f32.mrf.mxu0
    %3229 = vdwg.mxu0
    %3230 = vmatpush.bf16.msra.mxu0 %v683
    %3231 = vmatpush.bf16.msra.mxu0 %v679
    %3232 = vmatpush.bf16.msra.mxu0 %v675
    %3233 = vmatpush.bf16.msra.mxu0 %v671
    %3234 = vmatpush.bf16.msra.mxu0 %v667
    %3235 = vmatpush.bf16.msra.mxu0 %v663
    %3236 = vmatpush.bf16.msra.mxu0 %v659
    %3237 = vmatpush.bf16.msra.mxu0 %v655
    %3238 = vmatmul.bf16.gmra.mxu0 %v2871
    %v3239 = vpop.f32.mrf.mxu0
    %v3240 = vadd.f32 0.0, %v3239
    %v3241 = vpop.f32.mrf.mxu0
    %3242 = vdwg.mxu0
    %3243 = vmatpush.bf16.msra.mxu0 %v684
    %3244 = vmatpush.bf16.msra.mxu0 %v680
    %3245 = vmatpush.bf16.msra.mxu0 %v676
    %3246 = vmatpush.bf16.msra.mxu0 %v672
    %3247 = vmatpush.bf16.msra.mxu0 %v668
    %3248 = vmatpush.bf16.msra.mxu0 %v664
    %3249 = vmatpush.bf16.msra.mxu0 %v660
    %3250 = vmatpush.bf16.msra.mxu0 %v656
    %3251 = vmatmul.bf16.gmra.mxu0 %v2871
    %v3252 = vpop.f32.mrf.mxu0
    %v3253 = vadd.f32 0.0, %v3252
    %v3254 = vpop.f32.mrf.mxu0
    %3255 = vdwg.mxu0
    %3256 = vmatpush.bf16.msra.mxu0 %v685
    %3257 = vmatpush.bf16.msra.mxu0 %v681
    %3258 = vmatpush.bf16.msra.mxu0 %v677
    %3259 = vmatpush.bf16.msra.mxu0 %v673
    %3260 = vmatpush.bf16.msra.mxu0 %v669
    %3261 = vmatpush.bf16.msra.mxu0 %v665
    %3262 = vmatpush.bf16.msra.mxu0 %v661
    %3263 = vmatpush.bf16.msra.mxu0 %v657
    %3264 = vmatmul.bf16.gmra.mxu0 %v2871
    %v3265 = vpop.f32.mrf.mxu0
    %v3266 = vadd.f32 0.0, %v3265
    %v3267 = vpop.f32.mrf.mxu0
    %3268 = vdwg.mxu0
    %v3269 = vadd.f32 %v3213, %v3227
    %v3270 = vadd.f32 %v3214, %v3240
    %v3271 = vadd.f32 %v3215, %v3253
    %v3272 = vadd.f32 %v3216, %v3266
    %v3273 = vxor.u32 %v3269, 2147483648
    %v3274 = vmul.f32 %v3273, 1.442695
    %v3275 = vpow.pop %v3274
    %v3276 = vadd.f32 %v3275, 1.0
    %v3277 = vrcp.pop %v3276
    %v3278 = vmul.f32 %v3276, %v3277
    %v3279 = vsub.f32 1.0, %v3278
    %v3280 = vmul.f32 %v3277, %v3279
    %v3281 = vadd.f32 %v3277, %v3280
    %vm3282 = vweird.f32 %v3276
    %vm3283 = vweird.f32 %v3277
    %vm3284 = vmor %vm3282, %vm3283
    %v3285 = vsel %vm3284, %v3277, %v3281
    %v3286 = vand.u32 2147483647, %v3276
    %vm3287 = vcmp.eq.f32.partialorder %v3286, 8.507059e+37
    %v3288 = vand.u32 %v3276, 2147483648
    %v3289 = vor.u32 1.1754944e-38, %v3288
    %v3290 = vsel %vm3287, %v3289, %v3285
    %v3291 = vmul.f32 1.0, %v3290
    %v3292 = vxor.u32 %v3270, 2147483648
    %v3293 = vmul.f32 %v3292, 1.442695
    %v3294 = vpow.pop %v3293
    %v3295 = vadd.f32 %v3294, 1.0
    %v3296 = vrcp.pop %v3295
    %v3297 = vmul.f32 %v3295, %v3296
    %v3298 = vsub.f32 1.0, %v3297
    %v3299 = vmul.f32 %v3296, %v3298
    %v3300 = vadd.f32 %v3296, %v3299
    %vm3301 = vweird.f32 %v3295
    %vm3302 = vweird.f32 %v3296
    %vm3303 = vmor %vm3301, %vm3302
    %v3304 = vsel %vm3303, %v3296, %v3300
    %v3305 = vand.u32 2147483647, %v3295
    %vm3306 = vcmp.eq.f32.partialorder %v3305, 8.507059e+37
    %v3307 = vand.u32 %v3295, 2147483648
    %v3308 = vor.u32 1.1754944e-38, %v3307
    %v3309 = vsel %vm3306, %v3308, %v3304
    %v3310 = vmul.f32 1.0, %v3309
    %v3311 = vtanh.pop %v3271
    %v3312 = vxor.u32 %v3272, 2147483648
    %v3313 = vmul.f32 %v3312, 1.442695
    %v3314 = vpow.pop %v3313
    %v3315 = vadd.f32 %v3314, 1.0
    %v3316 = vrcp.pop %v3315
    %v3317 = vmul.f32 %v3315, %v3316
    %v3318 = vsub.f32 1.0, %v3317
    %v3319 = vmul.f32 %v3316, %v3318
    %v3320 = vadd.f32 %v3316, %v3319
    %vm3321 = vweird.f32 %v3315
    %vm3322 = vweird.f32 %v3316
    %vm3323 = vmor %vm3321, %vm3322
    %v3324 = vsel %vm3323, %v3316, %v3320
    %v3325 = vand.u32 2147483647, %v3315
    %vm3326 = vcmp.eq.f32.partialorder %v3325, 8.507059e+37
    %v3327 = vand.u32 %v3315, 2147483648
    %v3328 = vor.u32 1.1754944e-38, %v3327
    %v3329 = vsel %vm3326, %v3328, %v3324
    %v3330 = vmul.f32 1.0, %v3329
    %v3331 = vmul.f32 %v3310, %v2868
    %v3332 = vmul.f32 %v3291, %v3311
    %v3333 = vadd.f32 %v3331, %v3332
    %v3334 = vtanh.pop %v3333
    %v3335 = vmul.f32 %v3330, %v3334
    %v3336 = vpack.c.bf16 %v3335, %v3335
    %3337 = vmatpush.bf16.msra.mxu0 %v1059
    %3338 = vmatpush.bf16.msra.mxu0 %v1055
    %3339 = vmatpush.bf16.msra.mxu0 %v1051
    %3340 = vmatpush.bf16.msra.mxu0 %v1047
    %3341 = vmatpush.bf16.msra.mxu0 %v1043
    %3342 = vmatpush.bf16.msra.mxu0 %v1039
    %3343 = vmatpush.bf16.msra.mxu0 %v1035
    %3344 = vmatpush.bf16.msra.mxu0 %v1031
    %3345 = vmatmul.bf16.gmra.mxu0 %v3336
    %v3346 = vpop.f32.mrf.mxu0
    %v3347 = vadd.f32 %v533, %v3346
    %v3348 = vpop.f32.mrf.mxu0
    %3349 = vdwg.mxu0
    %3350 = vmatpush.bf16.msra.mxu0 %v1091
    %3351 = vmatpush.bf16.msra.mxu0 %v1087
    %3352 = vmatpush.bf16.msra.mxu0 %v1083
    %3353 = vmatpush.bf16.msra.mxu0 %v1079
    %3354 = vmatpush.bf16.msra.mxu0 %v1075
    %3355 = vmatpush.bf16.msra.mxu0 %v1071
    %3356 = vmatpush.bf16.msra.mxu0 %v1067
    %3357 = vmatpush.bf16.msra.mxu0 %v1063
    %3358 = vmatmul.bf16.gmra.mxu0 %v3039
    %v3359 = vpop.f32.mrf.mxu0
    %v3360 = vadd.f32 %v3347, %v3359
    %v3361 = vpop.f32.mrf.mxu0
    %3362 = vdwg.mxu0
    %3363 = vmatpush.bf16.msra.mxu0 %v1060
    %3364 = vmatpush.bf16.msra.mxu0 %v1056
    %3365 = vmatpush.bf16.msra.mxu0 %v1052
    %3366 = vmatpush.bf16.msra.mxu0 %v1048
    %3367 = vmatpush.bf16.msra.mxu0 %v1044
    %3368 = vmatpush.bf16.msra.mxu0 %v1040
    %3369 = vmatpush.bf16.msra.mxu0 %v1036
    %3370 = vmatpush.bf16.msra.mxu0 %v1032
    %3371 = vmatmul.bf16.gmra.mxu0 %v3336
    %v3372 = vpop.f32.mrf.mxu0
    %v3373 = vadd.f32 %v534, %v3372
    %v3374 = vpop.f32.mrf.mxu0
    %3375 = vdwg.mxu0
    %3376 = vmatpush.bf16.msra.mxu0 %v1092
    %3377 = vmatpush.bf16.msra.mxu0 %v1088
    %3378 = vmatpush.bf16.msra.mxu0 %v1084
    %3379 = vmatpush.bf16.msra.mxu0 %v1080
    %3380 = vmatpush.bf16.msra.mxu0 %v1076
    %3381 = vmatpush.bf16.msra.mxu0 %v1072
    %3382 = vmatpush.bf16.msra.mxu0 %v1068
    %3383 = vmatpush.bf16.msra.mxu0 %v1064
    %3384 = vmatmul.bf16.gmra.mxu0 %v3039
    %v3385 = vpop.f32.mrf.mxu0
    %v3386 = vadd.f32 %v3373, %v3385
    %v3387 = vpop.f32.mrf.mxu0
    %3388 = vdwg.mxu0
    %3389 = vmatpush.bf16.msra.mxu0 %v1061
    %3390 = vmatpush.bf16.msra.mxu0 %v1057
    %3391 = vmatpush.bf16.msra.mxu0 %v1053
    %3392 = vmatpush.bf16.msra.mxu0 %v1049
    %3393 = vmatpush.bf16.msra.mxu0 %v1045
    %3394 = vmatpush.bf16.msra.mxu0 %v1041
    %3395 = vmatpush.bf16.msra.mxu0 %v1037
    %3396 = vmatpush.bf16.msra.mxu0 %v1033
    %3397 = vmatmul.bf16.gmra.mxu0 %v3336
    %v3398 = vpop.f32.mrf.mxu0
    %v3399 = vadd.f32 %v535, %v3398
    %v3400 = vpop.f32.mrf.mxu0
    %3401 = vdwg.mxu0
    %3402 = vmatpush.bf16.msra.mxu0 %v1093
    %3403 = vmatpush.bf16.msra.mxu0 %v1089
    %3404 = vmatpush.bf16.msra.mxu0 %v1085
    %3405 = vmatpush.bf16.msra.mxu0 %v1081
    %3406 = vmatpush.bf16.msra.mxu0 %v1077
    %3407 = vmatpush.bf16.msra.mxu0 %v1073
    %3408 = vmatpush.bf16.msra.mxu0 %v1069
    %3409 = vmatpush.bf16.msra.mxu0 %v1065
    %3410 = vmatmul.bf16.gmra.mxu0 %v3039
    %v3411 = vpop.f32.mrf.mxu0
    %v3412 = vadd.f32 %v3399, %v3411
    %v3413 = vpop.f32.mrf.mxu0
    %3414 = vdwg.mxu0
    %3415 = vmatpush.bf16.msra.mxu0 %v1062
    %3416 = vmatpush.bf16.msra.mxu0 %v1058
    %3417 = vmatpush.bf16.msra.mxu0 %v1054
    %3418 = vmatpush.bf16.msra.mxu0 %v1050
    %3419 = vmatpush.bf16.msra.mxu0 %v1046
    %3420 = vmatpush.bf16.msra.mxu0 %v1042
    %3421 = vmatpush.bf16.msra.mxu0 %v1038
    %3422 = vmatpush.bf16.msra.mxu0 %v1034
    %3423 = vmatmul.bf16.gmra.mxu0 %v3336
    %v3424 = vpop.f32.mrf.mxu0
    %v3425 = vadd.f32 %v536, %v3424
    %v3426 = vpop.f32.mrf.mxu0
    %3427 = vdwg.mxu0
    %3428 = vmatpush.bf16.msra.mxu0 %v1094
    %3429 = vmatpush.bf16.msra.mxu0 %v1090
    %3430 = vmatpush.bf16.msra.mxu0 %v1086
    %3431 = vmatpush.bf16.msra.mxu0 %v1082
    %3432 = vmatpush.bf16.msra.mxu0 %v1078
    %3433 = vmatpush.bf16.msra.mxu0 %v1074
    %3434 = vmatpush.bf16.msra.mxu0 %v1070
    %3435 = vmatpush.bf16.msra.mxu0 %v1066
    %3436 = vmatmul.bf16.gmra.mxu0 %v3039
    %v3437 = vpop.f32.mrf.mxu0
    %v3438 = vadd.f32 %v3425, %v3437
    %v3439 = vpop.f32.mrf.mxu0
    %3440 = vdwg.mxu0
    %v3441 = vxor.u32 %v3360, 2147483648
    %v3442 = vmul.f32 %v3441, 1.442695
    %v3443 = vpow.pop %v3442
    %v3444 = vadd.f32 %v3443, 1.0
    %v3445 = vrcp.pop %v3444
    %v3446 = vmul.f32 %v3444, %v3445
    %v3447 = vsub.f32 1.0, %v3446
    %v3448 = vmul.f32 %v3445, %v3447
    %v3449 = vadd.f32 %v3445, %v3448
    %vm3450 = vweird.f32 %v3444
    %vm3451 = vweird.f32 %v3445
    %vm3452 = vmor %vm3450, %vm3451
    %v3453 = vsel %vm3452, %v3445, %v3449
    %v3454 = vand.u32 2147483647, %v3444
    %vm3455 = vcmp.eq.f32.partialorder %v3454, 8.507059e+37
    %v3456 = vand.u32 %v3444, 2147483648
    %v3457 = vor.u32 1.1754944e-38, %v3456
    %v3458 = vsel %vm3455, %v3457, %v3453
    %v3459 = vmul.f32 1.0, %v3458
    %v3460 = vxor.u32 %v3386, 2147483648
    %v3461 = vmul.f32 %v3460, 1.442695
    %v3462 = vpow.pop %v3461
    %v3463 = vadd.f32 %v3462, 1.0
    %v3464 = vrcp.pop %v3463
    %v3465 = vmul.f32 %v3463, %v3464
    %v3466 = vsub.f32 1.0, %v3465
    %v3467 = vmul.f32 %v3464, %v3466
    %v3468 = vadd.f32 %v3464, %v3467
    %vm3469 = vweird.f32 %v3463
    %vm3470 = vweird.f32 %v3464
    %vm3471 = vmor %vm3469, %vm3470
    %v3472 = vsel %vm3471, %v3464, %v3468
    %v3473 = vand.u32 2147483647, %v3463
    %vm3474 = vcmp.eq.f32.partialorder %v3473, 8.507059e+37
    %v3475 = vand.u32 %v3463, 2147483648
    %v3476 = vor.u32 1.1754944e-38, %v3475
    %v3477 = vsel %vm3474, %v3476, %v3472
    %v3478 = vmul.f32 1.0, %v3477
    %v3479 = vtanh.pop %v3412
    %v3480 = vxor.u32 %v3438, 2147483648
    %v3481 = vmul.f32 %v3480, 1.442695
    %v3482 = vpow.pop %v3481
    %v3483 = vadd.f32 %v3482, 1.0
    %v3484 = vrcp.pop %v3483
    %v3485 = vmul.f32 %v3483, %v3484
    %v3486 = vsub.f32 1.0, %v3485
    %v3487 = vmul.f32 %v3484, %v3486
    %v3488 = vadd.f32 %v3484, %v3487
    %vm3489 = vweird.f32 %v3483
    %vm3490 = vweird.f32 %v3484
    %vm3491 = vmor %vm3489, %vm3490
    %v3492 = vsel %vm3491, %v3484, %v3488
    %v3493 = vand.u32 2147483647, %v3483
    %vm3494 = vcmp.eq.f32.partialorder %v3493, 8.507059e+37
    %v3495 = vand.u32 %v3483, 2147483648
    %v3496 = vor.u32 1.1754944e-38, %v3495
    %v3497 = vsel %vm3494, %v3496, %v3492
    %v3498 = vmul.f32 1.0, %v3497
    %v3499 = vmul.f32 %v3478, %v3036
    %v3500 = vmul.f32 %v3459, %v3479
    %v3501 = vadd.f32 %v3499, %v3500
    %v3502 = vtanh.pop %v3501
    %v3503 = vmul.f32 %v3498, %v3502
    %v3504 = vpack.c.bf16 %v3503, %v3503
    %v3505 = vpack.c.bf16 %v3207, %v3207
    %3506 = vmatpush.bf16.msra.mxu0 %v1547
    %3507 = vmatpush.bf16.msra.mxu0 %v1543
    %3508 = vmatpush.bf16.msra.mxu0 %v1539
    %3509 = vmatpush.bf16.msra.mxu0 %v1535
    %3510 = vmatpush.bf16.msra.mxu0 %v1531
    %3511 = vmatpush.bf16.msra.mxu0 %v1527
    %3512 = vmatpush.bf16.msra.mxu0 %v1523
    %3513 = vmatpush.bf16.msra.mxu0 %v1519
    %3514 = vmatmul.bf16.gmra.mxu0 %v3504
    %v3515 = vpop.f32.mrf.mxu0
    %v3516 = vadd.f32 %v543, %v3515
    %v3517 = vpop.f32.mrf.mxu0
    %3518 = vdwg.mxu0
    %3519 = vmatpush.bf16.msra.mxu0 %v1579
    %3520 = vmatpush.bf16.msra.mxu0 %v1575
    %3521 = vmatpush.bf16.msra.mxu0 %v1571
    %3522 = vmatpush.bf16.msra.mxu0 %v1567
    %3523 = vmatpush.bf16.msra.mxu0 %v1563
    %3524 = vmatpush.bf16.msra.mxu0 %v1559
    %3525 = vmatpush.bf16.msra.mxu0 %v1555
    %3526 = vmatpush.bf16.msra.mxu0 %v1551
    %3527 = vmatmul.bf16.gmra.mxu0 %v3505
    %v3528 = vpop.f32.mrf.mxu0
    %v3529 = vadd.f32 %v3516, %v3528
    %v3530 = vpop.f32.mrf.mxu0
    %3531 = vdwg.mxu0
    %3532 = vmatpush.bf16.msra.mxu0 %v1548
    %3533 = vmatpush.bf16.msra.mxu0 %v1544
    %3534 = vmatpush.bf16.msra.mxu0 %v1540
    %3535 = vmatpush.bf16.msra.mxu0 %v1536
    %3536 = vmatpush.bf16.msra.mxu0 %v1532
    %3537 = vmatpush.bf16.msra.mxu0 %v1528
    %3538 = vmatpush.bf16.msra.mxu0 %v1524
    %3539 = vmatpush.bf16.msra.mxu0 %v1520
    %3540 = vmatmul.bf16.gmra.mxu0 %v3504
    %v3541 = vpop.f32.mrf.mxu0
    %v3542 = vadd.f32 %v544, %v3541
    %v3543 = vpop.f32.mrf.mxu0
    %3544 = vdwg.mxu0
    %3545 = vmatpush.bf16.msra.mxu0 %v1580
    %3546 = vmatpush.bf16.msra.mxu0 %v1576
    %3547 = vmatpush.bf16.msra.mxu0 %v1572
    %3548 = vmatpush.bf16.msra.mxu0 %v1568
    %3549 = vmatpush.bf16.msra.mxu0 %v1564
    %3550 = vmatpush.bf16.msra.mxu0 %v1560
    %3551 = vmatpush.bf16.msra.mxu0 %v1556
    %3552 = vmatpush.bf16.msra.mxu0 %v1552
    %3553 = vmatmul.bf16.gmra.mxu0 %v3505
    %v3554 = vpop.f32.mrf.mxu0
    %v3555 = vadd.f32 %v3542, %v3554
    %v3556 = vpop.f32.mrf.mxu0
    %3557 = vdwg.mxu0
    %3558 = vmatpush.bf16.msra.mxu0 %v1549
    %3559 = vmatpush.bf16.msra.mxu0 %v1545
    %3560 = vmatpush.bf16.msra.mxu0 %v1541
    %3561 = vmatpush.bf16.msra.mxu0 %v1537
    %3562 = vmatpush.bf16.msra.mxu0 %v1533
    %3563 = vmatpush.bf16.msra.mxu0 %v1529
    %3564 = vmatpush.bf16.msra.mxu0 %v1525
    %3565 = vmatpush.bf16.msra.mxu0 %v1521
    %3566 = vmatmul.bf16.gmra.mxu0 %v3504
    %v3567 = vpop.f32.mrf.mxu0
    %v3568 = vadd.f32 %v545, %v3567
    %v3569 = vpop.f32.mrf.mxu0
    %3570 = vdwg.mxu0
    %3571 = vmatpush.bf16.msra.mxu0 %v1581
    %3572 = vmatpush.bf16.msra.mxu0 %v1577
    %3573 = vmatpush.bf16.msra.mxu0 %v1573
    %3574 = vmatpush.bf16.msra.mxu0 %v1569
    %3575 = vmatpush.bf16.msra.mxu0 %v1565
    %3576 = vmatpush.bf16.msra.mxu0 %v1561
    %3577 = vmatpush.bf16.msra.mxu0 %v1557
    %3578 = vmatpush.bf16.msra.mxu0 %v1553
    %3579 = vmatmul.bf16.gmra.mxu0 %v3505
    %v3580 = vpop.f32.mrf.mxu0
    %v3581 = vadd.f32 %v3568, %v3580
    %v3582 = vpop.f32.mrf.mxu0
    %3583 = vdwg.mxu0
    %3584 = vmatpush.bf16.msra.mxu0 %v1550
    %3585 = vmatpush.bf16.msra.mxu0 %v1546
    %3586 = vmatpush.bf16.msra.mxu0 %v1542
    %3587 = vmatpush.bf16.msra.mxu0 %v1538
    %3588 = vmatpush.bf16.msra.mxu0 %v1534
    %3589 = vmatpush.bf16.msra.mxu0 %v1530
    %3590 = vmatpush.bf16.msra.mxu0 %v1526
    %3591 = vmatpush.bf16.msra.mxu0 %v1522
    %3592 = vmatmul.bf16.gmra.mxu0 %v3504
    %v3593 = vpop.f32.mrf.mxu0
    %v3594 = vadd.f32 %v546, %v3593
    %v3595 = vpop.f32.mrf.mxu0
    %3596 = vdwg.mxu0
    %3597 = vmatpush.bf16.msra.mxu0 %v1582
    %3598 = vmatpush.bf16.msra.mxu0 %v1578
    %3599 = vmatpush.bf16.msra.mxu0 %v1574
    %3600 = vmatpush.bf16.msra.mxu0 %v1570
    %3601 = vmatpush.bf16.msra.mxu0 %v1566
    %3602 = vmatpush.bf16.msra.mxu0 %v1562
    %3603 = vmatpush.bf16.msra.mxu0 %v1558
    %3604 = vmatpush.bf16.msra.mxu0 %v1554
    %3605 = vmatmul.bf16.gmra.mxu0 %v3505
    %v3606 = vpop.f32.mrf.mxu0
    %v3607 = vadd.f32 %v3594, %v3606
    %v3608 = vpop.f32.mrf.mxu0
    %3609 = vdwg.mxu0
    %v3610 = vxor.u32 %v3529, 2147483648
    %v3611 = vmul.f32 %v3610, 1.442695
    %v3612 = vpow.pop %v3611
    %v3613 = vadd.f32 %v3612, 1.0
    %v3614 = vrcp.pop %v3613
    %v3615 = vmul.f32 %v3613, %v3614
    %v3616 = vsub.f32 1.0, %v3615
    %v3617 = vmul.f32 %v3614, %v3616
    %v3618 = vadd.f32 %v3614, %v3617
    %vm3619 = vweird.f32 %v3613
    %vm3620 = vweird.f32 %v3614
    %vm3621 = vmor %vm3619, %vm3620
    %v3622 = vsel %vm3621, %v3614, %v3618
    %v3623 = vand.u32 2147483647, %v3613
    %vm3624 = vcmp.eq.f32.partialorder %v3623, 8.507059e+37
    %v3625 = vand.u32 %v3613, 2147483648
    %v3626 = vor.u32 1.1754944e-38, %v3625
    %v3627 = vsel %vm3624, %v3626, %v3622
    %v3628 = vmul.f32 1.0, %v3627
    %v3629 = vxor.u32 %v3555, 2147483648
    %v3630 = vmul.f32 %v3629, 1.442695
    %v3631 = vpow.pop %v3630
    %v3632 = vadd.f32 %v3631, 1.0
    %v3633 = vrcp.pop %v3632
    %v3634 = vmul.f32 %v3632, %v3633
    %v3635 = vsub.f32 1.0, %v3634
    %v3636 = vmul.f32 %v3633, %v3635
    %v3637 = vadd.f32 %v3633, %v3636
    %vm3638 = vweird.f32 %v3632
    %vm3639 = vweird.f32 %v3633
    %vm3640 = vmor %vm3638, %vm3639
    %v3641 = vsel %vm3640, %v3633, %v3637
    %v3642 = vand.u32 2147483647, %v3632
    %vm3643 = vcmp.eq.f32.partialorder %v3642, 8.507059e+37
    %v3644 = vand.u32 %v3632, 2147483648
    %v3645 = vor.u32 1.1754944e-38, %v3644
    %v3646 = vsel %vm3643, %v3645, %v3641
    %v3647 = vmul.f32 1.0, %v3646
    %v3648 = vtanh.pop %v3581
    %v3649 = vxor.u32 %v3607, 2147483648
    %v3650 = vmul.f32 %v3649, 1.442695
    %v3651 = vpow.pop %v3650
    %v3652 = vadd.f32 %v3651, 1.0
    %v3653 = vrcp.pop %v3652
    %v3654 = vmul.f32 %v3652, %v3653
    %v3655 = vsub.f32 1.0, %v3654
    %v3656 = vmul.f32 %v3653, %v3655
    %v3657 = vadd.f32 %v3653, %v3656
    %vm3658 = vweird.f32 %v3652
    %vm3659 = vweird.f32 %v3653
    %vm3660 = vmor %vm3658, %vm3659
    %v3661 = vsel %vm3660, %v3653, %v3657
    %v3662 = vand.u32 2147483647, %v3652
    %vm3663 = vcmp.eq.f32.partialorder %v3662, 8.507059e+37
    %v3664 = vand.u32 %v3652, 2147483648
    %v3665 = vor.u32 1.1754944e-38, %v3664
    %v3666 = vsel %vm3663, %v3665, %v3661
    %v3667 = vmul.f32 1.0, %v3666
    %v3668 = vmul.f32 %v3647, %v3205
    %v3669 = vmul.f32 %v3628, %v3648
    %v3670 = vadd.f32 %v3668, %v3669
    %v3671 = vtanh.pop %v3670
    %v3672 = vmul.f32 %v3667, %v3671
    %s3673 = scalar_lea.vmem [#allocation3], 32
    %3674 = vst [vmem:[%s3673] sm:$0xff] %v3672
    %s3675 = smul.u32 5, 4
    %s3676 = smul.addr %s3675, 8
    %s3677 = scalar_lea.vmem [#allocation2], %s3676
    %v3678 = vld [vmem:[%s3677] sm:$0xff]
    %v3679 = vld [vmem:[%s3677 + $0x8] sm:$0xff]
    %v3680 = vld [vmem:[%s3677 + $0x10] sm:$0xff]
    %v3681 = vld [vmem:[%s3677 + $0x18] sm:$0xff]
    %3682 = vmatpush.bf16.msra.mxu0 %v682
    %3683 = vmatpush.bf16.msra.mxu0 %v678
    %3684 = vmatpush.bf16.msra.mxu0 %v674
    %3685 = vmatpush.bf16.msra.mxu0 %v670
    %3686 = vmatpush.bf16.msra.mxu0 %v666
    %3687 = vmatpush.bf16.msra.mxu0 %v662
    %3688 = vmatpush.bf16.msra.mxu0 %v658
    %3689 = vmatpush.bf16.msra.mxu0 %v654
    %3690 = vmatmul.bf16.gmra.mxu0 %v3336
    %v3691 = vpop.f32.mrf.mxu0
    %v3692 = vadd.f32 0.0, %v3691
    %v3693 = vpop.f32.mrf.mxu0
    %3694 = vdwg.mxu0
    %3695 = vmatpush.bf16.msra.mxu0 %v683
    %3696 = vmatpush.bf16.msra.mxu0 %v679
    %3697 = vmatpush.bf16.msra.mxu0 %v675
    %3698 = vmatpush.bf16.msra.mxu0 %v671
    %3699 = vmatpush.bf16.msra.mxu0 %v667
    %3700 = vmatpush.bf16.msra.mxu0 %v663
    %3701 = vmatpush.bf16.msra.mxu0 %v659
    %3702 = vmatpush.bf16.msra.mxu0 %v655
    %3703 = vmatmul.bf16.gmra.mxu0 %v3336
    %v3704 = vpop.f32.mrf.mxu0
    %v3705 = vadd.f32 0.0, %v3704
    %v3706 = vpop.f32.mrf.mxu0
    %3707 = vdwg.mxu0
    %3708 = vmatpush.bf16.msra.mxu0 %v684
    %3709 = vmatpush.bf16.msra.mxu0 %v680
    %3710 = vmatpush.bf16.msra.mxu0 %v676
    %3711 = vmatpush.bf16.msra.mxu0 %v672
    %3712 = vmatpush.bf16.msra.mxu0 %v668
    %3713 = vmatpush.bf16.msra.mxu0 %v664
    %3714 = vmatpush.bf16.msra.mxu0 %v660
    %3715 = vmatpush.bf16.msra.mxu0 %v656
    %3716 = vmatmul.bf16.gmra.mxu0 %v3336
    %v3717 = vpop.f32.mrf.mxu0
    %v3718 = vadd.f32 0.0, %v3717
    %v3719 = vpop.f32.mrf.mxu0
    %3720 = vdwg.mxu0
    %3721 = vmatpush.bf16.msra.mxu0 %v685
    %3722 = vmatpush.bf16.msra.mxu0 %v681
    %3723 = vmatpush.bf16.msra.mxu0 %v677
    %3724 = vmatpush.bf16.msra.mxu0 %v673
    %3725 = vmatpush.bf16.msra.mxu0 %v669
    %3726 = vmatpush.bf16.msra.mxu0 %v665
    %3727 = vmatpush.bf16.msra.mxu0 %v661
    %3728 = vmatpush.bf16.msra.mxu0 %v657
    %3729 = vmatmul.bf16.gmra.mxu0 %v3336
    %v3730 = vpop.f32.mrf.mxu0
    %v3731 = vadd.f32 0.0, %v3730
    %v3732 = vpop.f32.mrf.mxu0
    %3733 = vdwg.mxu0
    %v3734 = vadd.f32 %v3678, %v3692
    %v3735 = vadd.f32 %v3679, %v3705
    %v3736 = vadd.f32 %v3680, %v3718
    %v3737 = vadd.f32 %v3681, %v3731
    %v3738 = vxor.u32 %v3734, 2147483648
    %v3739 = vmul.f32 %v3738, 1.442695
    %v3740 = vpow.pop %v3739
    %v3741 = vadd.f32 %v3740, 1.0
    %v3742 = vrcp.pop %v3741
    %v3743 = vmul.f32 %v3741, %v3742
    %v3744 = vsub.f32 1.0, %v3743
    %v3745 = vmul.f32 %v3742, %v3744
    %v3746 = vadd.f32 %v3742, %v3745
    %vm3747 = vweird.f32 %v3741
    %vm3748 = vweird.f32 %v3742
    %vm3749 = vmor %vm3747, %vm3748
    %v3750 = vsel %vm3749, %v3742, %v3746
    %v3751 = vand.u32 2147483647, %v3741
    %vm3752 = vcmp.eq.f32.partialorder %v3751, 8.507059e+37
    %v3753 = vand.u32 %v3741, 2147483648
    %v3754 = vor.u32 1.1754944e-38, %v3753
    %v3755 = vsel %vm3752, %v3754, %v3750
    %v3756 = vmul.f32 1.0, %v3755
    %v3757 = vxor.u32 %v3735, 2147483648
    %v3758 = vmul.f32 %v3757, 1.442695
    %v3759 = vpow.pop %v3758
    %v3760 = vadd.f32 %v3759, 1.0
    %v3761 = vrcp.pop %v3760
    %v3762 = vmul.f32 %v3760, %v3761
    %v3763 = vsub.f32 1.0, %v3762
    %v3764 = vmul.f32 %v3761, %v3763
    %v3765 = vadd.f32 %v3761, %v3764
    %vm3766 = vweird.f32 %v3760
    %vm3767 = vweird.f32 %v3761
    %vm3768 = vmor %vm3766, %vm3767
    %v3769 = vsel %vm3768, %v3761, %v3765
    %v3770 = vand.u32 2147483647, %v3760
    %vm3771 = vcmp.eq.f32.partialorder %v3770, 8.507059e+37
    %v3772 = vand.u32 %v3760, 2147483648
    %v3773 = vor.u32 1.1754944e-38, %v3772
    %v3774 = vsel %vm3771, %v3773, %v3769
    %v3775 = vmul.f32 1.0, %v3774
    %v3776 = vtanh.pop %v3736
    %v3777 = vxor.u32 %v3737, 2147483648
    %v3778 = vmul.f32 %v3777, 1.442695
    %v3779 = vpow.pop %v3778
    %v3780 = vadd.f32 %v3779, 1.0
    %v3781 = vrcp.pop %v3780
    %v3782 = vmul.f32 %v3780, %v3781
    %v3783 = vsub.f32 1.0, %v3782
    %v3784 = vmul.f32 %v3781, %v3783
    %v3785 = vadd.f32 %v3781, %v3784
    %vm3786 = vweird.f32 %v3780
    %vm3787 = vweird.f32 %v3781
    %vm3788 = vmor %vm3786, %vm3787
    %v3789 = vsel %vm3788, %v3781, %v3785
    %v3790 = vand.u32 2147483647, %v3780
    %vm3791 = vcmp.eq.f32.partialorder %v3790, 8.507059e+37
    %v3792 = vand.u32 %v3780, 2147483648
    %v3793 = vor.u32 1.1754944e-38, %v3792
    %v3794 = vsel %vm3791, %v3793, %v3789
    %v3795 = vmul.f32 1.0, %v3794
    %v3796 = vmul.f32 %v3775, %v3333
    %v3797 = vmul.f32 %v3756, %v3776
    %v3798 = vadd.f32 %v3796, %v3797
    %v3799 = vtanh.pop %v3798
    %v3800 = vmul.f32 %v3795, %v3799
    %v3801 = vpack.c.bf16 %v3800, %v3800
    %3802 = vmatpush.bf16.msra.mxu0 %v1059
    %3803 = vmatpush.bf16.msra.mxu0 %v1055
    %3804 = vmatpush.bf16.msra.mxu0 %v1051
    %3805 = vmatpush.bf16.msra.mxu0 %v1047
    %3806 = vmatpush.bf16.msra.mxu0 %v1043
    %3807 = vmatpush.bf16.msra.mxu0 %v1039
    %3808 = vmatpush.bf16.msra.mxu0 %v1035
    %3809 = vmatpush.bf16.msra.mxu0 %v1031
    %3810 = vmatmul.bf16.gmra.mxu0 %v3801
    %v3811 = vpop.f32.mrf.mxu0
    %v3812 = vadd.f32 %v533, %v3811
    %v3813 = vpop.f32.mrf.mxu0
    %3814 = vdwg.mxu0
    %3815 = vmatpush.bf16.msra.mxu0 %v1091
    %3816 = vmatpush.bf16.msra.mxu0 %v1087
    %3817 = vmatpush.bf16.msra.mxu0 %v1083
    %3818 = vmatpush.bf16.msra.mxu0 %v1079
    %3819 = vmatpush.bf16.msra.mxu0 %v1075
    %3820 = vmatpush.bf16.msra.mxu0 %v1071
    %3821 = vmatpush.bf16.msra.mxu0 %v1067
    %3822 = vmatpush.bf16.msra.mxu0 %v1063
    %3823 = vmatmul.bf16.gmra.mxu0 %v3504
    %v3824 = vpop.f32.mrf.mxu0
    %v3825 = vadd.f32 %v3812, %v3824
    %v3826 = vpop.f32.mrf.mxu0
    %3827 = vdwg.mxu0
    %3828 = vmatpush.bf16.msra.mxu0 %v1060
    %3829 = vmatpush.bf16.msra.mxu0 %v1056
    %3830 = vmatpush.bf16.msra.mxu0 %v1052
    %3831 = vmatpush.bf16.msra.mxu0 %v1048
    %3832 = vmatpush.bf16.msra.mxu0 %v1044
    %3833 = vmatpush.bf16.msra.mxu0 %v1040
    %3834 = vmatpush.bf16.msra.mxu0 %v1036
    %3835 = vmatpush.bf16.msra.mxu0 %v1032
    %3836 = vmatmul.bf16.gmra.mxu0 %v3801
    %v3837 = vpop.f32.mrf.mxu0
    %v3838 = vadd.f32 %v534, %v3837
    %v3839 = vpop.f32.mrf.mxu0
    %3840 = vdwg.mxu0
    %3841 = vmatpush.bf16.msra.mxu0 %v1092
    %3842 = vmatpush.bf16.msra.mxu0 %v1088
    %3843 = vmatpush.bf16.msra.mxu0 %v1084
    %3844 = vmatpush.bf16.msra.mxu0 %v1080
    %3845 = vmatpush.bf16.msra.mxu0 %v1076
    %3846 = vmatpush.bf16.msra.mxu0 %v1072
    %3847 = vmatpush.bf16.msra.mxu0 %v1068
    %3848 = vmatpush.bf16.msra.mxu0 %v1064
    %3849 = vmatmul.bf16.gmra.mxu0 %v3504
    %v3850 = vpop.f32.mrf.mxu0
    %v3851 = vadd.f32 %v3838, %v3850
    %v3852 = vpop.f32.mrf.mxu0
    %3853 = vdwg.mxu0
    %3854 = vmatpush.bf16.msra.mxu0 %v1061
    %3855 = vmatpush.bf16.msra.mxu0 %v1057
    %3856 = vmatpush.bf16.msra.mxu0 %v1053
    %3857 = vmatpush.bf16.msra.mxu0 %v1049
    %3858 = vmatpush.bf16.msra.mxu0 %v1045
    %3859 = vmatpush.bf16.msra.mxu0 %v1041
    %3860 = vmatpush.bf16.msra.mxu0 %v1037
    %3861 = vmatpush.bf16.msra.mxu0 %v1033
    %3862 = vmatmul.bf16.gmra.mxu0 %v3801
    %v3863 = vpop.f32.mrf.mxu0
    %v3864 = vadd.f32 %v535, %v3863
    %v3865 = vpop.f32.mrf.mxu0
    %3866 = vdwg.mxu0
    %3867 = vmatpush.bf16.msra.mxu0 %v1093
    %3868 = vmatpush.bf16.msra.mxu0 %v1089
    %3869 = vmatpush.bf16.msra.mxu0 %v1085
    %3870 = vmatpush.bf16.msra.mxu0 %v1081
    %3871 = vmatpush.bf16.msra.mxu0 %v1077
    %3872 = vmatpush.bf16.msra.mxu0 %v1073
    %3873 = vmatpush.bf16.msra.mxu0 %v1069
    %3874 = vmatpush.bf16.msra.mxu0 %v1065
    %3875 = vmatmul.bf16.gmra.mxu0 %v3504
    %v3876 = vpop.f32.mrf.mxu0
    %v3877 = vadd.f32 %v3864, %v3876
    %v3878 = vpop.f32.mrf.mxu0
    %3879 = vdwg.mxu0
    %3880 = vmatpush.bf16.msra.mxu0 %v1062
    %3881 = vmatpush.bf16.msra.mxu0 %v1058
    %3882 = vmatpush.bf16.msra.mxu0 %v1054
    %3883 = vmatpush.bf16.msra.mxu0 %v1050
    %3884 = vmatpush.bf16.msra.mxu0 %v1046
    %3885 = vmatpush.bf16.msra.mxu0 %v1042
    %3886 = vmatpush.bf16.msra.mxu0 %v1038
    %3887 = vmatpush.bf16.msra.mxu0 %v1034
    %3888 = vmatmul.bf16.gmra.mxu0 %v3801
    %v3889 = vpop.f32.mrf.mxu0
    %v3890 = vadd.f32 %v536, %v3889
    %v3891 = vpop.f32.mrf.mxu0
    %3892 = vdwg.mxu0
    %3893 = vmatpush.bf16.msra.mxu0 %v1094
    %3894 = vmatpush.bf16.msra.mxu0 %v1090
    %3895 = vmatpush.bf16.msra.mxu0 %v1086
    %3896 = vmatpush.bf16.msra.mxu0 %v1082
    %3897 = vmatpush.bf16.msra.mxu0 %v1078
    %3898 = vmatpush.bf16.msra.mxu0 %v1074
    %3899 = vmatpush.bf16.msra.mxu0 %v1070
    %3900 = vmatpush.bf16.msra.mxu0 %v1066
    %3901 = vmatmul.bf16.gmra.mxu0 %v3504
    %v3902 = vpop.f32.mrf.mxu0
    %v3903 = vadd.f32 %v3890, %v3902
    %v3904 = vpop.f32.mrf.mxu0
    %3905 = vdwg.mxu0
    %v3906 = vxor.u32 %v3825, 2147483648
    %v3907 = vmul.f32 %v3906, 1.442695
    %v3908 = vpow.pop %v3907
    %v3909 = vadd.f32 %v3908, 1.0
    %v3910 = vrcp.pop %v3909
    %v3911 = vmul.f32 %v3909, %v3910
    %v3912 = vsub.f32 1.0, %v3911
    %v3913 = vmul.f32 %v3910, %v3912
    %v3914 = vadd.f32 %v3910, %v3913
    %vm3915 = vweird.f32 %v3909
    %vm3916 = vweird.f32 %v3910
    %vm3917 = vmor %vm3915, %vm3916
    %v3918 = vsel %vm3917, %v3910, %v3914
    %v3919 = vand.u32 2147483647, %v3909
    %vm3920 = vcmp.eq.f32.partialorder %v3919, 8.507059e+37
    %v3921 = vand.u32 %v3909, 2147483648
    %v3922 = vor.u32 1.1754944e-38, %v3921
    %v3923 = vsel %vm3920, %v3922, %v3918
    %v3924 = vmul.f32 1.0, %v3923
    %v3925 = vxor.u32 %v3851, 2147483648
    %v3926 = vmul.f32 %v3925, 1.442695
    %v3927 = vpow.pop %v3926
    %v3928 = vadd.f32 %v3927, 1.0
    %v3929 = vrcp.pop %v3928
    %v3930 = vmul.f32 %v3928, %v3929
    %v3931 = vsub.f32 1.0, %v3930
    %v3932 = vmul.f32 %v3929, %v3931
    %v3933 = vadd.f32 %v3929, %v3932
    %vm3934 = vweird.f32 %v3928
    %vm3935 = vweird.f32 %v3929
    %vm3936 = vmor %vm3934, %vm3935
    %v3937 = vsel %vm3936, %v3929, %v3933
    %v3938 = vand.u32 2147483647, %v3928
    %vm3939 = vcmp.eq.f32.partialorder %v3938, 8.507059e+37
    %v3940 = vand.u32 %v3928, 2147483648
    %v3941 = vor.u32 1.1754944e-38, %v3940
    %v3942 = vsel %vm3939, %v3941, %v3937
    %v3943 = vmul.f32 1.0, %v3942
    %v3944 = vtanh.pop %v3877
    %v3945 = vxor.u32 %v3903, 2147483648
    %v3946 = vmul.f32 %v3945, 1.442695
    %v3947 = vpow.pop %v3946
    %v3948 = vadd.f32 %v3947, 1.0
    %v3949 = vrcp.pop %v3948
    %v3950 = vmul.f32 %v3948, %v3949
    %v3951 = vsub.f32 1.0, %v3950
    %v3952 = vmul.f32 %v3949, %v3951
    %v3953 = vadd.f32 %v3949, %v3952
    %vm3954 = vweird.f32 %v3948
    %vm3955 = vweird.f32 %v3949
    %vm3956 = vmor %vm3954, %vm3955
    %v3957 = vsel %vm3956, %v3949, %v3953
    %v3958 = vand.u32 2147483647, %v3948
    %vm3959 = vcmp.eq.f32.partialorder %v3958, 8.507059e+37
    %v3960 = vand.u32 %v3948, 2147483648
    %v3961 = vor.u32 1.1754944e-38, %v3960
    %v3962 = vsel %vm3959, %v3961, %v3957
    %v3963 = vmul.f32 1.0, %v3962
    %v3964 = vmul.f32 %v3943, %v3501
    %v3965 = vmul.f32 %v3924, %v3944
    %v3966 = vadd.f32 %v3964, %v3965
    %v3967 = vtanh.pop %v3966
    %v3968 = vmul.f32 %v3963, %v3967
    %v3969 = vpack.c.bf16 %v3968, %v3968
    %v3970 = vpack.c.bf16 %v3672, %v3672
    %3971 = vmatpush.bf16.msra.mxu0 %v1547
    %3972 = vmatpush.bf16.msra.mxu0 %v1543
    %3973 = vmatpush.bf16.msra.mxu0 %v1539
    %3974 = vmatpush.bf16.msra.mxu0 %v1535
    %3975 = vmatpush.bf16.msra.mxu0 %v1531
    %3976 = vmatpush.bf16.msra.mxu0 %v1527
    %3977 = vmatpush.bf16.msra.mxu0 %v1523
    %3978 = vmatpush.bf16.msra.mxu0 %v1519
    %3979 = vmatmul.bf16.gmra.mxu0 %v3969
    %v3980 = vpop.f32.mrf.mxu0
    %v3981 = vadd.f32 %v543, %v3980
    %v3982 = vpop.f32.mrf.mxu0
    %3983 = vdwg.mxu0
    %3984 = vmatpush.bf16.msra.mxu0 %v1579
    %3985 = vmatpush.bf16.msra.mxu0 %v1575
    %3986 = vmatpush.bf16.msra.mxu0 %v1571
    %3987 = vmatpush.bf16.msra.mxu0 %v1567
    %3988 = vmatpush.bf16.msra.mxu0 %v1563
    %3989 = vmatpush.bf16.msra.mxu0 %v1559
    %3990 = vmatpush.bf16.msra.mxu0 %v1555
    %3991 = vmatpush.bf16.msra.mxu0 %v1551
    %3992 = vmatmul.bf16.gmra.mxu0 %v3970
    %v3993 = vpop.f32.mrf.mxu0
    %v3994 = vadd.f32 %v3981, %v3993
    %v3995 = vpop.f32.mrf.mxu0
    %3996 = vdwg.mxu0
    %3997 = vmatpush.bf16.msra.mxu0 %v1548
    %3998 = vmatpush.bf16.msra.mxu0 %v1544
    %3999 = vmatpush.bf16.msra.mxu0 %v1540
    %4000 = vmatpush.bf16.msra.mxu0 %v1536
    %4001 = vmatpush.bf16.msra.mxu0 %v1532
    %4002 = vmatpush.bf16.msra.mxu0 %v1528
    %4003 = vmatpush.bf16.msra.mxu0 %v1524
    %4004 = vmatpush.bf16.msra.mxu0 %v1520
    %4005 = vmatmul.bf16.gmra.mxu0 %v3969
    %v4006 = vpop.f32.mrf.mxu0
    %v4007 = vadd.f32 %v544, %v4006
    %v4008 = vpop.f32.mrf.mxu0
    %4009 = vdwg.mxu0
    %4010 = vmatpush.bf16.msra.mxu0 %v1580
    %4011 = vmatpush.bf16.msra.mxu0 %v1576
    %4012 = vmatpush.bf16.msra.mxu0 %v1572
    %4013 = vmatpush.bf16.msra.mxu0 %v1568
    %4014 = vmatpush.bf16.msra.mxu0 %v1564
    %4015 = vmatpush.bf16.msra.mxu0 %v1560
    %4016 = vmatpush.bf16.msra.mxu0 %v1556
    %4017 = vmatpush.bf16.msra.mxu0 %v1552
    %4018 = vmatmul.bf16.gmra.mxu0 %v3970
    %v4019 = vpop.f32.mrf.mxu0
    %v4020 = vadd.f32 %v4007, %v4019
    %v4021 = vpop.f32.mrf.mxu0
    %4022 = vdwg.mxu0
    %4023 = vmatpush.bf16.msra.mxu0 %v1549
    %4024 = vmatpush.bf16.msra.mxu0 %v1545
    %4025 = vmatpush.bf16.msra.mxu0 %v1541
    %4026 = vmatpush.bf16.msra.mxu0 %v1537
    %4027 = vmatpush.bf16.msra.mxu0 %v1533
    %4028 = vmatpush.bf16.msra.mxu0 %v1529
    %4029 = vmatpush.bf16.msra.mxu0 %v1525
    %4030 = vmatpush.bf16.msra.mxu0 %v1521
    %4031 = vmatmul.bf16.gmra.mxu0 %v3969
    %v4032 = vpop.f32.mrf.mxu0
    %v4033 = vadd.f32 %v545, %v4032
    %v4034 = vpop.f32.mrf.mxu0
    %4035 = vdwg.mxu0
    %4036 = vmatpush.bf16.msra.mxu0 %v1581
    %4037 = vmatpush.bf16.msra.mxu0 %v1577
    %4038 = vmatpush.bf16.msra.mxu0 %v1573
    %4039 = vmatpush.bf16.msra.mxu0 %v1569
    %4040 = vmatpush.bf16.msra.mxu0 %v1565
    %4041 = vmatpush.bf16.msra.mxu0 %v1561
    %4042 = vmatpush.bf16.msra.mxu0 %v1557
    %4043 = vmatpush.bf16.msra.mxu0 %v1553
    %4044 = vmatmul.bf16.gmra.mxu0 %v3970
    %v4045 = vpop.f32.mrf.mxu0
    %v4046 = vadd.f32 %v4033, %v4045
    %v4047 = vpop.f32.mrf.mxu0
    %4048 = vdwg.mxu0
    %4049 = vmatpush.bf16.msra.mxu0 %v1550
    %4050 = vmatpush.bf16.msra.mxu0 %v1546
    %4051 = vmatpush.bf16.msra.mxu0 %v1542
    %4052 = vmatpush.bf16.msra.mxu0 %v1538
    %4053 = vmatpush.bf16.msra.mxu0 %v1534
    %4054 = vmatpush.bf16.msra.mxu0 %v1530
    %4055 = vmatpush.bf16.msra.mxu0 %v1526
    %4056 = vmatpush.bf16.msra.mxu0 %v1522
    %4057 = vmatmul.bf16.gmra.mxu0 %v3969
    %v4058 = vpop.f32.mrf.mxu0
    %v4059 = vadd.f32 %v546, %v4058
    %v4060 = vpop.f32.mrf.mxu0
    %4061 = vdwg.mxu0
    %4062 = vmatpush.bf16.msra.mxu0 %v1582
    %4063 = vmatpush.bf16.msra.mxu0 %v1578
    %4064 = vmatpush.bf16.msra.mxu0 %v1574
    %4065 = vmatpush.bf16.msra.mxu0 %v1570
    %4066 = vmatpush.bf16.msra.mxu0 %v1566
    %4067 = vmatpush.bf16.msra.mxu0 %v1562
    %4068 = vmatpush.bf16.msra.mxu0 %v1558
    %4069 = vmatpush.bf16.msra.mxu0 %v1554
    %4070 = vmatmul.bf16.gmra.mxu0 %v3970
    %v4071 = vpop.f32.mrf.mxu0
    %v4072 = vadd.f32 %v4059, %v4071
    %v4073 = vpop.f32.mrf.mxu0
    %4074 = vdwg.mxu0
    %v4075 = vxor.u32 %v3994, 2147483648
    %v4076 = vmul.f32 %v4075, 1.442695
    %v4077 = vpow.pop %v4076
    %v4078 = vadd.f32 %v4077, 1.0
    %v4079 = vrcp.pop %v4078
    %v4080 = vmul.f32 %v4078, %v4079
    %v4081 = vsub.f32 1.0, %v4080
    %v4082 = vmul.f32 %v4079, %v4081
    %v4083 = vadd.f32 %v4079, %v4082
    %vm4084 = vweird.f32 %v4078
    %vm4085 = vweird.f32 %v4079
    %vm4086 = vmor %vm4084, %vm4085
    %v4087 = vsel %vm4086, %v4079, %v4083
    %v4088 = vand.u32 2147483647, %v4078
    %vm4089 = vcmp.eq.f32.partialorder %v4088, 8.507059e+37
    %v4090 = vand.u32 %v4078, 2147483648
    %v4091 = vor.u32 1.1754944e-38, %v4090
    %v4092 = vsel %vm4089, %v4091, %v4087
    %v4093 = vmul.f32 1.0, %v4092
    %v4094 = vxor.u32 %v4020, 2147483648
    %v4095 = vmul.f32 %v4094, 1.442695
    %v4096 = vpow.pop %v4095
    %v4097 = vadd.f32 %v4096, 1.0
    %v4098 = vrcp.pop %v4097
    %v4099 = vmul.f32 %v4097, %v4098
    %v4100 = vsub.f32 1.0, %v4099
    %v4101 = vmul.f32 %v4098, %v4100
    %v4102 = vadd.f32 %v4098, %v4101
    %vm4103 = vweird.f32 %v4097
    %vm4104 = vweird.f32 %v4098
    %vm4105 = vmor %vm4103, %vm4104
    %v4106 = vsel %vm4105, %v4098, %v4102
    %v4107 = vand.u32 2147483647, %v4097
    %vm4108 = vcmp.eq.f32.partialorder %v4107, 8.507059e+37
    %v4109 = vand.u32 %v4097, 2147483648
    %v4110 = vor.u32 1.1754944e-38, %v4109
    %v4111 = vsel %vm4108, %v4110, %v4106
    %v4112 = vmul.f32 1.0, %v4111
    %v4113 = vtanh.pop %v4046
    %v4114 = vxor.u32 %v4072, 2147483648
    %v4115 = vmul.f32 %v4114, 1.442695
    %v4116 = vpow.pop %v4115
    %v4117 = vadd.f32 %v4116, 1.0
    %v4118 = vrcp.pop %v4117
    %v4119 = vmul.f32 %v4117, %v4118
    %v4120 = vsub.f32 1.0, %v4119
    %v4121 = vmul.f32 %v4118, %v4120
    %v4122 = vadd.f32 %v4118, %v4121
    %vm4123 = vweird.f32 %v4117
    %vm4124 = vweird.f32 %v4118
    %vm4125 = vmor %vm4123, %vm4124
    %v4126 = vsel %vm4125, %v4118, %v4122
    %v4127 = vand.u32 2147483647, %v4117
    %vm4128 = vcmp.eq.f32.partialorder %v4127, 8.507059e+37
    %v4129 = vand.u32 %v4117, 2147483648
    %v4130 = vor.u32 1.1754944e-38, %v4129
    %v4131 = vsel %vm4128, %v4130, %v4126
    %v4132 = vmul.f32 1.0, %v4131
    %v4133 = vmul.f32 %v4112, %v3670
    %v4134 = vmul.f32 %v4093, %v4113
    %v4135 = vadd.f32 %v4133, %v4134
    %v4136 = vtanh.pop %v4135
    %v4137 = vmul.f32 %v4132, %v4136
    %s4138 = scalar_lea.vmem [#allocation3], 40
    %4139 = vst [vmem:[%s4138] sm:$0xff] %v4137
    %s4140 = smul.u32 6, 4
    %s4141 = smul.addr %s4140, 8
    %s4142 = scalar_lea.vmem [#allocation2], %s4141
    %v4143 = vld [vmem:[%s4142] sm:$0xff]
    %v4144 = vld [vmem:[%s4142 + $0x8] sm:$0xff]
    %v4145 = vld [vmem:[%s4142 + $0x10] sm:$0xff]
    %v4146 = vld [vmem:[%s4142 + $0x18] sm:$0xff]
    %4147 = vmatpush.bf16.msra.mxu0 %v682
    %4148 = vmatpush.bf16.msra.mxu0 %v678
    %4149 = vmatpush.bf16.msra.mxu0 %v674
    %4150 = vmatpush.bf16.msra.mxu0 %v670
    %4151 = vmatpush.bf16.msra.mxu0 %v666
    %4152 = vmatpush.bf16.msra.mxu0 %v662
    %4153 = vmatpush.bf16.msra.mxu0 %v658
    %4154 = vmatpush.bf16.msra.mxu0 %v654
    %4155 = vmatmul.bf16.gmra.mxu0 %v3801
    %v4156 = vpop.f32.mrf.mxu0
    %v4157 = vadd.f32 0.0, %v4156
    %v4158 = vpop.f32.mrf.mxu0
    %4159 = vdwg.mxu0
    %4160 = vmatpush.bf16.msra.mxu0 %v683
    %4161 = vmatpush.bf16.msra.mxu0 %v679
    %4162 = vmatpush.bf16.msra.mxu0 %v675
    %4163 = vmatpush.bf16.msra.mxu0 %v671
    %4164 = vmatpush.bf16.msra.mxu0 %v667
    %4165 = vmatpush.bf16.msra.mxu0 %v663
    %4166 = vmatpush.bf16.msra.mxu0 %v659
    %4167 = vmatpush.bf16.msra.mxu0 %v655
    %4168 = vmatmul.bf16.gmra.mxu0 %v3801
    %v4169 = vpop.f32.mrf.mxu0
    %v4170 = vadd.f32 0.0, %v4169
    %v4171 = vpop.f32.mrf.mxu0
    %4172 = vdwg.mxu0
    %4173 = vmatpush.bf16.msra.mxu0 %v684
    %4174 = vmatpush.bf16.msra.mxu0 %v680
    %4175 = vmatpush.bf16.msra.mxu0 %v676
    %4176 = vmatpush.bf16.msra.mxu0 %v672
    %4177 = vmatpush.bf16.msra.mxu0 %v668
    %4178 = vmatpush.bf16.msra.mxu0 %v664
    %4179 = vmatpush.bf16.msra.mxu0 %v660
    %4180 = vmatpush.bf16.msra.mxu0 %v656
    %4181 = vmatmul.bf16.gmra.mxu0 %v3801
    %v4182 = vpop.f32.mrf.mxu0
    %v4183 = vadd.f32 0.0, %v4182
    %v4184 = vpop.f32.mrf.mxu0
    %4185 = vdwg.mxu0
    %4186 = vmatpush.bf16.msra.mxu0 %v685
    %4187 = vmatpush.bf16.msra.mxu0 %v681
    %4188 = vmatpush.bf16.msra.mxu0 %v677
    %4189 = vmatpush.bf16.msra.mxu0 %v673
    %4190 = vmatpush.bf16.msra.mxu0 %v669
    %4191 = vmatpush.bf16.msra.mxu0 %v665
    %4192 = vmatpush.bf16.msra.mxu0 %v661
    %4193 = vmatpush.bf16.msra.mxu0 %v657
    %4194 = vmatmul.bf16.gmra.mxu0 %v3801
    %v4195 = vpop.f32.mrf.mxu0
    %v4196 = vadd.f32 0.0, %v4195
    %v4197 = vpop.f32.mrf.mxu0
    %4198 = vdwg.mxu0
    %v4199 = vadd.f32 %v4143, %v4157
    %v4200 = vadd.f32 %v4144, %v4170
    %v4201 = vadd.f32 %v4145, %v4183
    %v4202 = vadd.f32 %v4146, %v4196
    %v4203 = vxor.u32 %v4199, 2147483648
    %v4204 = vmul.f32 %v4203, 1.442695
    %v4205 = vpow.pop %v4204
    %v4206 = vadd.f32 %v4205, 1.0
    %v4207 = vrcp.pop %v4206
    %v4208 = vmul.f32 %v4206, %v4207
    %v4209 = vsub.f32 1.0, %v4208
    %v4210 = vmul.f32 %v4207, %v4209
    %v4211 = vadd.f32 %v4207, %v4210
    %vm4212 = vweird.f32 %v4206
    %vm4213 = vweird.f32 %v4207
    %vm4214 = vmor %vm4212, %vm4213
    %v4215 = vsel %vm4214, %v4207, %v4211
    %v4216 = vand.u32 2147483647, %v4206
    %vm4217 = vcmp.eq.f32.partialorder %v4216, 8.507059e+37
    %v4218 = vand.u32 %v4206, 2147483648
    %v4219 = vor.u32 1.1754944e-38, %v4218
    %v4220 = vsel %vm4217, %v4219, %v4215
    %v4221 = vmul.f32 1.0, %v4220
    %v4222 = vxor.u32 %v4200, 2147483648
    %v4223 = vmul.f32 %v4222, 1.442695
    %v4224 = vpow.pop %v4223
    %v4225 = vadd.f32 %v4224, 1.0
    %v4226 = vrcp.pop %v4225
    %v4227 = vmul.f32 %v4225, %v4226
    %v4228 = vsub.f32 1.0, %v4227
    %v4229 = vmul.f32 %v4226, %v4228
    %v4230 = vadd.f32 %v4226, %v4229
    %vm4231 = vweird.f32 %v4225
    %vm4232 = vweird.f32 %v4226
    %vm4233 = vmor %vm4231, %vm4232
    %v4234 = vsel %vm4233, %v4226, %v4230
    %v4235 = vand.u32 2147483647, %v4225
    %vm4236 = vcmp.eq.f32.partialorder %v4235, 8.507059e+37
    %v4237 = vand.u32 %v4225, 2147483648
    %v4238 = vor.u32 1.1754944e-38, %v4237
    %v4239 = vsel %vm4236, %v4238, %v4234
    %v4240 = vmul.f32 1.0, %v4239
    %v4241 = vtanh.pop %v4201
    %v4242 = vxor.u32 %v4202, 2147483648
    %v4243 = vmul.f32 %v4242, 1.442695
    %v4244 = vpow.pop %v4243
    %v4245 = vadd.f32 %v4244, 1.0
    %v4246 = vrcp.pop %v4245
    %v4247 = vmul.f32 %v4245, %v4246
    %v4248 = vsub.f32 1.0, %v4247
    %v4249 = vmul.f32 %v4246, %v4248
    %v4250 = vadd.f32 %v4246, %v4249
    %vm4251 = vweird.f32 %v4245
    %vm4252 = vweird.f32 %v4246
    %vm4253 = vmor %vm4251, %vm4252
    %v4254 = vsel %vm4253, %v4246, %v4250
    %v4255 = vand.u32 2147483647, %v4245
    %vm4256 = vcmp.eq.f32.partialorder %v4255, 8.507059e+37
    %v4257 = vand.u32 %v4245, 2147483648
    %v4258 = vor.u32 1.1754944e-38, %v4257
    %v4259 = vsel %vm4256, %v4258, %v4254
    %v4260 = vmul.f32 1.0, %v4259
    %v4261 = vmul.f32 %v4240, %v3798
    %v4262 = vmul.f32 %v4221, %v4241
    %v4263 = vadd.f32 %v4261, %v4262
    %v4264 = vtanh.pop %v4263
    %v4265 = vmul.f32 %v4260, %v4264
    %v4266 = vpack.c.bf16 %v4265, %v4265
    %4267 = vmatpush.bf16.msra.mxu0 %v1059
    %4268 = vmatpush.bf16.msra.mxu0 %v1055
    %4269 = vmatpush.bf16.msra.mxu0 %v1051
    %4270 = vmatpush.bf16.msra.mxu0 %v1047
    %4271 = vmatpush.bf16.msra.mxu0 %v1043
    %4272 = vmatpush.bf16.msra.mxu0 %v1039
    %4273 = vmatpush.bf16.msra.mxu0 %v1035
    %4274 = vmatpush.bf16.msra.mxu0 %v1031
    %4275 = vmatmul.bf16.gmra.mxu0 %v4266
    %v4276 = vpop.f32.mrf.mxu0
    %v4277 = vadd.f32 %v533, %v4276
    %v4278 = vpop.f32.mrf.mxu0
    %4279 = vdwg.mxu0
    %4280 = vmatpush.bf16.msra.mxu0 %v1091
    %4281 = vmatpush.bf16.msra.mxu0 %v1087
    %4282 = vmatpush.bf16.msra.mxu0 %v1083
    %4283 = vmatpush.bf16.msra.mxu0 %v1079
    %4284 = vmatpush.bf16.msra.mxu0 %v1075
    %4285 = vmatpush.bf16.msra.mxu0 %v1071
    %4286 = vmatpush.bf16.msra.mxu0 %v1067
    %4287 = vmatpush.bf16.msra.mxu0 %v1063
    %4288 = vmatmul.bf16.gmra.mxu0 %v3969
    %v4289 = vpop.f32.mrf.mxu0
    %v4290 = vadd.f32 %v4277, %v4289
    %v4291 = vpop.f32.mrf.mxu0
    %4292 = vdwg.mxu0
    %4293 = vmatpush.bf16.msra.mxu0 %v1060
    %4294 = vmatpush.bf16.msra.mxu0 %v1056
    %4295 = vmatpush.bf16.msra.mxu0 %v1052
    %4296 = vmatpush.bf16.msra.mxu0 %v1048
    %4297 = vmatpush.bf16.msra.mxu0 %v1044
    %4298 = vmatpush.bf16.msra.mxu0 %v1040
    %4299 = vmatpush.bf16.msra.mxu0 %v1036
    %4300 = vmatpush.bf16.msra.mxu0 %v1032
    %4301 = vmatmul.bf16.gmra.mxu0 %v4266
    %v4302 = vpop.f32.mrf.mxu0
    %v4303 = vadd.f32 %v534, %v4302
    %v4304 = vpop.f32.mrf.mxu0
    %4305 = vdwg.mxu0
    %4306 = vmatpush.bf16.msra.mxu0 %v1092
    %4307 = vmatpush.bf16.msra.mxu0 %v1088
    %4308 = vmatpush.bf16.msra.mxu0 %v1084
    %4309 = vmatpush.bf16.msra.mxu0 %v1080
    %4310 = vmatpush.bf16.msra.mxu0 %v1076
    %4311 = vmatpush.bf16.msra.mxu0 %v1072
    %4312 = vmatpush.bf16.msra.mxu0 %v1068
    %4313 = vmatpush.bf16.msra.mxu0 %v1064
    %4314 = vmatmul.bf16.gmra.mxu0 %v3969
    %v4315 = vpop.f32.mrf.mxu0
    %v4316 = vadd.f32 %v4303, %v4315
    %v4317 = vpop.f32.mrf.mxu0
    %4318 = vdwg.mxu0
    %4319 = vmatpush.bf16.msra.mxu0 %v1061
    %4320 = vmatpush.bf16.msra.mxu0 %v1057
    %4321 = vmatpush.bf16.msra.mxu0 %v1053
    %4322 = vmatpush.bf16.msra.mxu0 %v1049
    %4323 = vmatpush.bf16.msra.mxu0 %v1045
    %4324 = vmatpush.bf16.msra.mxu0 %v1041
    %4325 = vmatpush.bf16.msra.mxu0 %v1037
    %4326 = vmatpush.bf16.msra.mxu0 %v1033
    %4327 = vmatmul.bf16.gmra.mxu0 %v4266
    %v4328 = vpop.f32.mrf.mxu0
    %v4329 = vadd.f32 %v535, %v4328
    %v4330 = vpop.f32.mrf.mxu0
    %4331 = vdwg.mxu0
    %4332 = vmatpush.bf16.msra.mxu0 %v1093
    %4333 = vmatpush.bf16.msra.mxu0 %v1089
    %4334 = vmatpush.bf16.msra.mxu0 %v1085
    %4335 = vmatpush.bf16.msra.mxu0 %v1081
    %4336 = vmatpush.bf16.msra.mxu0 %v1077
    %4337 = vmatpush.bf16.msra.mxu0 %v1073
    %4338 = vmatpush.bf16.msra.mxu0 %v1069
    %4339 = vmatpush.bf16.msra.mxu0 %v1065
    %4340 = vmatmul.bf16.gmra.mxu0 %v3969
    %v4341 = vpop.f32.mrf.mxu0
    %v4342 = vadd.f32 %v4329, %v4341
    %v4343 = vpop.f32.mrf.mxu0
    %4344 = vdwg.mxu0
    %4345 = vmatpush.bf16.msra.mxu0 %v1062
    %4346 = vmatpush.bf16.msra.mxu0 %v1058
    %4347 = vmatpush.bf16.msra.mxu0 %v1054
    %4348 = vmatpush.bf16.msra.mxu0 %v1050
    %4349 = vmatpush.bf16.msra.mxu0 %v1046
    %4350 = vmatpush.bf16.msra.mxu0 %v1042
    %4351 = vmatpush.bf16.msra.mxu0 %v1038
    %4352 = vmatpush.bf16.msra.mxu0 %v1034
    %4353 = vmatmul.bf16.gmra.mxu0 %v4266
    %v4354 = vpop.f32.mrf.mxu0
    %v4355 = vadd.f32 %v536, %v4354
    %v4356 = vpop.f32.mrf.mxu0
    %4357 = vdwg.mxu0
    %4358 = vmatpush.bf16.msra.mxu0 %v1094
    %4359 = vmatpush.bf16.msra.mxu0 %v1090
    %4360 = vmatpush.bf16.msra.mxu0 %v1086
    %4361 = vmatpush.bf16.msra.mxu0 %v1082
    %4362 = vmatpush.bf16.msra.mxu0 %v1078
    %4363 = vmatpush.bf16.msra.mxu0 %v1074
    %4364 = vmatpush.bf16.msra.mxu0 %v1070
    %4365 = vmatpush.bf16.msra.mxu0 %v1066
    %4366 = vmatmul.bf16.gmra.mxu0 %v3969
    %v4367 = vpop.f32.mrf.mxu0
    %v4368 = vadd.f32 %v4355, %v4367
    %v4369 = vpop.f32.mrf.mxu0
    %4370 = vdwg.mxu0
    %v4371 = vxor.u32 %v4290, 2147483648
    %v4372 = vmul.f32 %v4371, 1.442695
    %v4373 = vpow.pop %v4372
    %v4374 = vadd.f32 %v4373, 1.0
    %v4375 = vrcp.pop %v4374
    %v4376 = vmul.f32 %v4374, %v4375
    %v4377 = vsub.f32 1.0, %v4376
    %v4378 = vmul.f32 %v4375, %v4377
    %v4379 = vadd.f32 %v4375, %v4378
    %vm4380 = vweird.f32 %v4374
    %vm4381 = vweird.f32 %v4375
    %vm4382 = vmor %vm4380, %vm4381
    %v4383 = vsel %vm4382, %v4375, %v4379
    %v4384 = vand.u32 2147483647, %v4374
    %vm4385 = vcmp.eq.f32.partialorder %v4384, 8.507059e+37
    %v4386 = vand.u32 %v4374, 2147483648
    %v4387 = vor.u32 1.1754944e-38, %v4386
    %v4388 = vsel %vm4385, %v4387, %v4383
    %v4389 = vmul.f32 1.0, %v4388
    %v4390 = vxor.u32 %v4316, 2147483648
    %v4391 = vmul.f32 %v4390, 1.442695
    %v4392 = vpow.pop %v4391
    %v4393 = vadd.f32 %v4392, 1.0
    %v4394 = vrcp.pop %v4393
    %v4395 = vmul.f32 %v4393, %v4394
    %v4396 = vsub.f32 1.0, %v4395
    %v4397 = vmul.f32 %v4394, %v4396
    %v4398 = vadd.f32 %v4394, %v4397
    %vm4399 = vweird.f32 %v4393
    %vm4400 = vweird.f32 %v4394
    %vm4401 = vmor %vm4399, %vm4400
    %v4402 = vsel %vm4401, %v4394, %v4398
    %v4403 = vand.u32 2147483647, %v4393
    %vm4404 = vcmp.eq.f32.partialorder %v4403, 8.507059e+37
    %v4405 = vand.u32 %v4393, 2147483648
    %v4406 = vor.u32 1.1754944e-38, %v4405
    %v4407 = vsel %vm4404, %v4406, %v4402
    %v4408 = vmul.f32 1.0, %v4407
    %v4409 = vtanh.pop %v4342
    %v4410 = vxor.u32 %v4368, 2147483648
    %v4411 = vmul.f32 %v4410, 1.442695
    %v4412 = vpow.pop %v4411
    %v4413 = vadd.f32 %v4412, 1.0
    %v4414 = vrcp.pop %v4413
    %v4415 = vmul.f32 %v4413, %v4414
    %v4416 = vsub.f32 1.0, %v4415
    %v4417 = vmul.f32 %v4414, %v4416
    %v4418 = vadd.f32 %v4414, %v4417
    %vm4419 = vweird.f32 %v4413
    %vm4420 = vweird.f32 %v4414
    %vm4421 = vmor %vm4419, %vm4420
    %v4422 = vsel %vm4421, %v4414, %v4418
    %v4423 = vand.u32 2147483647, %v4413
    %vm4424 = vcmp.eq.f32.partialorder %v4423, 8.507059e+37
    %v4425 = vand.u32 %v4413, 2147483648
    %v4426 = vor.u32 1.1754944e-38, %v4425
    %v4427 = vsel %vm4424, %v4426, %v4422
    %v4428 = vmul.f32 1.0, %v4427
    %v4429 = vmul.f32 %v4408, %v3966
    %v4430 = vmul.f32 %v4389, %v4409
    %v4431 = vadd.f32 %v4429, %v4430
    %v4432 = vtanh.pop %v4431
    %v4433 = vmul.f32 %v4428, %v4432
    %v4434 = vpack.c.bf16 %v4433, %v4433
    %v4435 = vpack.c.bf16 %v4137, %v4137
    %4436 = vmatpush.bf16.msra.mxu0 %v1547
    %4437 = vmatpush.bf16.msra.mxu0 %v1543
    %4438 = vmatpush.bf16.msra.mxu0 %v1539
    %4439 = vmatpush.bf16.msra.mxu0 %v1535
    %4440 = vmatpush.bf16.msra.mxu0 %v1531
    %4441 = vmatpush.bf16.msra.mxu0 %v1527
    %4442 = vmatpush.bf16.msra.mxu0 %v1523
    %4443 = vmatpush.bf16.msra.mxu0 %v1519
    %4444 = vmatmul.bf16.gmra.mxu0 %v4434
    %v4445 = vpop.f32.mrf.mxu0
    %v4446 = vadd.f32 %v543, %v4445
    %v4447 = vpop.f32.mrf.mxu0
    %4448 = vdwg.mxu0
    %4449 = vmatpush.bf16.msra.mxu0 %v1579
    %4450 = vmatpush.bf16.msra.mxu0 %v1575
    %4451 = vmatpush.bf16.msra.mxu0 %v1571
    %4452 = vmatpush.bf16.msra.mxu0 %v1567
    %4453 = vmatpush.bf16.msra.mxu0 %v1563
    %4454 = vmatpush.bf16.msra.mxu0 %v1559
    %4455 = vmatpush.bf16.msra.mxu0 %v1555
    %4456 = vmatpush.bf16.msra.mxu0 %v1551
    %4457 = vmatmul.bf16.gmra.mxu0 %v4435
    %v4458 = vpop.f32.mrf.mxu0
    %v4459 = vadd.f32 %v4446, %v4458
    %v4460 = vpop.f32.mrf.mxu0
    %4461 = vdwg.mxu0
    %4462 = vmatpush.bf16.msra.mxu0 %v1548
    %4463 = vmatpush.bf16.msra.mxu0 %v1544
    %4464 = vmatpush.bf16.msra.mxu0 %v1540
    %4465 = vmatpush.bf16.msra.mxu0 %v1536
    %4466 = vmatpush.bf16.msra.mxu0 %v1532
    %4467 = vmatpush.bf16.msra.mxu0 %v1528
    %4468 = vmatpush.bf16.msra.mxu0 %v1524
    %4469 = vmatpush.bf16.msra.mxu0 %v1520
    %4470 = vmatmul.bf16.gmra.mxu0 %v4434
    %v4471 = vpop.f32.mrf.mxu0
    %v4472 = vadd.f32 %v544, %v4471
    %v4473 = vpop.f32.mrf.mxu0
    %4474 = vdwg.mxu0
    %4475 = vmatpush.bf16.msra.mxu0 %v1580
    %4476 = vmatpush.bf16.msra.mxu0 %v1576
    %4477 = vmatpush.bf16.msra.mxu0 %v1572
    %4478 = vmatpush.bf16.msra.mxu0 %v1568
    %4479 = vmatpush.bf16.msra.mxu0 %v1564
    %4480 = vmatpush.bf16.msra.mxu0 %v1560
    %4481 = vmatpush.bf16.msra.mxu0 %v1556
    %4482 = vmatpush.bf16.msra.mxu0 %v1552
    %4483 = vmatmul.bf16.gmra.mxu0 %v4435
    %v4484 = vpop.f32.mrf.mxu0
    %v4485 = vadd.f32 %v4472, %v4484
    %v4486 = vpop.f32.mrf.mxu0
    %4487 = vdwg.mxu0
    %4488 = vmatpush.bf16.msra.mxu0 %v1549
    %4489 = vmatpush.bf16.msra.mxu0 %v1545
    %4490 = vmatpush.bf16.msra.mxu0 %v1541
    %4491 = vmatpush.bf16.msra.mxu0 %v1537
    %4492 = vmatpush.bf16.msra.mxu0 %v1533
    %4493 = vmatpush.bf16.msra.mxu0 %v1529
    %4494 = vmatpush.bf16.msra.mxu0 %v1525
    %4495 = vmatpush.bf16.msra.mxu0 %v1521
    %4496 = vmatmul.bf16.gmra.mxu0 %v4434
    %v4497 = vpop.f32.mrf.mxu0
    %v4498 = vadd.f32 %v545, %v4497
    %v4499 = vpop.f32.mrf.mxu0
    %4500 = vdwg.mxu0
    %4501 = vmatpush.bf16.msra.mxu0 %v1581
    %4502 = vmatpush.bf16.msra.mxu0 %v1577
    %4503 = vmatpush.bf16.msra.mxu0 %v1573
    %4504 = vmatpush.bf16.msra.mxu0 %v1569
    %4505 = vmatpush.bf16.msra.mxu0 %v1565
    %4506 = vmatpush.bf16.msra.mxu0 %v1561
    %4507 = vmatpush.bf16.msra.mxu0 %v1557
    %4508 = vmatpush.bf16.msra.mxu0 %v1553
    %4509 = vmatmul.bf16.gmra.mxu0 %v4435
    %v4510 = vpop.f32.mrf.mxu0
    %v4511 = vadd.f32 %v4498, %v4510
    %v4512 = vpop.f32.mrf.mxu0
    %4513 = vdwg.mxu0
    %4514 = vmatpush.bf16.msra.mxu0 %v1550
    %4515 = vmatpush.bf16.msra.mxu0 %v1546
    %4516 = vmatpush.bf16.msra.mxu0 %v1542
    %4517 = vmatpush.bf16.msra.mxu0 %v1538
    %4518 = vmatpush.bf16.msra.mxu0 %v1534
    %4519 = vmatpush.bf16.msra.mxu0 %v1530
    %4520 = vmatpush.bf16.msra.mxu0 %v1526
    %4521 = vmatpush.bf16.msra.mxu0 %v1522
    %4522 = vmatmul.bf16.gmra.mxu0 %v4434
    %v4523 = vpop.f32.mrf.mxu0
    %v4524 = vadd.f32 %v546, %v4523
    %v4525 = vpop.f32.mrf.mxu0
    %4526 = vdwg.mxu0
    %4527 = vmatpush.bf16.msra.mxu0 %v1582
    %4528 = vmatpush.bf16.msra.mxu0 %v1578
    %4529 = vmatpush.bf16.msra.mxu0 %v1574
    %4530 = vmatpush.bf16.msra.mxu0 %v1570
    %4531 = vmatpush.bf16.msra.mxu0 %v1566
    %4532 = vmatpush.bf16.msra.mxu0 %v1562
    %4533 = vmatpush.bf16.msra.mxu0 %v1558
    %4534 = vmatpush.bf16.msra.mxu0 %v1554
    %4535 = vmatmul.bf16.gmra.mxu0 %v4435
    %v4536 = vpop.f32.mrf.mxu0
    %v4537 = vadd.f32 %v4524, %v4536
    %v4538 = vpop.f32.mrf.mxu0
    %4539 = vdwg.mxu0
    %v4540 = vxor.u32 %v4459, 2147483648
    %v4541 = vmul.f32 %v4540, 1.442695
    %v4542 = vpow.pop %v4541
    %v4543 = vadd.f32 %v4542, 1.0
    %v4544 = vrcp.pop %v4543
    %v4545 = vmul.f32 %v4543, %v4544
    %v4546 = vsub.f32 1.0, %v4545
    %v4547 = vmul.f32 %v4544, %v4546
    %v4548 = vadd.f32 %v4544, %v4547
    %vm4549 = vweird.f32 %v4543
    %vm4550 = vweird.f32 %v4544
    %vm4551 = vmor %vm4549, %vm4550
    %v4552 = vsel %vm4551, %v4544, %v4548
    %v4553 = vand.u32 2147483647, %v4543
    %vm4554 = vcmp.eq.f32.partialorder %v4553, 8.507059e+37
    %v4555 = vand.u32 %v4543, 2147483648
    %v4556 = vor.u32 1.1754944e-38, %v4555
    %v4557 = vsel %vm4554, %v4556, %v4552
    %v4558 = vmul.f32 1.0, %v4557
    %v4559 = vxor.u32 %v4485, 2147483648
    %v4560 = vmul.f32 %v4559, 1.442695
    %v4561 = vpow.pop %v4560
    %v4562 = vadd.f32 %v4561, 1.0
    %v4563 = vrcp.pop %v4562
    %v4564 = vmul.f32 %v4562, %v4563
    %v4565 = vsub.f32 1.0, %v4564
    %v4566 = vmul.f32 %v4563, %v4565
    %v4567 = vadd.f32 %v4563, %v4566
    %vm4568 = vweird.f32 %v4562
    %vm4569 = vweird.f32 %v4563
    %vm4570 = vmor %vm4568, %vm4569
    %v4571 = vsel %vm4570, %v4563, %v4567
    %v4572 = vand.u32 2147483647, %v4562
    %vm4573 = vcmp.eq.f32.partialorder %v4572, 8.507059e+37
    %v4574 = vand.u32 %v4562, 2147483648
    %v4575 = vor.u32 1.1754944e-38, %v4574
    %v4576 = vsel %vm4573, %v4575, %v4571
    %v4577 = vmul.f32 1.0, %v4576
    %v4578 = vtanh.pop %v4511
    %v4579 = vxor.u32 %v4537, 2147483648
    %v4580 = vmul.f32 %v4579, 1.442695
    %v4581 = vpow.pop %v4580
    %v4582 = vadd.f32 %v4581, 1.0
    %v4583 = vrcp.pop %v4582
    %v4584 = vmul.f32 %v4582, %v4583
    %v4585 = vsub.f32 1.0, %v4584
    %v4586 = vmul.f32 %v4583, %v4585
    %v4587 = vadd.f32 %v4583, %v4586
    %vm4588 = vweird.f32 %v4582
    %vm4589 = vweird.f32 %v4583
    %vm4590 = vmor %vm4588, %vm4589
    %v4591 = vsel %vm4590, %v4583, %v4587
    %v4592 = vand.u32 2147483647, %v4582
    %vm4593 = vcmp.eq.f32.partialorder %v4592, 8.507059e+37
    %v4594 = vand.u32 %v4582, 2147483648
    %v4595 = vor.u32 1.1754944e-38, %v4594
    %v4596 = vsel %vm4593, %v4595, %v4591
    %v4597 = vmul.f32 1.0, %v4596
    %v4598 = vmul.f32 %v4577, %v4135
    %v4599 = vmul.f32 %v4558, %v4578
    %v4600 = vadd.f32 %v4598, %v4599
    %v4601 = vtanh.pop %v4600
    %v4602 = vmul.f32 %v4597, %v4601
    %s4603 = scalar_lea.vmem [#allocation3], 48
    %4604 = vst [vmem:[%s4603] sm:$0xff] %v4602
    %s4605 = smul.u32 7, 4
    %s4606 = smul.addr %s4605, 8
    %s4607 = scalar_lea.vmem [#allocation2], %s4606
    %v4608 = vld [vmem:[%s4607] sm:$0xff]
    %v4609 = vld [vmem:[%s4607 + $0x8] sm:$0xff]
    %v4610 = vld [vmem:[%s4607 + $0x10] sm:$0xff]
    %v4611 = vld [vmem:[%s4607 + $0x18] sm:$0xff]
    %4612 = vmatpush.bf16.msra.mxu0 %v682
    %4613 = vmatpush.bf16.msra.mxu0 %v678
    %4614 = vmatpush.bf16.msra.mxu0 %v674
    %4615 = vmatpush.bf16.msra.mxu0 %v670
    %4616 = vmatpush.bf16.msra.mxu0 %v666
    %4617 = vmatpush.bf16.msra.mxu0 %v662
    %4618 = vmatpush.bf16.msra.mxu0 %v658
    %4619 = vmatpush.bf16.msra.mxu0 %v654
    %4620 = vmatmul.bf16.gmra.mxu0 %v4266
    %v4621 = vpop.f32.mrf.mxu0
    %v4622 = vadd.f32 0.0, %v4621
    %v4623 = vpop.f32.mrf.mxu0
    %4624 = vdwg.mxu0
    %4625 = vmatpush.bf16.msra.mxu0 %v683
    %4626 = vmatpush.bf16.msra.mxu0 %v679
    %4627 = vmatpush.bf16.msra.mxu0 %v675
    %4628 = vmatpush.bf16.msra.mxu0 %v671
    %4629 = vmatpush.bf16.msra.mxu0 %v667
    %4630 = vmatpush.bf16.msra.mxu0 %v663
    %4631 = vmatpush.bf16.msra.mxu0 %v659
    %4632 = vmatpush.bf16.msra.mxu0 %v655
    %4633 = vmatmul.bf16.gmra.mxu0 %v4266
    %v4634 = vpop.f32.mrf.mxu0
    %v4635 = vadd.f32 0.0, %v4634
    %v4636 = vpop.f32.mrf.mxu0
    %4637 = vdwg.mxu0
    %4638 = vmatpush.bf16.msra.mxu0 %v684
    %4639 = vmatpush.bf16.msra.mxu0 %v680
    %4640 = vmatpush.bf16.msra.mxu0 %v676
    %4641 = vmatpush.bf16.msra.mxu0 %v672
    %4642 = vmatpush.bf16.msra.mxu0 %v668
    %4643 = vmatpush.bf16.msra.mxu0 %v664
    %4644 = vmatpush.bf16.msra.mxu0 %v660
    %4645 = vmatpush.bf16.msra.mxu0 %v656
    %4646 = vmatmul.bf16.gmra.mxu0 %v4266
    %v4647 = vpop.f32.mrf.mxu0
    %v4648 = vadd.f32 0.0, %v4647
    %v4649 = vpop.f32.mrf.mxu0
    %4650 = vdwg.mxu0
    %4651 = vmatpush.bf16.msra.mxu0 %v685
    %4652 = vmatpush.bf16.msra.mxu0 %v681
    %4653 = vmatpush.bf16.msra.mxu0 %v677
    %4654 = vmatpush.bf16.msra.mxu0 %v673
    %4655 = vmatpush.bf16.msra.mxu0 %v669
    %4656 = vmatpush.bf16.msra.mxu0 %v665
    %4657 = vmatpush.bf16.msra.mxu0 %v661
    %4658 = vmatpush.bf16.msra.mxu0 %v657
    %4659 = vmatmul.bf16.gmra.mxu0 %v4266
    %v4660 = vpop.f32.mrf.mxu0
    %v4661 = vadd.f32 0.0, %v4660
    %v4662 = vpop.f32.mrf.mxu0
    %4663 = vdwg.mxu0
    %v4664 = vadd.f32 %v4608, %v4622
    %v4665 = vadd.f32 %v4609, %v4635
    %v4666 = vadd.f32 %v4610, %v4648
    %v4667 = vadd.f32 %v4611, %v4661
    %v4668 = vxor.u32 %v4664, 2147483648
    %v4669 = vmul.f32 %v4668, 1.442695
    %v4670 = vpow.pop %v4669
    %v4671 = vadd.f32 %v4670, 1.0
    %v4672 = vrcp.pop %v4671
    %v4673 = vmul.f32 %v4671, %v4672
    %v4674 = vsub.f32 1.0, %v4673
    %v4675 = vmul.f32 %v4672, %v4674
    %v4676 = vadd.f32 %v4672, %v4675
    %vm4677 = vweird.f32 %v4671
    %vm4678 = vweird.f32 %v4672
    %vm4679 = vmor %vm4677, %vm4678
    %v4680 = vsel %vm4679, %v4672, %v4676
    %v4681 = vand.u32 2147483647, %v4671
    %vm4682 = vcmp.eq.f32.partialorder %v4681, 8.507059e+37
    %v4683 = vand.u32 %v4671, 2147483648
    %v4684 = vor.u32 1.1754944e-38, %v4683
    %v4685 = vsel %vm4682, %v4684, %v4680
    %v4686 = vmul.f32 1.0, %v4685
    %v4687 = vxor.u32 %v4665, 2147483648
    %v4688 = vmul.f32 %v4687, 1.442695
    %v4689 = vpow.pop %v4688
    %v4690 = vadd.f32 %v4689, 1.0
    %v4691 = vrcp.pop %v4690
    %v4692 = vmul.f32 %v4690, %v4691
    %v4693 = vsub.f32 1.0, %v4692
    %v4694 = vmul.f32 %v4691, %v4693
    %v4695 = vadd.f32 %v4691, %v4694
    %vm4696 = vweird.f32 %v4690
    %vm4697 = vweird.f32 %v4691
    %vm4698 = vmor %vm4696, %vm4697
    %v4699 = vsel %vm4698, %v4691, %v4695
    %v4700 = vand.u32 2147483647, %v4690
    %vm4701 = vcmp.eq.f32.partialorder %v4700, 8.507059e+37
    %v4702 = vand.u32 %v4690, 2147483648
    %v4703 = vor.u32 1.1754944e-38, %v4702
    %v4704 = vsel %vm4701, %v4703, %v4699
    %v4705 = vmul.f32 1.0, %v4704
    %v4706 = vtanh.pop %v4666
    %v4707 = vxor.u32 %v4667, 2147483648
    %v4708 = vmul.f32 %v4707, 1.442695
    %v4709 = vpow.pop %v4708
    %v4710 = vadd.f32 %v4709, 1.0
    %v4711 = vrcp.pop %v4710
    %v4712 = vmul.f32 %v4710, %v4711
    %v4713 = vsub.f32 1.0, %v4712
    %v4714 = vmul.f32 %v4711, %v4713
    %v4715 = vadd.f32 %v4711, %v4714
    %vm4716 = vweird.f32 %v4710
    %vm4717 = vweird.f32 %v4711
    %vm4718 = vmor %vm4716, %vm4717
    %v4719 = vsel %vm4718, %v4711, %v4715
    %v4720 = vand.u32 2147483647, %v4710
    %vm4721 = vcmp.eq.f32.partialorder %v4720, 8.507059e+37
    %v4722 = vand.u32 %v4710, 2147483648
    %v4723 = vor.u32 1.1754944e-38, %v4722
    %v4724 = vsel %vm4721, %v4723, %v4719
    %v4725 = vmul.f32 1.0, %v4724
    %v4726 = vmul.f32 %v4705, %v4263
    %v4727 = vmul.f32 %v4686, %v4706
    %v4728 = vadd.f32 %v4726, %v4727
    %v4729 = vtanh.pop %v4728
    %v4730 = vmul.f32 %v4725, %v4729
    %v4731 = vpack.c.bf16 %v4730, %v4730
    %4732 = vmatpush.bf16.msra.mxu0 %v1059
    %4733 = vmatpush.bf16.msra.mxu0 %v1055
    %4734 = vmatpush.bf16.msra.mxu0 %v1051
    %4735 = vmatpush.bf16.msra.mxu0 %v1047
    %4736 = vmatpush.bf16.msra.mxu0 %v1043
    %4737 = vmatpush.bf16.msra.mxu0 %v1039
    %4738 = vmatpush.bf16.msra.mxu0 %v1035
    %4739 = vmatpush.bf16.msra.mxu0 %v1031
    %4740 = vmatmul.bf16.gmra.mxu0 %v4731
    %v4741 = vpop.f32.mrf.mxu0
    %v4742 = vadd.f32 %v533, %v4741
    %v4743 = vpop.f32.mrf.mxu0
    %4744 = vdwg.mxu0
    %4745 = vmatpush.bf16.msra.mxu0 %v1091
    %4746 = vmatpush.bf16.msra.mxu0 %v1087
    %4747 = vmatpush.bf16.msra.mxu0 %v1083
    %4748 = vmatpush.bf16.msra.mxu0 %v1079
    %4749 = vmatpush.bf16.msra.mxu0 %v1075
    %4750 = vmatpush.bf16.msra.mxu0 %v1071
    %4751 = vmatpush.bf16.msra.mxu0 %v1067
    %4752 = vmatpush.bf16.msra.mxu0 %v1063
    %4753 = vmatmul.bf16.gmra.mxu0 %v4434
    %v4754 = vpop.f32.mrf.mxu0
    %v4755 = vadd.f32 %v4742, %v4754
    %v4756 = vpop.f32.mrf.mxu0
    %4757 = vdwg.mxu0
    %4758 = vmatpush.bf16.msra.mxu0 %v1060
    %4759 = vmatpush.bf16.msra.mxu0 %v1056
    %4760 = vmatpush.bf16.msra.mxu0 %v1052
    %4761 = vmatpush.bf16.msra.mxu0 %v1048
    %4762 = vmatpush.bf16.msra.mxu0 %v1044
    %4763 = vmatpush.bf16.msra.mxu0 %v1040
    %4764 = vmatpush.bf16.msra.mxu0 %v1036
    %4765 = vmatpush.bf16.msra.mxu0 %v1032
    %4766 = vmatmul.bf16.gmra.mxu0 %v4731
    %v4767 = vpop.f32.mrf.mxu0
    %v4768 = vadd.f32 %v534, %v4767
    %v4769 = vpop.f32.mrf.mxu0
    %4770 = vdwg.mxu0
    %4771 = vmatpush.bf16.msra.mxu0 %v1092
    %4772 = vmatpush.bf16.msra.mxu0 %v1088
    %4773 = vmatpush.bf16.msra.mxu0 %v1084
    %4774 = vmatpush.bf16.msra.mxu0 %v1080
    %4775 = vmatpush.bf16.msra.mxu0 %v1076
    %4776 = vmatpush.bf16.msra.mxu0 %v1072
    %4777 = vmatpush.bf16.msra.mxu0 %v1068
    %4778 = vmatpush.bf16.msra.mxu0 %v1064
    %4779 = vmatmul.bf16.gmra.mxu0 %v4434
    %v4780 = vpop.f32.mrf.mxu0
    %v4781 = vadd.f32 %v4768, %v4780
    %v4782 = vpop.f32.mrf.mxu0
    %4783 = vdwg.mxu0
    %4784 = vmatpush.bf16.msra.mxu0 %v1061
    %4785 = vmatpush.bf16.msra.mxu0 %v1057
    %4786 = vmatpush.bf16.msra.mxu0 %v1053
    %4787 = vmatpush.bf16.msra.mxu0 %v1049
    %4788 = vmatpush.bf16.msra.mxu0 %v1045
    %4789 = vmatpush.bf16.msra.mxu0 %v1041
    %4790 = vmatpush.bf16.msra.mxu0 %v1037
    %4791 = vmatpush.bf16.msra.mxu0 %v1033
    %4792 = vmatmul.bf16.gmra.mxu0 %v4731
    %v4793 = vpop.f32.mrf.mxu0
    %v4794 = vadd.f32 %v535, %v4793
    %v4795 = vpop.f32.mrf.mxu0
    %4796 = vdwg.mxu0
    %4797 = vmatpush.bf16.msra.mxu0 %v1093
    %4798 = vmatpush.bf16.msra.mxu0 %v1089
    %4799 = vmatpush.bf16.msra.mxu0 %v1085
    %4800 = vmatpush.bf16.msra.mxu0 %v1081
    %4801 = vmatpush.bf16.msra.mxu0 %v1077
    %4802 = vmatpush.bf16.msra.mxu0 %v1073
    %4803 = vmatpush.bf16.msra.mxu0 %v1069
    %4804 = vmatpush.bf16.msra.mxu0 %v1065
    %4805 = vmatmul.bf16.gmra.mxu0 %v4434
    %v4806 = vpop.f32.mrf.mxu0
    %v4807 = vadd.f32 %v4794, %v4806
    %v4808 = vpop.f32.mrf.mxu0
    %4809 = vdwg.mxu0
    %4810 = vmatpush.bf16.msra.mxu0 %v1062
    %4811 = vmatpush.bf16.msra.mxu0 %v1058
    %4812 = vmatpush.bf16.msra.mxu0 %v1054
    %4813 = vmatpush.bf16.msra.mxu0 %v1050
    %4814 = vmatpush.bf16.msra.mxu0 %v1046
    %4815 = vmatpush.bf16.msra.mxu0 %v1042
    %4816 = vmatpush.bf16.msra.mxu0 %v1038
    %4817 = vmatpush.bf16.msra.mxu0 %v1034
    %4818 = vmatmul.bf16.gmra.mxu0 %v4731
    %v4819 = vpop.f32.mrf.mxu0
    %v4820 = vadd.f32 %v536, %v4819
    %v4821 = vpop.f32.mrf.mxu0
    %4822 = vdwg.mxu0
    %4823 = vmatpush.bf16.msra.mxu0 %v1094
    %4824 = vmatpush.bf16.msra.mxu0 %v1090
    %4825 = vmatpush.bf16.msra.mxu0 %v1086
    %4826 = vmatpush.bf16.msra.mxu0 %v1082
    %4827 = vmatpush.bf16.msra.mxu0 %v1078
    %4828 = vmatpush.bf16.msra.mxu0 %v1074
    %4829 = vmatpush.bf16.msra.mxu0 %v1070
    %4830 = vmatpush.bf16.msra.mxu0 %v1066
    %4831 = vmatmul.bf16.gmra.mxu0 %v4434
    %v4832 = vpop.f32.mrf.mxu0
    %v4833 = vadd.f32 %v4820, %v4832
    %v4834 = vpop.f32.mrf.mxu0
    %4835 = vdwg.mxu0
    %v4836 = vxor.u32 %v4755, 2147483648
    %v4837 = vmul.f32 %v4836, 1.442695
    %v4838 = vpow.pop %v4837
    %v4839 = vadd.f32 %v4838, 1.0
    %v4840 = vrcp.pop %v4839
    %v4841 = vmul.f32 %v4839, %v4840
    %v4842 = vsub.f32 1.0, %v4841
    %v4843 = vmul.f32 %v4840, %v4842
    %v4844 = vadd.f32 %v4840, %v4843
    %vm4845 = vweird.f32 %v4839
    %vm4846 = vweird.f32 %v4840
    %vm4847 = vmor %vm4845, %vm4846
    %v4848 = vsel %vm4847, %v4840, %v4844
    %v4849 = vand.u32 2147483647, %v4839
    %vm4850 = vcmp.eq.f32.partialorder %v4849, 8.507059e+37
    %v4851 = vand.u32 %v4839, 2147483648
    %v4852 = vor.u32 1.1754944e-38, %v4851
    %v4853 = vsel %vm4850, %v4852, %v4848
    %v4854 = vmul.f32 1.0, %v4853
    %v4855 = vxor.u32 %v4781, 2147483648
    %v4856 = vmul.f32 %v4855, 1.442695
    %v4857 = vpow.pop %v4856
    %v4858 = vadd.f32 %v4857, 1.0
    %v4859 = vrcp.pop %v4858
    %v4860 = vmul.f32 %v4858, %v4859
    %v4861 = vsub.f32 1.0, %v4860
    %v4862 = vmul.f32 %v4859, %v4861
    %v4863 = vadd.f32 %v4859, %v4862
    %vm4864 = vweird.f32 %v4858
    %vm4865 = vweird.f32 %v4859
    %vm4866 = vmor %vm4864, %vm4865
    %v4867 = vsel %vm4866, %v4859, %v4863
    %v4868 = vand.u32 2147483647, %v4858
    %vm4869 = vcmp.eq.f32.partialorder %v4868, 8.507059e+37
    %v4870 = vand.u32 %v4858, 2147483648
    %v4871 = vor.u32 1.1754944e-38, %v4870
    %v4872 = vsel %vm4869, %v4871, %v4867
    %v4873 = vmul.f32 1.0, %v4872
    %v4874 = vtanh.pop %v4807
    %v4875 = vxor.u32 %v4833, 2147483648
    %v4876 = vmul.f32 %v4875, 1.442695
    %v4877 = vpow.pop %v4876
    %v4878 = vadd.f32 %v4877, 1.0
    %v4879 = vrcp.pop %v4878
    %v4880 = vmul.f32 %v4878, %v4879
    %v4881 = vsub.f32 1.0, %v4880
    %v4882 = vmul.f32 %v4879, %v4881
    %v4883 = vadd.f32 %v4879, %v4882
    %vm4884 = vweird.f32 %v4878
    %vm4885 = vweird.f32 %v4879
    %vm4886 = vmor %vm4884, %vm4885
    %v4887 = vsel %vm4886, %v4879, %v4883
    %v4888 = vand.u32 2147483647, %v4878
    %vm4889 = vcmp.eq.f32.partialorder %v4888, 8.507059e+37
    %v4890 = vand.u32 %v4878, 2147483648
    %v4891 = vor.u32 1.1754944e-38, %v4890
    %v4892 = vsel %vm4889, %v4891, %v4887
    %v4893 = vmul.f32 1.0, %v4892
    %v4894 = vmul.f32 %v4873, %v4431
    %v4895 = vmul.f32 %v4854, %v4874
    %v4896 = vadd.f32 %v4894, %v4895
    %v4897 = vtanh.pop %v4896
    %v4898 = vmul.f32 %v4893, %v4897
    %v4899 = vpack.c.bf16 %v4898, %v4898
    %v4900 = vpack.c.bf16 %v4602, %v4602
    %4901 = vmatpush.bf16.msra.mxu0 %v1547
    %4902 = vmatpush.bf16.msra.mxu0 %v1543
    %4903 = vmatpush.bf16.msra.mxu0 %v1539
    %4904 = vmatpush.bf16.msra.mxu0 %v1535
    %4905 = vmatpush.bf16.msra.mxu0 %v1531
    %4906 = vmatpush.bf16.msra.mxu0 %v1527
    %4907 = vmatpush.bf16.msra.mxu0 %v1523
    %4908 = vmatpush.bf16.msra.mxu0 %v1519
    %4909 = vmatmul.bf16.gmra.mxu0 %v4899
    %v4910 = vpop.f32.mrf.mxu0
    %v4911 = vadd.f32 %v543, %v4910
    %v4912 = vpop.f32.mrf.mxu0
    %4913 = vdwg.mxu0
    %4914 = vmatpush.bf16.msra.mxu0 %v1579
    %4915 = vmatpush.bf16.msra.mxu0 %v1575
    %4916 = vmatpush.bf16.msra.mxu0 %v1571
    %4917 = vmatpush.bf16.msra.mxu0 %v1567
    %4918 = vmatpush.bf16.msra.mxu0 %v1563
    %4919 = vmatpush.bf16.msra.mxu0 %v1559
    %4920 = vmatpush.bf16.msra.mxu0 %v1555
    %4921 = vmatpush.bf16.msra.mxu0 %v1551
    %4922 = vmatmul.bf16.gmra.mxu0 %v4900
    %v4923 = vpop.f32.mrf.mxu0
    %v4924 = vadd.f32 %v4911, %v4923
    %v4925 = vpop.f32.mrf.mxu0
    %4926 = vdwg.mxu0
    %4927 = vmatpush.bf16.msra.mxu0 %v1548
    %4928 = vmatpush.bf16.msra.mxu0 %v1544
    %4929 = vmatpush.bf16.msra.mxu0 %v1540
    %4930 = vmatpush.bf16.msra.mxu0 %v1536
    %4931 = vmatpush.bf16.msra.mxu0 %v1532
    %4932 = vmatpush.bf16.msra.mxu0 %v1528
    %4933 = vmatpush.bf16.msra.mxu0 %v1524
    %4934 = vmatpush.bf16.msra.mxu0 %v1520
    %4935 = vmatmul.bf16.gmra.mxu0 %v4899
    %v4936 = vpop.f32.mrf.mxu0
    %v4937 = vadd.f32 %v544, %v4936
    %v4938 = vpop.f32.mrf.mxu0
    %4939 = vdwg.mxu0
    %4940 = vmatpush.bf16.msra.mxu0 %v1580
    %4941 = vmatpush.bf16.msra.mxu0 %v1576
    %4942 = vmatpush.bf16.msra.mxu0 %v1572
    %4943 = vmatpush.bf16.msra.mxu0 %v1568
    %4944 = vmatpush.bf16.msra.mxu0 %v1564
    %4945 = vmatpush.bf16.msra.mxu0 %v1560
    %4946 = vmatpush.bf16.msra.mxu0 %v1556
    %4947 = vmatpush.bf16.msra.mxu0 %v1552
    %4948 = vmatmul.bf16.gmra.mxu0 %v4900
    %v4949 = vpop.f32.mrf.mxu0
    %v4950 = vadd.f32 %v4937, %v4949
    %v4951 = vpop.f32.mrf.mxu0
    %4952 = vdwg.mxu0
    %4953 = vmatpush.bf16.msra.mxu0 %v1549
    %4954 = vmatpush.bf16.msra.mxu0 %v1545
    %4955 = vmatpush.bf16.msra.mxu0 %v1541
    %4956 = vmatpush.bf16.msra.mxu0 %v1537
    %4957 = vmatpush.bf16.msra.mxu0 %v1533
    %4958 = vmatpush.bf16.msra.mxu0 %v1529
    %4959 = vmatpush.bf16.msra.mxu0 %v1525
    %4960 = vmatpush.bf16.msra.mxu0 %v1521
    %4961 = vmatmul.bf16.gmra.mxu0 %v4899
    %v4962 = vpop.f32.mrf.mxu0
    %v4963 = vadd.f32 %v545, %v4962
    %v4964 = vpop.f32.mrf.mxu0
    %4965 = vdwg.mxu0
    %4966 = vmatpush.bf16.msra.mxu0 %v1581
    %4967 = vmatpush.bf16.msra.mxu0 %v1577
    %4968 = vmatpush.bf16.msra.mxu0 %v1573
    %4969 = vmatpush.bf16.msra.mxu0 %v1569
    %4970 = vmatpush.bf16.msra.mxu0 %v1565
    %4971 = vmatpush.bf16.msra.mxu0 %v1561
    %4972 = vmatpush.bf16.msra.mxu0 %v1557
    %4973 = vmatpush.bf16.msra.mxu0 %v1553
    %4974 = vmatmul.bf16.gmra.mxu0 %v4900
    %v4975 = vpop.f32.mrf.mxu0
    %v4976 = vadd.f32 %v4963, %v4975
    %v4977 = vpop.f32.mrf.mxu0
    %4978 = vdwg.mxu0
    %4979 = vmatpush.bf16.msra.mxu0 %v1550
    %4980 = vmatpush.bf16.msra.mxu0 %v1546
    %4981 = vmatpush.bf16.msra.mxu0 %v1542
    %4982 = vmatpush.bf16.msra.mxu0 %v1538
    %4983 = vmatpush.bf16.msra.mxu0 %v1534
    %4984 = vmatpush.bf16.msra.mxu0 %v1530
    %4985 = vmatpush.bf16.msra.mxu0 %v1526
    %4986 = vmatpush.bf16.msra.mxu0 %v1522
    %4987 = vmatmul.bf16.gmra.mxu0 %v4899
    %v4988 = vpop.f32.mrf.mxu0
    %v4989 = vadd.f32 %v546, %v4988
    %v4990 = vpop.f32.mrf.mxu0
    %4991 = vdwg.mxu0
    %4992 = vmatpush.bf16.msra.mxu0 %v1582
    %4993 = vmatpush.bf16.msra.mxu0 %v1578
    %4994 = vmatpush.bf16.msra.mxu0 %v1574
    %4995 = vmatpush.bf16.msra.mxu0 %v1570
    %4996 = vmatpush.bf16.msra.mxu0 %v1566
    %4997 = vmatpush.bf16.msra.mxu0 %v1562
    %4998 = vmatpush.bf16.msra.mxu0 %v1558
    %4999 = vmatpush.bf16.msra.mxu0 %v1554
    %5000 = vmatmul.bf16.gmra.mxu0 %v4900
    %v5001 = vpop.f32.mrf.mxu0
    %v5002 = vadd.f32 %v4989, %v5001
    %v5003 = vpop.f32.mrf.mxu0
    %5004 = vdwg.mxu0
    %v5005 = vxor.u32 %v4924, 2147483648
    %v5006 = vmul.f32 %v5005, 1.442695
    %v5007 = vpow.pop %v5006
    %v5008 = vadd.f32 %v5007, 1.0
    %v5009 = vrcp.pop %v5008
    %v5010 = vmul.f32 %v5008, %v5009
    %v5011 = vsub.f32 1.0, %v5010
    %v5012 = vmul.f32 %v5009, %v5011
    %v5013 = vadd.f32 %v5009, %v5012
    %vm5014 = vweird.f32 %v5008
    %vm5015 = vweird.f32 %v5009
    %vm5016 = vmor %vm5014, %vm5015
    %v5017 = vsel %vm5016, %v5009, %v5013
    %v5018 = vand.u32 2147483647, %v5008
    %vm5019 = vcmp.eq.f32.partialorder %v5018, 8.507059e+37
    %v5020 = vand.u32 %v5008, 2147483648
    %v5021 = vor.u32 1.1754944e-38, %v5020
    %v5022 = vsel %vm5019, %v5021, %v5017
    %v5023 = vmul.f32 1.0, %v5022
    %v5024 = vxor.u32 %v4950, 2147483648
    %v5025 = vmul.f32 %v5024, 1.442695
    %v5026 = vpow.pop %v5025
    %v5027 = vadd.f32 %v5026, 1.0
    %v5028 = vrcp.pop %v5027
    %v5029 = vmul.f32 %v5027, %v5028
    %v5030 = vsub.f32 1.0, %v5029
    %v5031 = vmul.f32 %v5028, %v5030
    %v5032 = vadd.f32 %v5028, %v5031
    %vm5033 = vweird.f32 %v5027
    %vm5034 = vweird.f32 %v5028
    %vm5035 = vmor %vm5033, %vm5034
    %v5036 = vsel %vm5035, %v5028, %v5032
    %v5037 = vand.u32 2147483647, %v5027
    %vm5038 = vcmp.eq.f32.partialorder %v5037, 8.507059e+37
    %v5039 = vand.u32 %v5027, 2147483648
    %v5040 = vor.u32 1.1754944e-38, %v5039
    %v5041 = vsel %vm5038, %v5040, %v5036
    %v5042 = vmul.f32 1.0, %v5041
    %v5043 = vtanh.pop %v4976
    %v5044 = vxor.u32 %v5002, 2147483648
    %v5045 = vmul.f32 %v5044, 1.442695
    %v5046 = vpow.pop %v5045
    %v5047 = vadd.f32 %v5046, 1.0
    %v5048 = vrcp.pop %v5047
    %v5049 = vmul.f32 %v5047, %v5048
    %v5050 = vsub.f32 1.0, %v5049
    %v5051 = vmul.f32 %v5048, %v5050
    %v5052 = vadd.f32 %v5048, %v5051
    %vm5053 = vweird.f32 %v5047
    %vm5054 = vweird.f32 %v5048
    %vm5055 = vmor %vm5053, %vm5054
    %v5056 = vsel %vm5055, %v5048, %v5052
    %v5057 = vand.u32 2147483647, %v5047
    %vm5058 = vcmp.eq.f32.partialorder %v5057, 8.507059e+37
    %v5059 = vand.u32 %v5047, 2147483648
    %v5060 = vor.u32 1.1754944e-38, %v5059
    %v5061 = vsel %vm5058, %v5060, %v5056
    %v5062 = vmul.f32 1.0, %v5061
    %v5063 = vmul.f32 %v5042, %v4600
    %v5064 = vmul.f32 %v5023, %v5043
    %v5065 = vadd.f32 %v5063, %v5064
    %v5066 = vtanh.pop %v5065
    %v5067 = vmul.f32 %v5062, %v5066
    %s5068 = scalar_lea.vmem [#allocation3], 56
    %5069 = vst [vmem:[%s5068] sm:$0xff] %v5067
    %v5070 = vld [vmem:[#allocation3] sm:$0xff]
    %v5071 = vld [vmem:[#allocation3 + $0x8] sm:$0xff]
    %v5072 = vld [vmem:[#allocation3 + $0x10] sm:$0xff]
    %v5073 = vld [vmem:[#allocation3 + $0x18] sm:$0xff]
    %v5074 = vld [vmem:[#allocation3 + $0x20] sm:$0xff]
    %v5075 = vld [vmem:[#allocation3 + $0x28] sm:$0xff]
    %v5076 = vld [vmem:[#allocation3 + $0x30] sm:$0xff]
    %v5077 = vld [vmem:[#allocation3 + $0x38] sm:$0xff]
    %v5078 = vpack.c.bf16 %v5071, %v5070
    %v5079 = vpack.c.bf16 %v5073, %v5072
    %v5080 = vpack.c.bf16 %v5075, %v5074
    %v5081 = vpack.c.bf16 %v5077, %v5076
    %v5082 = vld [vmem:[#allocation12] sm:$0xf]
    %v5083 = vld [vmem:[#allocation12 + $0x4] sm:$0xf]
    %v5084 = vld [vmem:[#allocation12 + $0x8] sm:$0xf]
    %v5085 = vld [vmem:[#allocation12 + $0xc] sm:$0xf]
    %v5086 = vld [vmem:[#allocation12 + $0x10] sm:$0xf]
    %v5087 = vld [vmem:[#allocation12 + $0x14] sm:$0xf]
    %v5088 = vld [vmem:[#allocation12 + $0x18] sm:$0xf]
    %v5089 = vld [vmem:[#allocation12 + $0x1c] sm:$0xf]
    %v5090 = vld [vmem:[#allocation12 + $0x20] sm:$0xf]
    %v5091 = vld [vmem:[#allocation12 + $0x24] sm:$0xf]
    %v5092 = vld [vmem:[#allocation12 + $0x28] sm:$0xf]
    %v5093 = vld [vmem:[#allocation12 + $0x2c] sm:$0xf]
    %v5094 = vld [vmem:[#allocation12 + $0x30] sm:$0xf]
    %v5095 = vld [vmem:[#allocation12 + $0x34] sm:$0xf]
    %v5096 = vld [vmem:[#allocation12 + $0x38] sm:$0xf]
    %v5097 = vld [vmem:[#allocation12 + $0x3c] sm:$0xf]
    %v5098 = vld [vmem:[%s9] sm:$0x1]
    %v5100 = vperm.slane %v5098, 0
    %v5118 = vunpack.c.l.b16 %v5082
    %v5119 = vunpack.c.l.b16 %v5083
    %v5120 = vunpack.c.l.b16 %v5084
    %v5121 = vunpack.c.l.b16 %v5085
    %v5122 = vunpack.c.l.b16 %v5086
    %v5123 = vunpack.c.l.b16 %v5087
    %v5124 = vunpack.c.l.b16 %v5088
    %v5125 = vunpack.c.l.b16 %v5089
    %v5126 = vunpack.c.l.b16 %v5090
    %v5127 = vunpack.c.l.b16 %v5091
    %v5128 = vunpack.c.l.b16 %v5092
    %v5129 = vunpack.c.l.b16 %v5093
    %v5130 = vunpack.c.l.b16 %v5094
    %v5131 = vunpack.c.l.b16 %v5095
    %v5132 = vunpack.c.l.b16 %v5096
    %v5133 = vunpack.c.l.b16 %v5097
    %v5134 = vpack.c.b16 %v5119, %v5118
    %v5135 = vpack.c.b16 %v5121, %v5120
    %v5136 = vpack.c.b16 %v5123, %v5122
    %v5137 = vpack.c.b16 %v5125, %v5124
    %v5138 = vpack.c.b16 %v5127, %v5126
    %v5139 = vpack.c.b16 %v5129, %v5128
    %v5140 = vpack.c.b16 %v5131, %v5130
    %v5141 = vpack.c.b16 %v5133, %v5132
    %5150 = vmatpush.bf16.msra.mxu0 %v5141
    %5151 = vmatpush.bf16.msra.mxu0 %v5140
    %5152 = vmatpush.bf16.msra.mxu0 %v5139
    %5153 = vmatpush.bf16.msra.mxu0 %v5138
    %5154 = vmatpush.bf16.msra.mxu0 %v5137
    %5155 = vmatpush.bf16.msra.mxu0 %v5136
    %5156 = vmatpush.bf16.msra.mxu0 %v5135
    %5157 = vmatpush.bf16.msra.mxu0 %v5134
    %5158 = vmatmul.bf16.gmra.mxu0 %v5078
    %v5159 = vpop.f32.mrf.mxu0
    %v5160 = vadd.f32 %v5100, %v5159
    %v5161 = vpop.f32.mrf.mxu0
    %v5162 = vadd.f32 %v5100, %v5161
    %5163 = vmatmul.bf16.gmra.mxu0 %v5079
    %v5164 = vpop.f32.mrf.mxu0
    %v5165 = vadd.f32 %v5100, %v5164
    %v5166 = vpop.f32.mrf.mxu0
    %v5167 = vadd.f32 %v5100, %v5166
    %5168 = vmatmul.bf16.gmra.mxu0 %v5080
    %v5169 = vpop.f32.mrf.mxu0
    %v5170 = vadd.f32 %v5100, %v5169
    %v5171 = vpop.f32.mrf.mxu0
    %v5172 = vadd.f32 %v5100, %v5171
    %5173 = vmatmul.bf16.gmra.mxu0 %v5081
    %v5174 = vpop.f32.mrf.mxu0
    %v5175 = vadd.f32 %v5100, %v5174
    %v5176 = vpop.f32.mrf.mxu0
    %v5177 = vadd.f32 %v5100, %v5176
    %5178 = vdwg.mxu0
    %5179 = vst [vmem:[#allocation13] sm:$0xff] %v5160
    %5180 = vst [vmem:[#allocation13 + $0x8] sm:$0xff] %v5162
    %5181 = vst [vmem:[#allocation13 + $0x10] sm:$0xff] %v5165
    %5182 = vst [vmem:[#allocation13 + $0x18] sm:$0xff] %v5167
    %5183 = vst [vmem:[#allocation13 + $0x20] sm:$0xff] %v5170
    %5184 = vst [vmem:[#allocation13 + $0x28] sm:$0xff] %v5172
    %5185 = vst [vmem:[#allocation13 + $0x30] sm:$0xff] %v5175
    %5186 = vst [vmem:[#allocation13 + $0x38] sm:$0xff] %v5177
    // Predicated region
    $region62: #{tpu_custom_call.1} parent=1 // pred_check
      _
    $region63: #{tpu_custom_call.1} parent=1 // pred_check_branch
      %5188 = sbr.rel (0) target = $region65
    $region64: #{tpu_custom_call.1} parent=1 // pred_region
      %5190 = vsyncadd [#allocation6], 0
      %s5191 = sshll.u32 [#allocation13], 4
      %s5192 = int_to_ptr.vmem [resolvable:$true] %s5191
      %s5193 = sshll.u32 %s10, 4
      %s5194 = int_to_ptr.hbm [resolvable:$true] %s5193
      %5199 = dma.vmem_to_hbm [thread:$0]  %s5192, 1024, %s5194, [#allocation6], 128, 128, 8
    $region65: #{tpu_custom_call.1} parent=1 // pred_fallthru
      _
    // Predicated region
    $region66: #{tpu_custom_call.1} parent=1 // pred_check
      _
    $region67: #{tpu_custom_call.1} parent=1 // pred_check_branch
      %5201 = sbr.rel (0) target = $region69
    $region68: #{tpu_custom_call.1} parent=1 // pred_region
      %5203 = dma.done [#allocation6], 1024
    $region69: #{tpu_custom_call.1} parent=1 // pred_fallthru
      _
    %5204 = vsyncpa [#allocation5], 1
    %5205 = vsyncpa [#allocation8], 1
    %5206 = vsyncpa [#allocation11], 1
    %5207 = vsyncpa [#allocation6], 1

</llo_original>
